<compile_context>
chip_gen: v6e
topology: v6e:2x2x1
jax: 0.10.0
libtpu: 0.0.40
codegen_flags: <defaults>
</compile_context>

<pallas_src>
from functools import partial

import jax
import jax.numpy as jnp
import numpy as np
from jax import lax
from jax.experimental import pallas as pl
from jax.experimental.pallas import tpu as pltpu

HID = 32          # all Linear layers in the module have out_features=32
NEG_SLOPE = 0.01  # F.leaky_relu default negative_slope


def _leaky_relu(x):
    # mul + max (2 VPU ops) instead of cmp + mul + select (3 ops).
    return jnp.maximum(x, NEG_SLOPE * x)


def relational_kernel(x_ref, w0p_ref, w1p_ref, wf_ref, bias_ref, out_ref, pjt_ref):
    """One grid step == `bb` images: full N^2 relation + pair-sum + 'f' head each."""
    bb, c, n = x_ref.shape
    hid = HID
    hidp = w1p_ref.shape[0]          # pack * HID  (lane-packed width, <= 128)
    pack = hidp // hid
    nb = n // pack                   # packed rows along the 'b' pixel axis

    # Chunk of the 'a' pixel axis: keep the packed h0/h1 chunk around <= 128 rows
    # (~16 vregs each) so chunk + accumulator stay well inside the register file.
    chunk = max(1, min(8, 128 // max(nb, 1)))
    while n % chunk:
        chunk -= 1
    n_steps = n // chunk

    # ---- packed parameters (all tiny; loaded once per grid step) ----
    w0p = w0p_ref[...]                               # (c+1, 2H)
    w0x = w0p[:c]                                    # pixel-channel rows, [x_i | x_j]
    w0c = w0p[c:]                                    # coordinate row,     [x_i | x_j]
    bias = bias_ref[...]                             # (4, 128) slab
    b0 = bias[0:1, :hid]
    b1p = bias[1:2, :hidp]                           # b1 tiled `pack` times
    bp = bias[2:3, :hid]
    bo = bias[3:4, :hid]
    w1p = w1p_ref[...]                               # (hidp, hidp) block-diagonal W1
    wp = wf_ref[0]                                   # (H, H) post-processing layer
    wo = wf_ref[1]                                   # (H, H) output layer

    coord = lax.broadcasted_iota(jnp.int32, (n, 1), 0).astype(jnp.float32)   # (N, 1)

    for img in range(bb):            # static, small unroll over images in this block
        ximg = x_ref[img]            # (c, N): channel-major pixels, no wrapper transpose

        # Fused first Linear: feat[p] = [x[:, p], p];  proj[:, :H] = feat @ W0_top,
        # proj[:, H:] = feat @ W0_bot.  dot_general contracts the c axis directly.
        proj = lax.dot_general(ximg, w0x, (((0,), (0,)), ((), ())),
                               preferred_element_type=jnp.float32)            # (N, 2H)
        proj = proj + coord * w0c                                             # + coord row
        proj_i = proj[:, :hid] + b0      # indexed by the pair's x_i pixel ("b"), b0 folded
        proj_j = proj[:, hid:]           # indexed by the pair's x_j pixel ("a")

        # Lane-pack the 'b' axis: lane block k holds pixels [k*nb, (k+1)*nb).
        proj_i_p = jnp.concatenate(
            [proj_i[k * nb:(k + 1) * nb, :] for k in range(pack)], axis=1)    # (nb, hidp)
        # Stage the 'a'-side rows, tiled across the lane sub-blocks, in VMEM scratch.
        pjt_ref[...] = jnp.concatenate([proj_j] * pack, axis=1)               # (N, hidp)

        def body(step, acc):
            a0 = pl.multiple_of(step * chunk, chunk)
            pj = pjt_ref[pl.ds(a0, chunk), :]                                 # (chunk, hidp)
            # h0[a, b_group, lanes 32k:32k+32] = proj_i[b] + proj_j[a]
            h0 = proj_i_p[None, :, :] + pj[:, None, :]                        # (chunk, nb, hidp)
            h0 = _leaky_relu(h0.reshape(chunk * nb, hidp))
            h1 = _leaky_relu(
                jnp.dot(h0, w1p, preferred_element_type=jnp.float32) + b1p)
            return acc + jnp.sum(h1, axis=0, keepdims=True)                   # (1, hidp)

        acc = lax.fori_loop(0, n_steps, body,
                            jnp.zeros((1, hidp), jnp.float32),
                            unroll=min(n_steps, 8))

        # Fold the `pack` lane sub-blocks back to HID lanes (sum over all pairs).
        s = acc[:, :hid]
        for k in range(1, pack):
            s = s + acc[:, k * hid:(k + 1) * hid]                             # (1, H)

        # 'f' head: post-processing Linear + ReLU, then output Linear.
        f = jnp.maximum(
            jnp.dot(s, wp, preferred_element_type=jnp.float32) + bp, 0.0)
        out = jnp.dot(f, wo, preferred_element_type=jnp.float32) + bo
        out_ref[img] = out.astype(out_ref.dtype)                              # (1, H)


def _pick_pack(n):
    for p in (4, 2, 1):
        if n % p == 0:
            return p
    return 1


@partial(jax.jit, static_argnames=("images_per_step",))
def relational_module_forward(x, params, images_per_step=1):
    """x: (B, c, h, w) or (c, h, w).  Returns (B, 32) / (1, 32) respectively."""
    if x.ndim == 3:
        x = x[None]
    b, c, h, w = x.shape
    n = h * w
    d_half = c + 1
    pack = _pick_pack(n)
    hidp = pack * HID

    w0, b0, w1, b1, wp, bp, wo, bo = params

    # ---- pack parameters (O(KB) of tiny ops; hoist out of the step in real use) ----
    w0_i, w0_j = w0[:d_half], w0[d_half:]            # x_i / x_j halves of the first Linear
    w0p = jnp.concatenate(
        [jnp.concatenate([w0_i[:c], w0_j[:c]], axis=1),    # pixel-channel rows  (c, 2H)
         jnp.concatenate([w0_i[c:], w0_j[c:]], axis=1)],   # coordinate row      (1, 2H)
        axis=0)                                            # (c+1, 2H)
    w1p = jnp.kron(jnp.eye(pack, dtype=w1.dtype), w1)      # (hidp, hidp) block-diagonal
    wf = jnp.stack([wp, wo], axis=0)                       # (2, H, H)
    bias = jnp.zeros((4, 128), jnp.float32)
    bias = bias.at[0, :HID].set(b0[0])
    bias = bias.at[1, :hidp].set(jnp.tile(b1[0], pack))
    bias = bias.at[2, :HID].set(bp[0])
    bias = bias.at[3, :HID].set(bo[0])

    # Feature prep is fused into the kernel; only a cheap reshape here.
    x3 = x.reshape(b, c, n).astype(jnp.float32)

    bb = images_per_step
    if bb < 1 or b % bb != 0:
        bb = 1
    grid = (b // bb,)
    full2 = lambda i: (0, 0)

    out = pl.pallas_call(
        relational_kernel,
        out_shape=jax.ShapeDtypeStruct((b, 1, HID), jnp.float32),
        grid_spec=pltpu.PrefetchScalarGridSpec(
            num_scalar_prefetch=0,
            grid=grid,
            in_specs=[
                pl.BlockSpec((bb, c, n), lambda i: (i, 0, 0)),   # x (bb images / step)
                pl.BlockSpec((c + 1, 2 * HID), full2),           # fused W0 (x_i | x_j)
                pl.BlockSpec((hidp, hidp), full2),               # block-diag W1
                pl.BlockSpec((2, HID, HID), lambda i: (0, 0, 0)),  # stacked Wp, Wo
                pl.BlockSpec((4, 128), full2),                   # bias slab
            ],
            out_specs=pl.BlockSpec((bb, 1, HID), lambda i: (i, 0, 0)),
            scratch_shapes=[pltpu.VMEM((n, hidp), jnp.float32)],  # staged 'a'-side rows
        ),
        compiler_params=pltpu.CompilerParams(
            dimension_semantics=("parallel",)),
    )(x3, w0p, w1p, wf, bias)

    return out.reshape(b, HID)


def init_params(c, key):
    """Deterministic synthetic params. Weights stored as (in, out); y = x @ W + b."""
    d = 2 * (c + 1)
    ks = jax.random.split(key, 8)
    def lin(k, fan_in, fan_out):
        return jax.random.normal(k, (fan_in, fan_out), jnp.float32) * 0.05
    w0 = lin(ks[0], d, HID)
    b0 = jax.random.normal(ks[1], (1, HID), jnp.float32) * 0.05
    w1 = lin(ks[2], HID, HID)
    b1 = jax.random.normal(ks[3], (1, HID), jnp.float32) * 0.05
    wp = lin(ks[4], HID, HID)
    bp = jax.random.normal(ks[5], (1, HID), jnp.float32) * 0.05
    wo = lin(ks[6], HID, HID)
    bo = jax.random.normal(ks[7], (1, HID), jnp.float32) * 0.05
    return (w0, b0, w1, b1, wp, bp, wo, bo)


def build_pair_matrix(x_img):
    """Plain-JAX glue reproducing the torch pairwise-feature construction (reference only)."""
    c, h, w = x_img.shape
    n = h * w
    feat = x_img.reshape(c, n).T                                    # (N, c)
    coord = jnp.arange(n, dtype=x_img.dtype).reshape(n, 1)          # (N, 1)
    feat = jnp.concatenate([feat, coord], axis=1)                   # (N, c+1)
    x_i = jnp.broadcast_to(feat[None, :, :], (n, n, c + 1))         # x_i[a,b] = feat[b]
    x_j = jnp.broadcast_to(feat[:, None, :], (n, n, c + 1))         # x_j[a,b] = feat[a]
    return jnp.concatenate([x_i, x_j], axis=2).reshape(n * n, 2 * (c + 1))


def reference_forward(x_img, params):
    """Pure-JAX reference matching the PyTorch forward semantics (single image)."""
    w0, b0, w1, b1, wp, bp, wo, bo = params
    hi = jax.lax.Precision.HIGHEST
    pairs = build_pair_matrix(x_img)
    out = _leaky_relu(jnp.dot(pairs, w0, precision=hi) + b0)
    out = _leaky_relu(jnp.dot(out, w1, precision=hi) + b1)
    out = jnp.sum(out, axis=0, keepdims=True)                       # (1, 32)
    out = jnp.maximum(jnp.dot(out, wp, precision=hi) + bp, 0.0)
    out = jnp.dot(out, wo, precision=hi) + bo
    return out                                                      # (1, 32)


if __name__ == "__main__":
    # batch=2 images, each (c, h, w) = (4, 8, 8)  ->  N = 64 pixels, N^2 = 4096 pairs
    B, c, h, w = 2, 4, 8, 8
    key = jax.random.PRNGKey(0)
    k_x, k_p = jax.random.split(key)
    x = jax.random.normal(k_x, (B, c, h, w), jnp.float32)
    params = init_params(c, k_p)

    # Default: one image per grid step (parallel grid of length B -> feeds both v7x TCs).
    out = relational_module_forward(x, params)
    out = jax.block_until_ready(out)
    # Batched grid step (amortizes per-step overhead on single-TC chips).
    out_bb = relational_module_forward(x, params, images_per_step=2)
    out_bb = jax.block_until_ready(out_bb)

    ref = jnp.concatenate([reference_forward(x[i], params) for i in range(B)], axis=0)
    np.testing.assert_allclose(np.asarray(out), np.asarray(ref), rtol=1e-3, atol=1e-2)
    np.testing.assert_allclose(np.asarray(out_bb), np.asarray(ref), rtol=1e-3, atol=1e-2)
    assert out.shape == (B, HID)
    print("KERNEL_OK")
</pallas_src>

<mosaic_0001>
module attributes {stable_mosaic.version = 11 : i64} {
  func.func @relational_kernel(%arg0: i32, %arg1: memref<1x4x64xf32, #tpu.memory_space<vmem>>, %arg2: memref<5x64xf32, #tpu.memory_space<vmem>>, %arg3: memref<128x128xf32, #tpu.memory_space<vmem>>, %arg4: memref<2x32x32xf32, #tpu.memory_space<vmem>>, %arg5: memref<4x128xf32, #tpu.memory_space<vmem>>, %arg6: memref<1x1x32xf32, #tpu.memory_space<vmem>>, %arg7: memref<64x128xf32, #tpu.memory_space<vmem>>) attributes {dimension_semantics = [#tpu.dimension_semantics<parallel>], iteration_bounds = array<i64: 2>, scalar_prefetch = 0 : i64, scratch_operands = 1 : i64, tpu.core_type = #tpu.core_type<tc>, window_params = [{transform_indices = @transform_0, window_bounds = array<i64: 1, 4, 64>}, {pipeline_mode = #tpu.pipeline_mode<synchronous>, transform_indices = @transform_1, window_bounds = array<i64: 5, 64>}, {pipeline_mode = #tpu.pipeline_mode<synchronous>, transform_indices = @transform_2, window_bounds = array<i64: 128, 128>}, {pipeline_mode = #tpu.pipeline_mode<synchronous>, transform_indices = @transform_3, window_bounds = array<i64: 2, 32, 32>}, {pipeline_mode = #tpu.pipeline_mode<synchronous>, transform_indices = @transform_4, window_bounds = array<i64: 4, 128>}, {transform_indices = @transform_5, window_bounds = array<i64: 1, 1, 32>}]} {
    %c0 = arith.constant 0 : index
    %c0_0 = arith.constant 0 : index
    %0 = vector.load %arg2[%c0, %c0_0] : memref<5x64xf32, #tpu.memory_space<vmem>>, vector<5x64xf32>
    %1 = vector.extract_strided_slice %0 {offsets = [0, 0], sizes = [4, 64], strides = [1, 1]} : vector<5x64xf32> to vector<4x64xf32>
    %2 = vector.extract_strided_slice %0 {offsets = [4, 0], sizes = [1, 64], strides = [1, 1]} : vector<5x64xf32> to vector<1x64xf32>
    %c0_1 = arith.constant 0 : index
    %c0_2 = arith.constant 0 : index
    %3 = vector.load %arg5[%c0_1, %c0_2] : memref<4x128xf32, #tpu.memory_space<vmem>>, vector<4x128xf32>
    %4 = vector.extract_strided_slice %3 {offsets = [0, 0], sizes = [1, 32], strides = [1, 1]} : vector<4x128xf32> to vector<1x32xf32>
    %5 = vector.extract_strided_slice %3 {offsets = [1, 0], sizes = [1, 128], strides = [1, 1]} : vector<4x128xf32> to vector<1x128xf32>
    %6 = vector.extract_strided_slice %3 {offsets = [2, 0], sizes = [1, 32], strides = [1, 1]} : vector<4x128xf32> to vector<1x32xf32>
    %7 = vector.extract_strided_slice %3 {offsets = [3, 0], sizes = [1, 32], strides = [1, 1]} : vector<4x128xf32> to vector<1x32xf32>
    %c0_3 = arith.constant 0 : index
    %c0_4 = arith.constant 0 : index
    %8 = vector.load %arg3[%c0_3, %c0_4] : memref<128x128xf32, #tpu.memory_space<vmem>>, vector<128x128xf32>
    %c0_5 = arith.constant 0 : index
    %c0_6 = arith.constant 0 : index
    %c0_7 = arith.constant 0 : index
    %9 = vector.load %arg4[%c0_5, %c0_6, %c0_7] : memref<2x32x32xf32, #tpu.memory_space<vmem>>, vector<1x32x32xf32>
    %10 = vector.shape_cast %9 : vector<1x32x32xf32> to vector<32x32xf32>
    %c1 = arith.constant 1 : index
    %c0_8 = arith.constant 0 : index
    %c0_9 = arith.constant 0 : index
    %11 = vector.load %arg4[%c1, %c0_8, %c0_9] : memref<2x32x32xf32, #tpu.memory_space<vmem>>, vector<1x32x32xf32>
    %12 = vector.shape_cast %11 : vector<1x32x32xf32> to vector<32x32xf32>
    %13 = tpu.iota {dimensions = array<i32: 0>} : vector<64x1xi32>
    %14 = arith.sitofp %13 : vector<64x1xi32> to vector<64x1xf32>
    %c0_10 = arith.constant 0 : index
    %c0_11 = arith.constant 0 : index
    %c0_12 = arith.constant 0 : index
    %15 = vector.load %arg1[%c0_10, %c0_11, %c0_12] : memref<1x4x64xf32, #tpu.memory_space<vmem>>, vector<1x4x64xf32>
    %16 = vector.shape_cast %15 : vector<1x4x64xf32> to vector<4x64xf32>
    %cst = arith.constant dense<0.000000e+00> : vector<64x64xf32>
    %17 = tpu.matmul %16, %1, %cst {dimension_numbers = #tpu.dot_dimension_numbers<[0], [0], [1], [1], [0, 1, 1, 1], [], []>} : vector<4x64xf32>, vector<4x64xf32>, vector<64x64xf32> -> vector<64x64xf32>
    %18 = vector.broadcast %14 : vector<64x1xf32> to vector<64x64xf32>
    %19 = vector.broadcast %2 : vector<1x64xf32> to vector<64x64xf32>
    %20 = arith.mulf %18, %19 : vector<64x64xf32>
    %21 = arith.addf %17, %20 : vector<64x64xf32>
    %22 = vector.extract_strided_slice %21 {offsets = [0, 0], sizes = [64, 32], strides = [1, 1]} : vector<64x64xf32> to vector<64x32xf32>
    %23 = vector.broadcast %4 : vector<1x32xf32> to vector<64x32xf32>
    %24 = arith.addf %22, %23 : vector<64x32xf32>
    %25 = vector.extract_strided_slice %21 {offsets = [0, 32], sizes = [64, 32], strides = [1, 1]} : vector<64x64xf32> to vector<64x32xf32>
    %26 = vector.extract_strided_slice %24 {offsets = [0, 0], sizes = [16, 32], strides = [1, 1]} : vector<64x32xf32> to vector<16x32xf32>
    %27 = vector.extract_strided_slice %24 {offsets = [16, 0], sizes = [16, 32], strides = [1, 1]} : vector<64x32xf32> to vector<16x32xf32>
    %28 = vector.extract_strided_slice %24 {offsets = [32, 0], sizes = [16, 32], strides = [1, 1]} : vector<64x32xf32> to vector<16x32xf32>
    %29 = vector.extract_strided_slice %24 {offsets = [48, 0], sizes = [16, 32], strides = [1, 1]} : vector<64x32xf32> to vector<16x32xf32>
    %30 = tpu.concatenate %26, %27, %28, %29 in 1 : vector<16x32xf32>, vector<16x32xf32>, vector<16x32xf32>, vector<16x32xf32> -> vector<16x128xf32>
    %31 = tpu.concatenate %25, %25, %25, %25 in 1 : vector<64x32xf32>, vector<64x32xf32>, vector<64x32xf32>, vector<64x32xf32> -> vector<64x128xf32>
    %c0_13 = arith.constant 0 : index
    %c0_14 = arith.constant 0 : index
    %32 = vector.load %arg7[%c0_13, %c0_14] : memref<64x128xf32, #tpu.memory_space<vmem>>, vector<64x128xf32>
    tpu.vector_store %arg7[%c0_13, %c0_14], %31 {strides = array<i32>} : memref<64x128xf32, #tpu.memory_space<vmem>>, vector<64x128xf32>,
    %cst_15 = arith.constant 0.000000e+00 : f32
    %33 = vector.broadcast %cst_15 : f32 to vector<1x128xf32>
    %c0_i32 = arith.constant 0 : i32
    %c8_i32 = arith.constant 8 : i32
    %34 = arith.muli %c0_i32, %c8_i32 : i32
    %35 = tpu.assume_multiple %34, 8 : i32
    %36 = arith.index_cast %35 : i32 to index
    %c0_16 = arith.constant 0 : index
    %37 = vector.load %arg7[%36, %c0_16] : memref<64x128xf32, #tpu.memory_space<vmem>>, vector<8x128xf32>
    %38 = vector.shape_cast %30 : vector<16x128xf32> to vector<1x16x128xf32>
    %39 = vector.shape_cast %37 : vector<8x128xf32> to vector<8x1x128xf32>
    %40 = vector.broadcast %38 : vector<1x16x128xf32> to vector<8x16x128xf32>
    %41 = vector.broadcast %39 : vector<8x1x128xf32> to vector<8x16x128xf32>
    %42 = arith.addf %40, %41 : vector<8x16x128xf32>
    %43 = vector.shape_cast %42 : vector<8x16x128xf32> to vector<128x128xf32>
    %cst_17 = arith.constant 0.00999999977 : f32
    %44 = vector.broadcast %cst_17 : f32 to vector<128x128xf32>
    %45 = arith.mulf %44, %43 : vector<128x128xf32>
    %46 = arith.maximumf %43, %45 : vector<128x128xf32>
    %cst_18 = arith.constant dense<0.000000e+00> : vector<128x128xf32>
    %47 = tpu.matmul %46, %8, %cst_18 {dimension_numbers = #tpu.dot_dimension_numbers<[1], [0], [0], [1], [0, 0, 1, 1], [], []>} : vector<128x128xf32>, vector<128x128xf32>, vector<128x128xf32> -> vector<128x128xf32>
    %48 = vector.broadcast %5 : vector<1x128xf32> to vector<128x128xf32>
    %49 = arith.addf %47, %48 : vector<128x128xf32>
    %cst_19 = arith.constant 0.00999999977 : f32
    %50 = vector.broadcast %cst_19 : f32 to vector<128x128xf32>
    %51 = arith.mulf %50, %49 : vector<128x128xf32>
    %52 = arith.maximumf %49, %51 : vector<128x128xf32>
    %cst_20 = arith.constant dense<0.000000e+00> : vector<128xf32>
    %53 = vector.multi_reduction <add>, %52, %cst_20 [0] : vector<128x128xf32> to vector<128xf32>
    %54 = vector.shape_cast %53 : vector<128xf32> to vector<1x128xf32>
    %55 = arith.addf %33, %54 : vector<1x128xf32>
    %c1_i32 = arith.constant 1 : i32
    %c8_i32_21 = arith.constant 8 : i32
    %56 = arith.muli %c1_i32, %c8_i32_21 : i32
    %57 = tpu.assume_multiple %56, 8 : i32
    %58 = arith.index_cast %57 : i32 to index
    %c0_22 = arith.constant 0 : index
    %59 = vector.load %arg7[%58, %c0_22] : memref<64x128xf32, #tpu.memory_space<vmem>>, vector<8x128xf32>
    %60 = vector.shape_cast %30 : vector<16x128xf32> to vector<1x16x128xf32>
    %61 = vector.shape_cast %59 : vector<8x128xf32> to vector<8x1x128xf32>
    %62 = vector.broadcast %60 : vector<1x16x128xf32> to vector<8x16x128xf32>
    %63 = vector.broadcast %61 : vector<8x1x128xf32> to vector<8x16x128xf32>
    %64 = arith.addf %62, %63 : vector<8x16x128xf32>
    %65 = vector.shape_cast %64 : vector<8x16x128xf32> to vector<128x128xf32>
    %cst_23 = arith.constant 0.00999999977 : f32
    %66 = vector.broadcast %cst_23 : f32 to vector<128x128xf32>
    %67 = arith.mulf %66, %65 : vector<128x128xf32>
    %68 = arith.maximumf %65, %67 : vector<128x128xf32>
    %cst_24 = arith.constant dense<0.000000e+00> : vector<128x128xf32>
    %69 = tpu.matmul %68, %8, %cst_24 {dimension_numbers = #tpu.dot_dimension_numbers<[1], [0], [0], [1], [0, 0, 1, 1], [], []>} : vector<128x128xf32>, vector<128x128xf32>, vector<128x128xf32> -> vector<128x128xf32>
    %70 = vector.broadcast %5 : vector<1x128xf32> to vector<128x128xf32>
    %71 = arith.addf %69, %70 : vector<128x128xf32>
    %cst_25 = arith.constant 0.00999999977 : f32
    %72 = vector.broadcast %cst_25 : f32 to vector<128x128xf32>
    %73 = arith.mulf %72, %71 : vector<128x128xf32>
    %74 = arith.maximumf %71, %73 : vector<128x128xf32>
    %cst_26 = arith.constant dense<0.000000e+00> : vector<128xf32>
    %75 = vector.multi_reduction <add>, %74, %cst_26 [0] : vector<128x128xf32> to vector<128xf32>
    %76 = vector.shape_cast %75 : vector<128xf32> to vector<1x128xf32>
    %77 = arith.addf %55, %76 : vector<1x128xf32>
    %c2_i32 = arith.constant 2 : i32
    %c8_i32_27 = arith.constant 8 : i32
    %78 = arith.muli %c2_i32, %c8_i32_27 : i32
    %79 = tpu.assume_multiple %78, 8 : i32
    %80 = arith.index_cast %79 : i32 to index
    %c0_28 = arith.constant 0 : index
    %81 = vector.load %arg7[%80, %c0_28] : memref<64x128xf32, #tpu.memory_space<vmem>>, vector<8x128xf32>
    %82 = vector.shape_cast %30 : vector<16x128xf32> to vector<1x16x128xf32>
    %83 = vector.shape_cast %81 : vector<8x128xf32> to vector<8x1x128xf32>
    %84 = vector.broadcast %82 : vector<1x16x128xf32> to vector<8x16x128xf32>
    %85 = vector.broadcast %83 : vector<8x1x128xf32> to vector<8x16x128xf32>
    %86 = arith.addf %84, %85 : vector<8x16x128xf32>
    %87 = vector.shape_cast %86 : vector<8x16x128xf32> to vector<128x128xf32>
    %cst_29 = arith.constant 0.00999999977 : f32
    %88 = vector.broadcast %cst_29 : f32 to vector<128x128xf32>
    %89 = arith.mulf %88, %87 : vector<128x128xf32>
    %90 = arith.maximumf %87, %89 : vector<128x128xf32>
    %cst_30 = arith.constant dense<0.000000e+00> : vector<128x128xf32>
    %91 = tpu.matmul %90, %8, %cst_30 {dimension_numbers = #tpu.dot_dimension_numbers<[1], [0], [0], [1], [0, 0, 1, 1], [], []>} : vector<128x128xf32>, vector<128x128xf32>, vector<128x128xf32> -> vector<128x128xf32>
    %92 = vector.broadcast %5 : vector<1x128xf32> to vector<128x128xf32>
    %93 = arith.addf %91, %92 : vector<128x128xf32>
    %cst_31 = arith.constant 0.00999999977 : f32
    %94 = vector.broadcast %cst_31 : f32 to vector<128x128xf32>
    %95 = arith.mulf %94, %93 : vector<128x128xf32>
    %96 = arith.maximumf %93, %95 : vector<128x128xf32>
    %cst_32 = arith.constant dense<0.000000e+00> : vector<128xf32>
    %97 = vector.multi_reduction <add>, %96, %cst_32 [0] : vector<128x128xf32> to vector<128xf32>
    %98 = vector.shape_cast %97 : vector<128xf32> to vector<1x128xf32>
    %99 = arith.addf %77, %98 : vector<1x128xf32>
    %c3_i32 = arith.constant 3 : i32
    %c8_i32_33 = arith.constant 8 : i32
    %100 = arith.muli %c3_i32, %c8_i32_33 : i32
    %101 = tpu.assume_multiple %100, 8 : i32
    %102 = arith.index_cast %101 : i32 to index
    %c0_34 = arith.constant 0 : index
    %103 = vector.load %arg7[%102, %c0_34] : memref<64x128xf32, #tpu.memory_space<vmem>>, vector<8x128xf32>
    %104 = vector.shape_cast %30 : vector<16x128xf32> to vector<1x16x128xf32>
    %105 = vector.shape_cast %103 : vector<8x128xf32> to vector<8x1x128xf32>
    %106 = vector.broadcast %104 : vector<1x16x128xf32> to vector<8x16x128xf32>
    %107 = vector.broadcast %105 : vector<8x1x128xf32> to vector<8x16x128xf32>
    %108 = arith.addf %106, %107 : vector<8x16x128xf32>
    %109 = vector.shape_cast %108 : vector<8x16x128xf32> to vector<128x128xf32>
    %cst_35 = arith.constant 0.00999999977 : f32
    %110 = vector.broadcast %cst_35 : f32 to vector<128x128xf32>
    %111 = arith.mulf %110, %109 : vector<128x128xf32>
    %112 = arith.maximumf %109, %111 : vector<128x128xf32>
    %cst_36 = arith.constant dense<0.000000e+00> : vector<128x128xf32>
    %113 = tpu.matmul %112, %8, %cst_36 {dimension_numbers = #tpu.dot_dimension_numbers<[1], [0], [0], [1], [0, 0, 1, 1], [], []>} : vector<128x128xf32>, vector<128x128xf32>, vector<128x128xf32> -> vector<128x128xf32>
    %114 = vector.broadcast %5 : vector<1x128xf32> to vector<128x128xf32>
    %115 = arith.addf %113, %114 : vector<128x128xf32>
    %cst_37 = arith.constant 0.00999999977 : f32
    %116 = vector.broadcast %cst_37 : f32 to vector<128x128xf32>
    %117 = arith.mulf %116, %115 : vector<128x128xf32>
    %118 = arith.maximumf %115, %117 : vector<128x128xf32>
    %cst_38 = arith.constant dense<0.000000e+00> : vector<128xf32>
    %119 = vector.multi_reduction <add>, %118, %cst_38 [0] : vector<128x128xf32> to vector<128xf32>
    %120 = vector.shape_cast %119 : vector<128xf32> to vector<1x128xf32>
    %121 = arith.addf %99, %120 : vector<1x128xf32>
    %c4_i32 = arith.constant 4 : i32
    %c8_i32_39 = arith.constant 8 : i32
    %122 = arith.muli %c4_i32, %c8_i32_39 : i32
    %123 = tpu.assume_multiple %122, 8 : i32
    %124 = arith.index_cast %123 : i32 to index
    %c0_40 = arith.constant 0 : index
    %125 = vector.load %arg7[%124, %c0_40] : memref<64x128xf32, #tpu.memory_space<vmem>>, vector<8x128xf32>
    %126 = vector.shape_cast %30 : vector<16x128xf32> to vector<1x16x128xf32>
    %127 = vector.shape_cast %125 : vector<8x128xf32> to vector<8x1x128xf32>
    %128 = vector.broadcast %126 : vector<1x16x128xf32> to vector<8x16x128xf32>
    %129 = vector.broadcast %127 : vector<8x1x128xf32> to vector<8x16x128xf32>
    %130 = arith.addf %128, %129 : vector<8x16x128xf32>
    %131 = vector.shape_cast %130 : vector<8x16x128xf32> to vector<128x128xf32>
    %cst_41 = arith.constant 0.00999999977 : f32
    %132 = vector.broadcast %cst_41 : f32 to vector<128x128xf32>
    %133 = arith.mulf %132, %131 : vector<128x128xf32>
    %134 = arith.maximumf %131, %133 : vector<128x128xf32>
    %cst_42 = arith.constant dense<0.000000e+00> : vector<128x128xf32>
    %135 = tpu.matmul %134, %8, %cst_42 {dimension_numbers = #tpu.dot_dimension_numbers<[1], [0], [0], [1], [0, 0, 1, 1], [], []>} : vector<128x128xf32>, vector<128x128xf32>, vector<128x128xf32> -> vector<128x128xf32>
    %136 = vector.broadcast %5 : vector<1x128xf32> to vector<128x128xf32>
    %137 = arith.addf %135, %136 : vector<128x128xf32>
    %cst_43 = arith.constant 0.00999999977 : f32
    %138 = vector.broadcast %cst_43 : f32 to vector<128x128xf32>
    %139 = arith.mulf %138, %137 : vector<128x128xf32>
    %140 = arith.maximumf %137, %139 : vector<128x128xf32>
    %cst_44 = arith.constant dense<0.000000e+00> : vector<128xf32>
    %141 = vector.multi_reduction <add>, %140, %cst_44 [0] : vector<128x128xf32> to vector<128xf32>
    %142 = vector.shape_cast %141 : vector<128xf32> to vector<1x128xf32>
    %143 = arith.addf %121, %142 : vector<1x128xf32>
    %c5_i32 = arith.constant 5 : i32
    %c8_i32_45 = arith.constant 8 : i32
    %144 = arith.muli %c5_i32, %c8_i32_45 : i32
    %145 = tpu.assume_multiple %144, 8 : i32
    %146 = arith.index_cast %145 : i32 to index
    %c0_46 = arith.constant 0 : index
    %147 = vector.load %arg7[%146, %c0_46] : memref<64x128xf32, #tpu.memory_space<vmem>>, vector<8x128xf32>
    %148 = vector.shape_cast %30 : vector<16x128xf32> to vector<1x16x128xf32>
    %149 = vector.shape_cast %147 : vector<8x128xf32> to vector<8x1x128xf32>
    %150 = vector.broadcast %148 : vector<1x16x128xf32> to vector<8x16x128xf32>
    %151 = vector.broadcast %149 : vector<8x1x128xf32> to vector<8x16x128xf32>
    %152 = arith.addf %150, %151 : vector<8x16x128xf32>
    %153 = vector.shape_cast %152 : vector<8x16x128xf32> to vector<128x128xf32>
    %cst_47 = arith.constant 0.00999999977 : f32
    %154 = vector.broadcast %cst_47 : f32 to vector<128x128xf32>
    %155 = arith.mulf %154, %153 : vector<128x128xf32>
    %156 = arith.maximumf %153, %155 : vector<128x128xf32>
    %cst_48 = arith.constant dense<0.000000e+00> : vector<128x128xf32>
    %157 = tpu.matmul %156, %8, %cst_48 {dimension_numbers = #tpu.dot_dimension_numbers<[1], [0], [0], [1], [0, 0, 1, 1], [], []>} : vector<128x128xf32>, vector<128x128xf32>, vector<128x128xf32> -> vector<128x128xf32>
    %158 = vector.broadcast %5 : vector<1x128xf32> to vector<128x128xf32>
    %159 = arith.addf %157, %158 : vector<128x128xf32>
    %cst_49 = arith.constant 0.00999999977 : f32
    %160 = vector.broadcast %cst_49 : f32 to vector<128x128xf32>
    %161 = arith.mulf %160, %159 : vector<128x128xf32>
    %162 = arith.maximumf %159, %161 : vector<128x128xf32>
    %cst_50 = arith.constant dense<0.000000e+00> : vector<128xf32>
    %163 = vector.multi_reduction <add>, %162, %cst_50 [0] : vector<128x128xf32> to vector<128xf32>
    %164 = vector.shape_cast %163 : vector<128xf32> to vector<1x128xf32>
    %165 = arith.addf %143, %164 : vector<1x128xf32>
    %c6_i32 = arith.constant 6 : i32
    %c8_i32_51 = arith.constant 8 : i32
    %166 = arith.muli %c6_i32, %c8_i32_51 : i32
    %167 = tpu.assume_multiple %166, 8 : i32
    %168 = arith.index_cast %167 : i32 to index
    %c0_52 = arith.constant 0 : index
    %169 = vector.load %arg7[%168, %c0_52] : memref<64x128xf32, #tpu.memory_space<vmem>>, vector<8x128xf32>
    %170 = vector.shape_cast %30 : vector<16x128xf32> to vector<1x16x128xf32>
    %171 = vector.shape_cast %169 : vector<8x128xf32> to vector<8x1x128xf32>
    %172 = vector.broadcast %170 : vector<1x16x128xf32> to vector<8x16x128xf32>
    %173 = vector.broadcast %171 : vector<8x1x128xf32> to vector<8x16x128xf32>
    %174 = arith.addf %172, %173 : vector<8x16x128xf32>
    %175 = vector.shape_cast %174 : vector<8x16x128xf32> to vector<128x128xf32>
    %cst_53 = arith.constant 0.00999999977 : f32
    %176 = vector.broadcast %cst_53 : f32 to vector<128x128xf32>
    %177 = arith.mulf %176, %175 : vector<128x128xf32>
    %178 = arith.maximumf %175, %177 : vector<128x128xf32>
    %cst_54 = arith.constant dense<0.000000e+00> : vector<128x128xf32>
    %179 = tpu.matmul %178, %8, %cst_54 {dimension_numbers = #tpu.dot_dimension_numbers<[1], [0], [0], [1], [0, 0, 1, 1], [], []>} : vector<128x128xf32>, vector<128x128xf32>, vector<128x128xf32> -> vector<128x128xf32>
    %180 = vector.broadcast %5 : vector<1x128xf32> to vector<128x128xf32>
    %181 = arith.addf %179, %180 : vector<128x128xf32>
    %cst_55 = arith.constant 0.00999999977 : f32
    %182 = vector.broadcast %cst_55 : f32 to vector<128x128xf32>
    %183 = arith.mulf %182, %181 : vector<128x128xf32>
    %184 = arith.maximumf %181, %183 : vector<128x128xf32>
    %cst_56 = arith.constant dense<0.000000e+00> : vector<128xf32>
    %185 = vector.multi_reduction <add>, %184, %cst_56 [0] : vector<128x128xf32> to vector<128xf32>
    %186 = vector.shape_cast %185 : vector<128xf32> to vector<1x128xf32>
    %187 = arith.addf %165, %186 : vector<1x128xf32>
    %c7_i32 = arith.constant 7 : i32
    %c8_i32_57 = arith.constant 8 : i32
    %188 = arith.muli %c7_i32, %c8_i32_57 : i32
    %189 = tpu.assume_multiple %188, 8 : i32
    %190 = arith.index_cast %189 : i32 to index
    %c0_58 = arith.constant 0 : index
    %191 = vector.load %arg7[%190, %c0_58] : memref<64x128xf32, #tpu.memory_space<vmem>>, vector<8x128xf32>
    %192 = vector.shape_cast %30 : vector<16x128xf32> to vector<1x16x128xf32>
    %193 = vector.shape_cast %191 : vector<8x128xf32> to vector<8x1x128xf32>
    %194 = vector.broadcast %192 : vector<1x16x128xf32> to vector<8x16x128xf32>
    %195 = vector.broadcast %193 : vector<8x1x128xf32> to vector<8x16x128xf32>
    %196 = arith.addf %194, %195 : vector<8x16x128xf32>
    %197 = vector.shape_cast %196 : vector<8x16x128xf32> to vector<128x128xf32>
    %cst_59 = arith.constant 0.00999999977 : f32
    %198 = vector.broadcast %cst_59 : f32 to vector<128x128xf32>
    %199 = arith.mulf %198, %197 : vector<128x128xf32>
    %200 = arith.maximumf %197, %199 : vector<128x128xf32>
    %cst_60 = arith.constant dense<0.000000e+00> : vector<128x128xf32>
    %201 = tpu.matmul %200, %8, %cst_60 {dimension_numbers = #tpu.dot_dimension_numbers<[1], [0], [0], [1], [0, 0, 1, 1], [], []>} : vector<128x128xf32>, vector<128x128xf32>, vector<128x128xf32> -> vector<128x128xf32>
    %202 = vector.broadcast %5 : vector<1x128xf32> to vector<128x128xf32>
    %203 = arith.addf %201, %202 : vector<128x128xf32>
    %cst_61 = arith.constant 0.00999999977 : f32
    %204 = vector.broadcast %cst_61 : f32 to vector<128x128xf32>
    %205 = arith.mulf %204, %203 : vector<128x128xf32>
    %206 = arith.maximumf %203, %205 : vector<128x128xf32>
    %cst_62 = arith.constant dense<0.000000e+00> : vector<128xf32>
    %207 = vector.multi_reduction <add>, %206, %cst_62 [0] : vector<128x128xf32> to vector<128xf32>
    %208 = vector.shape_cast %207 : vector<128xf32> to vector<1x128xf32>
    %209 = arith.addf %187, %208 : vector<1x128xf32>
    %c8_i32_63 = arith.constant 8 : i32
    %210 = vector.extract_strided_slice %209 {offsets = [0, 0], sizes = [1, 32], strides = [1, 1]} : vector<1x128xf32> to vector<1x32xf32>
    %211 = vector.extract_strided_slice %209 {offsets = [0, 32], sizes = [1, 32], strides = [1, 1]} : vector<1x128xf32> to vector<1x32xf32>
    %212 = arith.addf %210, %211 : vector<1x32xf32>
    %213 = vector.extract_strided_slice %209 {offsets = [0, 64], sizes = [1, 32], strides = [1, 1]} : vector<1x128xf32> to vector<1x32xf32>
    %214 = arith.addf %212, %213 : vector<1x32xf32>
    %215 = vector.extract_strided_slice %209 {offsets = [0, 96], sizes = [1, 32], strides = [1, 1]} : vector<1x128xf32> to vector<1x32xf32>
    %216 = arith.addf %214, %215 : vector<1x32xf32>
    %cst_64 = arith.constant dense<0.000000e+00> : vector<1x32xf32>
    %217 = tpu.matmul %216, %10, %cst_64 {dimension_numbers = #tpu.dot_dimension_numbers<[1], [0], [0], [1], [0, 0, 1, 1], [], []>} : vector<1x32xf32>, vector<32x32xf32>, vector<1x32xf32> -> vector<1x32xf32>
    %218 = arith.addf %217, %6 : vector<1x32xf32>
    %cst_65 = arith.constant 0.000000e+00 : f32
    %219 = vector.broadcast %cst_65 : f32 to vector<1x32xf32>
    %220 = arith.maximumf %218, %219 : vector<1x32xf32>
    %cst_66 = arith.constant dense<0.000000e+00> : vector<1x32xf32>
    %221 = tpu.matmul %220, %12, %cst_66 {dimension_numbers = #tpu.dot_dimension_numbers<[1], [0], [0], [1], [0, 0, 1, 1], [], []>} : vector<1x32xf32>, vector<32x32xf32>, vector<1x32xf32> -> vector<1x32xf32>
    %222 = arith.addf %221, %7 : vector<1x32xf32>
    %c0_67 = arith.constant 0 : index
    %c0_68 = arith.constant 0 : index
    %c0_69 = arith.constant 0 : index
    %223 = vector.load %arg6[%c0_67, %c0_68, %c0_69] : memref<1x1x32xf32, #tpu.memory_space<vmem>>, vector<1x1x32xf32>
    %224 = vector.shape_cast %223 : vector<1x1x32xf32> to vector<1x32xf32>
    %225 = vector.shape_cast %222 : vector<1x32xf32> to vector<1x1x32xf32>
    tpu.vector_store %arg6[%c0_67, %c0_68, %c0_69], %225 {strides = array<i32>} : memref<1x1x32xf32, #tpu.memory_space<vmem>>, vector<1x1x32xf32>,
    return
  }
  func.func @transform_0(%arg0: i32) -> (i32, i32, i32) {
    %c0_i32 = arith.constant 0 : i32
    %c0_i32_0 = arith.constant 0 : i32
    %c0_i32_1 = arith.constant 0 : i32
    return %arg0, %c0_i32, %c0_i32_0 : i32, i32, i32
  }
  func.func @transform_1(%arg0: i32) -> (i32, i32) {
    %c0_i32 = arith.constant 0 : i32
    %c0_i32_0 = arith.constant 0 : i32
    %c0_i32_1 = arith.constant 0 : i32
    return %c0_i32, %c0_i32_0 : i32, i32
  }
  func.func @transform_2(%arg0: i32) -> (i32, i32) {
    %c0_i32 = arith.constant 0 : i32
    %c0_i32_0 = arith.constant 0 : i32
    %c0_i32_1 = arith.constant 0 : i32
    return %c0_i32, %c0_i32_0 : i32, i32
  }
  func.func @transform_3(%arg0: i32) -> (i32, i32, i32) {
    %c0_i32 = arith.constant 0 : i32
    %c0_i32_0 = arith.constant 0 : i32
    %c0_i32_1 = arith.constant 0 : i32
    %c0_i32_2 = arith.constant 0 : i32
    return %c0_i32, %c0_i32_0, %c0_i32_1 : i32, i32, i32
  }
  func.func @transform_4(%arg0: i32) -> (i32, i32) {
    %c0_i32 = arith.constant 0 : i32
    %c0_i32_0 = arith.constant 0 : i32
    %c0_i32_1 = arith.constant 0 : i32
    return %c0_i32, %c0_i32_0 : i32, i32
  }
  func.func @transform_5(%arg0: i32) -> (i32, i32, i32) {
    %c0_i32 = arith.constant 0 : i32
    %c0_i32_0 = arith.constant 0 : i32
    %c0_i32_1 = arith.constant 0 : i32
    return %arg0, %c0_i32, %c0_i32_0 : i32, i32, i32
  }
}

</mosaic_0001>

<llo_original>
// kernel: tile.6
$region0: #{tile.6}
  #allocation0 [shape = 's32[1]{0}', space=sflag, size = 0x4, scoped, tag = 'scoped memory for tile.6']
  %s0 = inlined_call_operand.vmem [shape: f32[32], index: 0, kind: input, shape index: {}]
  %s1 = inlined_call_operand.vmem [shape: f32[4,32], index: 1, kind: output, shape index: {}]
  // Predicated region
  $region2: #{tile.6} parent=0 // pred_check
    _
  $region3: #{tile.6} parent=0 // pred_check_branch
    %3 = sbr.rel (0) target = $region5
  $region4: #{tile.6} parent=0 // pred_region
    _
  $region5: #{tile.6} parent=0 // pred_fallthru
    _
  %v4 = vld [vmem:[%s0] ss:$0 sm:$0xff]
  %5 = vst [vmem:[%s1] sm:$0xf] %v4

// kernel: relational_module_forward.1
$region0: #{relational_module_forward.1}
  #allocation0 [shape = 'u32[]', space=smem, size = 0x4, offset = 0x4, fixed_abs, tag = 'smem constant byte address 0x4 - core index']
  #allocation1 [shape = 'u32[144,128]{1,0:T(1,128)}', space=vmem, size = 0x12000, scoped, tag = 'internal scratch']
  #allocation2 [shape = 'f32[64,128]{1,0:T(8,128)}', space=vmem, size = 0x8000, scoped, tag = 'scratch operand']
  %s0 = inlined_call_operand.vmem [shape: f32[2,4,64], index: 0, kind: input, shape index: {}]
  %s1 = inlined_call_operand.vmem [shape: f32[5,64], index: 1, kind: input, shape index: {}]
  %s2 = inlined_call_operand.vmem [shape: f32[128,128], index: 2, kind: input, shape index: {}]
  %s3 = inlined_call_operand.vmem [shape: f32[2,32,32], index: 3, kind: input, shape index: {}]
  %s4 = inlined_call_operand.vmem [shape: f32[4,128], index: 4, kind: input, shape index: {}]
  %s5 = inlined_call_operand.hbm [shape: f32[2,1,32], index: 5, kind: output, shape index: {}]
  %s6 = sld [smem:[#allocation0]]
  $region53: #{relational_module_forward.1} parent=0
    _
  %s8 = ssub.s32 1, %s6
  %s9 = scalar_select 0, %s8, %s6
  $region1: #{relational_module_forward.1} parent=0
    #allocation3 [shape = 'u8[1024]{0}', space=vmem, size = 0x400, scoped, tag = 'output window, operand 0']
    #allocation4 [shape = 's32[2]{0}', space=sflag, size = 0x8, scoped, tag = 'scoped memory for relational_module_forward.1']
    %10 = vsyncpa [#allocation4], 0
    %s11 = scalar_lea.sflag [#allocation4], 1
    %12 = vsyncpa %s11, 0
    loop: start=0, step=1, limit=4
    $region2: #{relational_module_forward.1} parent=1 // loop_pre_header
      _
    $region3: #{relational_module_forward.1} parent=1 // loop_header
      %s14 = sphi 0, %s18
      %p15 = scmp.ge.s32.totalorder %s14, 4
      %s24 = sphi 0, %s26
      %s27 = sphi 0, %s24
      %s28 = sphi 0, %s27
      %s44 = sphi 0, %s28
      %s48 = sphi 0, %s48
      %s50 = sphi 0, %s48
      %s51 = sphi 0, %s50
      %s65 = sphi 0, %s51
      %s69 = sphi 0, %s69
      %s71 = sphi 0, %s69
      %s72 = sphi 0, %s71
      %s86 = sphi 0, %s72
      %s90 = sphi 0, %s90
      %s92 = sphi 0, %s90
      %s93 = sphi 0, %s92
      %s107 = sphi 0, %s93
      %s111 = sphi 0, %s111
      %s113 = sphi 0, %s111
      %s114 = sphi 0, %s113
      %s128 = sphi 0, %s114
      %s134 = sphi 0, %s136
      %s137 = sphi 0, %s134
      %s138 = sphi 0, %s137
      %s154 = sphi 0, %s138
    $region4: #{relational_module_forward.1} parent=1 // loop_header_branch
      %17 = sbr.rel (%p15) target = $region8
    $region5: #{relational_module_forward.1} parent=1 // loop_body
      %s19 = ssub.s32 %s14, 1
      %s20 = ssub.s32 %s14, 2
      %s21 = sadd.s32 %s14, 1
      %s22 = ssub.s32 %s14, %s21
      %p23 = scmp.eq.s32.totalorder %s22, 0
      %s25 = sadd.s32 %s24, 1
      %s26 = scalar_select %p23, %s24, %s25
      %p29 = pneg %p23
      %p30 = scmp.eq.s32.totalorder %s14, 1
      %p31 = por %p29, %p30
      %p32 = scmp.ne.s32.totalorder %s24, %s27
      %p33 = scmp.eq.s32.totalorder %s14, 0
      %p34 = por %p32, %p33
      %p35 = scmp.ne.s32.totalorder %s24, %s27
      %p36 = scmp.eq.s32.totalorder %s19, 1
      %p37 = por %p35, %p36
      %p38 = scmp.ne.s32.totalorder %s27, %s28
      %p39 = scmp.eq.s32.totalorder %s19, 0
      %p40 = por %p38, %p39
      %p41 = scmp.ne.s32.totalorder %s27, %s28
      %p42 = scmp.eq.s32.totalorder %s20, 1
      %p43 = por %p41, %p42
      %p45 = scmp.ne.s32.totalorder %s28, %s44
      %p46 = scmp.eq.s32.totalorder %s20, 0
      %p47 = por %p45, %p46
      %s49 = sadd.s32 %s48, 1
      %p52 = scmp.eq.s32.totalorder %s14, 1
      %p53 = scmp.ne.s32.totalorder %s48, %s50
      %p54 = scmp.eq.s32.totalorder %s14, 0
      %p55 = por %p53, %p54
      %p56 = scmp.ne.s32.totalorder %s48, %s50
      %p57 = scmp.eq.s32.totalorder %s19, 1
      %p58 = por %p56, %p57
      %p59 = scmp.ne.s32.totalorder %s50, %s51
      %p60 = scmp.eq.s32.totalorder %s19, 0
      %p61 = por %p59, %p60
      %p62 = scmp.ne.s32.totalorder %s50, %s51
      %p63 = scmp.eq.s32.totalorder %s20, 1
      %p64 = por %p62, %p63
      %p66 = scmp.ne.s32.totalorder %s51, %s65
      %p67 = scmp.eq.s32.totalorder %s20, 0
      %p68 = por %p66, %p67
      %s70 = sadd.s32 %s69, 1
      %p73 = scmp.eq.s32.totalorder %s14, 1
      %p74 = scmp.ne.s32.totalorder %s69, %s71
      %p75 = scmp.eq.s32.totalorder %s14, 0
      %p76 = por %p74, %p75
      %p77 = scmp.ne.s32.totalorder %s69, %s71
      %p78 = scmp.eq.s32.totalorder %s19, 1
      %p79 = por %p77, %p78
      %p80 = scmp.ne.s32.totalorder %s71, %s72
      %p81 = scmp.eq.s32.totalorder %s19, 0
      %p82 = por %p80, %p81
      %p83 = scmp.ne.s32.totalorder %s71, %s72
      %p84 = scmp.eq.s32.totalorder %s20, 1
      %p85 = por %p83, %p84
      %p87 = scmp.ne.s32.totalorder %s72, %s86
      %p88 = scmp.eq.s32.totalorder %s20, 0
      %p89 = por %p87, %p88
      %s91 = sadd.s32 %s90, 1
      %p94 = scmp.eq.s32.totalorder %s14, 1
      %p95 = scmp.ne.s32.totalorder %s90, %s92
      %p96 = scmp.eq.s32.totalorder %s14, 0
      %p97 = por %p95, %p96
      %p98 = scmp.ne.s32.totalorder %s90, %s92
      %p99 = scmp.eq.s32.totalorder %s19, 1
      %p100 = por %p98, %p99
      %p101 = scmp.ne.s32.totalorder %s92, %s93
      %p102 = scmp.eq.s32.totalorder %s19, 0
      %p103 = por %p101, %p102
      %p104 = scmp.ne.s32.totalorder %s92, %s93
      %p105 = scmp.eq.s32.totalorder %s20, 1
      %p106 = por %p104, %p105
      %p108 = scmp.ne.s32.totalorder %s93, %s107
      %p109 = scmp.eq.s32.totalorder %s20, 0
      %p110 = por %p108, %p109
      %s112 = sadd.s32 %s111, 1
      %p115 = scmp.eq.s32.totalorder %s14, 1
      %p116 = scmp.ne.s32.totalorder %s111, %s113
      %p117 = scmp.eq.s32.totalorder %s14, 0
      %p118 = por %p116, %p117
      %p119 = scmp.ne.s32.totalorder %s111, %s113
      %p120 = scmp.eq.s32.totalorder %s19, 1
      %p121 = por %p119, %p120
      %p122 = scmp.ne.s32.totalorder %s113, %s114
      %p123 = scmp.eq.s32.totalorder %s19, 0
      %p124 = por %p122, %p123
      %p125 = scmp.ne.s32.totalorder %s113, %s114
      %p126 = scmp.eq.s32.totalorder %s20, 1
      %p127 = por %p125, %p126
      %p129 = scmp.ne.s32.totalorder %s114, %s128
      %p130 = scmp.eq.s32.totalorder %s20, 0
      %p131 = por %p129, %p130
      %s132 = ssub.s32 %s14, %s21
      %p133 = scmp.eq.s32.totalorder %s132, 0
      %s135 = sadd.s32 %s134, 1
      %s136 = scalar_select %p133, %s134, %s135
      %p139 = pneg %p133
      %p140 = scmp.eq.s32.totalorder %s14, 1
      %p141 = por %p139, %p140
      %p142 = scmp.ne.s32.totalorder %s134, %s137
      %p143 = scmp.eq.s32.totalorder %s14, 0
      %p144 = por %p142, %p143
      %p145 = scmp.ne.s32.totalorder %s134, %s137
      %p146 = scmp.eq.s32.totalorder %s19, 1
      %p147 = por %p145, %p146
      %p148 = scmp.ne.s32.totalorder %s137, %s138
      %p149 = scmp.eq.s32.totalorder %s19, 0
      %p150 = por %p148, %p149
      %p151 = scmp.ne.s32.totalorder %s137, %s138
      %p152 = scmp.eq.s32.totalorder %s20, 1
      %p153 = por %p151, %p152
      %p155 = scmp.ne.s32.totalorder %s138, %s154
      %p156 = scmp.eq.s32.totalorder %s20, 0
      %p157 = por %p155, %p156
      %p158 = scmp.le.s32.totalorder 1, %s14
      %p159 = scmp.lt.s32.totalorder %s14, 3
      %p160 = pnand %p158, %p159
      %p161 = pneg %p160
      // Predicated region
      $region9: #{relational_module_forward.1} parent=5 // pred_check
        _
      $region10: #{relational_module_forward.1} parent=5 // pred_check_branch
        %163 = sbr.rel (%p160) target = $region12
      $region11: #{relational_module_forward.1} parent=5 // pred_region
        %s164 = ssub.s32 %s14, 1
        // Predicated region
        $region13: #{relational_module_forward.1} parent=11 // pred_check
          %p165 = pneg %p61
        $region14: #{relational_module_forward.1} parent=11 // pred_check_branch
          %167 = sbr.rel (%p165) target = $region16
        $region15: #{relational_module_forward.1} parent=11 // pred_region
          _
        $region16: #{relational_module_forward.1} parent=11 // pred_fallthru
          _
        // Predicated region
        $region17: #{relational_module_forward.1} parent=11 // pred_check
          %p168 = pneg %p82
        $region18: #{relational_module_forward.1} parent=11 // pred_check_branch
          %170 = sbr.rel (%p168) target = $region20
        $region19: #{relational_module_forward.1} parent=11 // pred_region
          _
        $region20: #{relational_module_forward.1} parent=11 // pred_fallthru
          _
        // Predicated region
        $region21: #{relational_module_forward.1} parent=11 // pred_check
          %p171 = pneg %p103
        $region22: #{relational_module_forward.1} parent=11 // pred_check_branch
          %173 = sbr.rel (%p171) target = $region24
        $region23: #{relational_module_forward.1} parent=11 // pred_region
          _
        $region24: #{relational_module_forward.1} parent=11 // pred_fallthru
          _
        // Predicated region
        $region25: #{relational_module_forward.1} parent=11 // pred_check
          %p174 = pneg %p124
        $region26: #{relational_module_forward.1} parent=11 // pred_check_branch
          %176 = sbr.rel (%p174) target = $region28
        $region27: #{relational_module_forward.1} parent=11 // pred_region
          _
        $region28: #{relational_module_forward.1} parent=11 // pred_fallthru
          _
      $region12: #{relational_module_forward.1} parent=5 // pred_fallthru
        _
      %p177 = scmp.lt.s32.totalorder %s14, 2
      // Predicated region
      $region29: #{relational_module_forward.1} parent=5 // pred_check
        %p178 = pneg %p177
      $region30: #{relational_module_forward.1} parent=5 // pred_check_branch
        %180 = sbr.rel (%p178) target = $region32
      $region31: #{relational_module_forward.1} parent=5 // pred_region
        // Predicated region
        $region33: #{relational_module_forward.1} parent=31 // pred_check
          %p181 = pneg %p34
        $region34: #{relational_module_forward.1} parent=31 // pred_check_branch
          %183 = sbr.rel (%p181) target = $region36
        $region35: #{relational_module_forward.1} parent=31 // pred_region
          %p184 = scmp.lt.s32.totalorder %s14, 1
          %s185 = scalar_select %p184, %s14, 1
          %s186 = smul.addr %s185, 4
          %s187 = scalar_lea.vmem %s0, %s186
        $region36: #{relational_module_forward.1} parent=31 // pred_fallthru
          _
      $region32: #{relational_module_forward.1} parent=5 // pred_fallthru
        _
      %p188 = scmp.le.s32.totalorder 1, %s14
      %p189 = scmp.lt.s32.totalorder %s14, 3
      %p190 = pnand %p188, %p189
      %p191 = pneg %p190
      // Predicated region
      $region37: #{relational_module_forward.1} parent=5 // pred_check
        _
      $region38: #{relational_module_forward.1} parent=5 // pred_check_branch
        %193 = sbr.rel (%p190) target = $region40
      $region39: #{relational_module_forward.1} parent=5 // pred_region
        %s194 = ssub.s32 %s14, 1
        %p195 = scmp.lt.s32.totalorder %s19, 1
        %s196 = scalar_select %p195, %s19, 1
        %s197 = smul.addr %s196, 4
        %s198 = scalar_lea.vmem %s0, %s197
        %p199 = pneg %p40
        %p200 = pneg %p37
        %p201 = pneg %p61
        %p202 = pneg %p58
        %p203 = pneg %p82
        %p204 = pneg %p79
        %p205 = pneg %p103
        %p206 = pneg %p100
        %p207 = pneg %p124
        %p208 = pneg %p121
        %p209 = pneg %p150
        %p210 = pneg %p147
        %s211 = sand.u32 %s137, 1
        %s212 = scalar_lea.sflag [#allocation4], %s211
        %s213 = sand.u32 %s137, 1
        %s214 = scalar_lea.vmem [#allocation3], %s213
        %p215 = scmp.lt.s32.totalorder %s19, 1
        %s216 = scalar_select %p215, %s19, 1
        %s217 = smul.addr %s216, 4
        %s218 = scalar_lea.vmem %s0, %s217
        %v219 = vld [vmem:[%s1] sm:$0x1f]
        %v220 = vld [vmem:[%s4] sm:$0xf]
        %v221 = vld [vmem:[%s2] sm:$0xff]
        %v222 = vld [vmem:[%s2 + $0x8] sm:$0xff]
        %v223 = vld [vmem:[%s2 + $0x10] sm:$0xff]
        %v224 = vld [vmem:[%s2 + $0x18] sm:$0xff]
        %v225 = vld [vmem:[%s2 + $0x20] sm:$0xff]
        %v226 = vld [vmem:[%s2 + $0x28] sm:$0xff]
        %v227 = vld [vmem:[%s2 + $0x30] sm:$0xff]
        %v228 = vld [vmem:[%s2 + $0x38] sm:$0xff]
        %v229 = vld [vmem:[%s2 + $0x40] sm:$0xff]
        %v230 = vld [vmem:[%s2 + $0x48] sm:$0xff]
        %v231 = vld [vmem:[%s2 + $0x50] sm:$0xff]
        %v232 = vld [vmem:[%s2 + $0x58] sm:$0xff]
        %v233 = vld [vmem:[%s2 + $0x60] sm:$0xff]
        %v234 = vld [vmem:[%s2 + $0x68] sm:$0xff]
        %v235 = vld [vmem:[%s2 + $0x70] sm:$0xff]
        %v236 = vld [vmem:[%s2 + $0x78] sm:$0xff]
        %v237 = vld [vmem:[%s3] sm:$0xff]
        %v238 = vld [vmem:[%s3 + $0x8] sm:$0xff]
        %v239 = vld [vmem:[%s3 + $0x10] sm:$0xff]
        %v240 = vld [vmem:[%s3 + $0x18] sm:$0xff]
        %s241 = scalar_lea.vmem %s3, 32
        %v242 = vld [vmem:[%s241] sm:$0xff]
        %v243 = vld [vmem:[%s241 + $0x8] sm:$0xff]
        %v244 = vld [vmem:[%s241 + $0x10] sm:$0xff]
        %v245 = vld [vmem:[%s241 + $0x18] sm:$0xff]
        %v246 = vlaneseq
        %v247 = vshrl.u32 %v246, 7
        %v248 = vadd.s32 %v247, 8
        %v249 = vadd.s32 %v247, 16
        %v250 = vadd.s32 %v247, 24
        %v251 = vadd.s32 %v247, 32
        %v252 = vadd.s32 %v247, 40
        %v253 = vadd.s32 %v247, 48
        %v254 = vadd.s32 %v247, 56
        %v255 = vcvt.s32.f32 %v247
        %v256 = vcvt.s32.f32 %v248
        %v257 = vcvt.s32.f32 %v249
        %v258 = vcvt.s32.f32 %v250
        %v259 = vcvt.s32.f32 %v251
        %v260 = vcvt.s32.f32 %v252
        %v261 = vcvt.s32.f32 %v253
        %v262 = vcvt.s32.f32 %v254
        %v263 = vld [vmem:[%s218] sm:$0xf]
        %v264 = vlaneseq
        %v265 = vshrl.u32 %v264, 7
        %v266 = vsub.s32 4, %v265
        %v267 = vrot.slane %v219, %v266
        %v268 = vmul.f32 %v255, %v267
        %v269 = vmul.f32 %v256, %v267
        %v270 = vmul.f32 %v257, %v267
        %v271 = vmul.f32 %v258, %v267
        %v272 = vmul.f32 %v259, %v267
        %v273 = vmul.f32 %v260, %v267
        %v274 = vmul.f32 %v261, %v267
        %v275 = vmul.f32 %v262, %v267
        %276 = vxpose.xlu0.b32.start [1/16] %v263, 128
        %277 = vxpose.xlu0.b32.cont [2/16] 0.0, 128
        %278 = vxpose.xlu0.b32.cont [3/16] 0.0, 128
        %279 = vxpose.xlu0.b32.cont [4/16] 0.0, 128
        %280 = vxpose.xlu0.b32.cont [5/16] 0.0, 128
        %281 = vxpose.xlu0.b32.cont [6/16] 0.0, 128
        %282 = vxpose.xlu0.b32.cont [7/16] 0.0, 128
        %283 = vxpose.xlu0.b32.cont [8/16] 0.0, 128
        %284 = vxpose.xlu0.b32.cont [9/16] 0.0, 128
        %285 = vxpose.xlu0.b32.cont [10/16] 0.0, 128
        %286 = vxpose.xlu0.b32.cont [11/16] 0.0, 128
        %287 = vxpose.xlu0.b32.cont [12/16] 0.0, 128
        %288 = vxpose.xlu0.b32.cont [13/16] 0.0, 128
        %289 = vxpose.xlu0.b32.cont [14/16] 0.0, 128
        %290 = vxpose.xlu0.b32.cont [15/16] 0.0, 128
        %291 = vxpose.xlu0.b32.end [16/16] 0.0, 128
        %v292 = vpop.trf.xlu0
        %v293 = vpop.trf.xlu0
        %v294 = vpop.trf.xlu0
        %v295 = vpop.trf.xlu0
        %v296 = vpop.trf.xlu0
        %v297 = vpop.trf.xlu0
        %v298 = vpop.trf.xlu0
        %v299 = vpop.trf.xlu0
        %v300 = vpop.trf.xlu0
        %v301 = vpop.trf.xlu0
        %v302 = vpop.trf.xlu0
        %v303 = vpop.trf.xlu0
        %v304 = vpop.trf.xlu0
        %v305 = vpop.trf.xlu0
        %v306 = vpop.trf.xlu0
        %v307 = vpop.trf.xlu0
        %vm308 = vcmask 31744
        %v310 = vsel %vm308, %v292, 0
        %v313 = vsel %vm308, %v293, 0
        %v316 = vsel %vm308, %v294, 0
        %v319 = vsel %vm308, %v295, 0
        %v322 = vsel %vm308, %v296, 0
        %v325 = vsel %vm308, %v297, 0
        %v328 = vsel %vm308, %v298, 0
        %v331 = vsel %vm308, %v299, 0
        %vm333 = vcmask 1043456
        %v335 = vsel %vm333, %v219, 0
        %337 = vmatprep.subr.mxu0 0.0
        %338 = vmatpush1.msra.mxu0 0.0
        %339 = vmatprep.subr.mxu0 0.0
        %340 = vmatpush1.msra.mxu0 0.0
        %341 = vmatprep.subr.mxu0 0.0
        %342 = vmatpush1.msra.mxu0 0.0
        %343 = vmatprep.subr.mxu0 0.0
        %344 = vmatpush1.msra.mxu0 0.0
        %345 = vmatprep.subr.mxu0 0.0
        %346 = vmatpush1.msra.mxu0 0.0
        %347 = vmatprep.subr.mxu0 0.0
        %348 = vmatpush1.msra.mxu0 0.0
        %349 = vmatprep.subr.mxu0 0.0
        %350 = vmatpush1.msra.mxu0 0.0
        %351 = vmatprep.subr.mxu0 0.0
        %352 = vmatpush1.msra.mxu0 0.0
        %353 = vmatprep.subr.mxu0 0.0
        %354 = vmatpush1.msra.mxu0 0.0
        %355 = vmatprep.subr.mxu0 0.0
        %356 = vmatpush1.msra.mxu0 0.0
        %357 = vmatprep.subr.mxu0 0.0
        %358 = vmatpush1.msra.mxu0 0.0
        %359 = vmatprep.subr.mxu0 0.0
        %360 = vmatpush1.msra.mxu0 0.0
        %361 = vmatprep.subr.mxu0 0.0
        %362 = vmatpush1.msra.mxu0 0.0
        %363 = vmatprep.subr.mxu0 0.0
        %364 = vmatpush1.msra.mxu0 0.0
        %365 = vmatprep.subr.mxu0 0.0
        %366 = vmatpush1.msra.mxu0 0.0
        %367 = vmatprep.subr.mxu0 0.0
        %368 = vmatpush1.msra.mxu0 %v335
        %369 = vmatprep.subr.mxu0 0.0
        %370 = vmatpush2.msra.mxu0 0.0
        %371 = vmatprep.subr.mxu0 0.0
        %372 = vmatpush2.msra.mxu0 0.0
        %373 = vmatprep.subr.mxu0 0.0
        %374 = vmatpush2.msra.mxu0 0.0
        %375 = vmatprep.subr.mxu0 0.0
        %376 = vmatpush2.msra.mxu0 0.0
        %377 = vmatprep.subr.mxu0 0.0
        %378 = vmatpush2.msra.mxu0 0.0
        %379 = vmatprep.subr.mxu0 0.0
        %380 = vmatpush2.msra.mxu0 0.0
        %381 = vmatprep.subr.mxu0 0.0
        %382 = vmatpush2.msra.mxu0 0.0
        %383 = vmatprep.subr.mxu0 0.0
        %384 = vmatpush2.msra.mxu0 0.0
        %385 = vmatprep.subr.mxu0 0.0
        %386 = vmatpush2.msra.mxu0 0.0
        %387 = vmatprep.subr.mxu0 0.0
        %388 = vmatpush2.msra.mxu0 0.0
        %389 = vmatprep.subr.mxu0 0.0
        %390 = vmatpush2.msra.mxu0 0.0
        %391 = vmatprep.subr.mxu0 0.0
        %392 = vmatpush2.msra.mxu0 0.0
        %393 = vmatprep.subr.mxu0 0.0
        %394 = vmatpush2.msra.mxu0 0.0
        %395 = vmatprep.subr.mxu0 0.0
        %396 = vmatpush2.msra.mxu0 0.0
        %397 = vmatprep.subr.mxu0 0.0
        %398 = vmatpush2.msra.mxu0 0.0
        %399 = vmatprep.subr.mxu0 0.0
        %400 = vmatpush2.msra.mxu0 0.0
        %401 = vmatprep.mubr.f32.mxu0 0.0
        %402 = vmatmul.mubr.f32.gmra.mxu0 %v310
        %v403 = vpop.f32.mrf.mxu0
        %v404 = vadd.f32 %v268, %v403
        %v405 = vpop.f32.mrf.mxu0
        %406 = vmatprep.mubr.f32.mxu0 0.0
        %407 = vmatmul.mubr.f32.gmra.mxu0 %v313
        %v408 = vpop.f32.mrf.mxu0
        %v409 = vadd.f32 %v269, %v408
        %v410 = vpop.f32.mrf.mxu0
        %411 = vmatprep.mubr.f32.mxu0 0.0
        %412 = vmatmul.mubr.f32.gmra.mxu0 %v316
        %v413 = vpop.f32.mrf.mxu0
        %v414 = vadd.f32 %v270, %v413
        %v415 = vpop.f32.mrf.mxu0
        %416 = vmatprep.mubr.f32.mxu0 0.0
        %417 = vmatmul.mubr.f32.gmra.mxu0 %v319
        %v418 = vpop.f32.mrf.mxu0
        %v419 = vadd.f32 %v271, %v418
        %v420 = vpop.f32.mrf.mxu0
        %421 = vmatprep.mubr.f32.mxu0 0.0
        %422 = vmatmul.mubr.f32.gmra.mxu0 %v322
        %v423 = vpop.f32.mrf.mxu0
        %v424 = vadd.f32 %v272, %v423
        %v425 = vpop.f32.mrf.mxu0
        %426 = vmatprep.mubr.f32.mxu0 0.0
        %427 = vmatmul.mubr.f32.gmra.mxu0 %v325
        %v428 = vpop.f32.mrf.mxu0
        %v429 = vadd.f32 %v273, %v428
        %v430 = vpop.f32.mrf.mxu0
        %431 = vmatprep.mubr.f32.mxu0 0.0
        %432 = vmatmul.mubr.f32.gmra.mxu0 %v328
        %v433 = vpop.f32.mrf.mxu0
        %v434 = vadd.f32 %v274, %v433
        %v435 = vpop.f32.mrf.mxu0
        %436 = vmatprep.mubr.f32.mxu0 0.0
        %437 = vmatmul.mubr.f32.gmra.mxu0 %v331
        %v438 = vpop.f32.mrf.mxu0
        %v439 = vadd.f32 %v275, %v438
        %v440 = vpop.f32.mrf.mxu0
        %441 = vdwg.mxu0
        %v442 = vlaneseq
        %v443 = vshrl.u32 %v442, 7
        %v444 = vsub.s32 0, %v443
        %v445 = vrot.slane %v220, %v444
        %v446 = vadd.f32 %v404, %v445
        %v447 = vadd.f32 %v409, %v445
        %v448 = vadd.f32 %v414, %v445
        %v449 = vadd.f32 %v419, %v445
        %v450 = vadd.f32 %v424, %v445
        %v451 = vadd.f32 %v429, %v445
        %v452 = vadd.f32 %v434, %v445
        %v453 = vadd.f32 %v439, %v445
        %456 = vrot.lane.b32.xlu0 %v448, 32
        %v457 = vpop.permute.xlu0 %456
        %458 = vrot.lane.b32.xlu0 %v449, 32
        %v459 = vpop.permute.xlu0 %458
        %464 = vrot.lane.b32.xlu0 %v450, 64
        %v465 = vpop.permute.xlu0 %464
        %466 = vrot.lane.b32.xlu0 %v451, 64
        %v467 = vpop.permute.xlu0 %466
        %472 = vrot.lane.b32.xlu0 %v452, 96
        %v473 = vpop.permute.xlu0 %472
        %474 = vrot.lane.b32.xlu0 %v453, 96
        %v475 = vpop.permute.xlu0 %474
        %vm478 = vcmask 261120
        %v479 = vsel %vm478, %v446, %v457
        %v480 = vsel %vm478, %v447, %v459
        %vm481 = vcmask 523264
        %v482 = vsel %vm481, %v479, %v465
        %v483 = vsel %vm481, %v480, %v467
        %vm484 = vcmask 785408
        %v485 = vsel %vm484, %v482, %v473
        %v486 = vsel %vm484, %v483, %v475
        %495 = vrot.lane.b32.xlu0 %v404, 96
        %v496 = vpop.permute.xlu0 %495
        %497 = vrot.lane.b32.xlu0 %v409, 96
        %v498 = vpop.permute.xlu0 %497
        %499 = vrot.lane.b32.xlu0 %v414, 96
        %v500 = vpop.permute.xlu0 %499
        %501 = vrot.lane.b32.xlu0 %v419, 96
        %v502 = vpop.permute.xlu0 %501
        %503 = vrot.lane.b32.xlu0 %v424, 96
        %v504 = vpop.permute.xlu0 %503
        %505 = vrot.lane.b32.xlu0 %v429, 96
        %v506 = vpop.permute.xlu0 %505
        %507 = vrot.lane.b32.xlu0 %v434, 96
        %v508 = vpop.permute.xlu0 %507
        %509 = vrot.lane.b32.xlu0 %v439, 96
        %v510 = vpop.permute.xlu0 %509
        %519 = vrot.lane.b32.xlu0 %v404, 32
        %v520 = vpop.permute.xlu0 %519
        %521 = vrot.lane.b32.xlu0 %v409, 32
        %v522 = vpop.permute.xlu0 %521
        %523 = vrot.lane.b32.xlu0 %v414, 32
        %v524 = vpop.permute.xlu0 %523
        %525 = vrot.lane.b32.xlu0 %v419, 32
        %v526 = vpop.permute.xlu0 %525
        %527 = vrot.lane.b32.xlu0 %v424, 32
        %v528 = vpop.permute.xlu0 %527
        %529 = vrot.lane.b32.xlu0 %v429, 32
        %v530 = vpop.permute.xlu0 %529
        %531 = vrot.lane.b32.xlu0 %v434, 32
        %v532 = vpop.permute.xlu0 %531
        %533 = vrot.lane.b32.xlu0 %v439, 32
        %v534 = vpop.permute.xlu0 %533
        %543 = vrot.lane.b32.xlu0 %v404, 64
        %v544 = vpop.permute.xlu0 %543
        %545 = vrot.lane.b32.xlu0 %v409, 64
        %v546 = vpop.permute.xlu0 %545
        %547 = vrot.lane.b32.xlu0 %v414, 64
        %v548 = vpop.permute.xlu0 %547
        %549 = vrot.lane.b32.xlu0 %v419, 64
        %v550 = vpop.permute.xlu0 %549
        %551 = vrot.lane.b32.xlu0 %v424, 64
        %v552 = vpop.permute.xlu0 %551
        %553 = vrot.lane.b32.xlu0 %v429, 64
        %v554 = vpop.permute.xlu0 %553
        %555 = vrot.lane.b32.xlu0 %v434, 64
        %v556 = vpop.permute.xlu0 %555
        %557 = vrot.lane.b32.xlu0 %v439, 64
        %v558 = vpop.permute.xlu0 %557
        %v567 = vsel %vm478, %v496, %v404
        %v568 = vsel %vm478, %v498, %v409
        %v569 = vsel %vm478, %v500, %v414
        %v570 = vsel %vm478, %v502, %v419
        %v571 = vsel %vm478, %v504, %v424
        %v572 = vsel %vm478, %v506, %v429
        %v573 = vsel %vm478, %v508, %v434
        %v574 = vsel %vm478, %v510, %v439
        %v575 = vsel %vm481, %v567, %v520
        %v576 = vsel %vm481, %v568, %v522
        %v577 = vsel %vm481, %v569, %v524
        %v578 = vsel %vm481, %v570, %v526
        %v579 = vsel %vm481, %v571, %v528
        %v580 = vsel %vm481, %v572, %v530
        %v581 = vsel %vm481, %v573, %v532
        %v582 = vsel %vm481, %v574, %v534
        %v583 = vsel %vm484, %v575, %v544
        %v584 = vsel %vm484, %v576, %v546
        %v585 = vsel %vm484, %v577, %v548
        %v586 = vsel %vm484, %v578, %v550
        %v587 = vsel %vm484, %v579, %v552
        %v588 = vsel %vm484, %v580, %v554
        %v589 = vsel %vm484, %v581, %v556
        %v590 = vsel %vm484, %v582, %v558
        %591 = vst [vmem:[#allocation2] sm:$0xff] %v583
        %592 = vst [vmem:[#allocation2 + $0x8] sm:$0xff] %v584
        %593 = vst [vmem:[#allocation2 + $0x10] sm:$0xff] %v585
        %594 = vst [vmem:[#allocation2 + $0x18] sm:$0xff] %v586
        %595 = vst [vmem:[#allocation2 + $0x20] sm:$0xff] %v587
        %596 = vst [vmem:[#allocation2 + $0x28] sm:$0xff] %v588
        %597 = vst [vmem:[#allocation2 + $0x30] sm:$0xff] %v589
        %598 = vst [vmem:[#allocation2 + $0x38] sm:$0xff] %v590
        %v599 = vld [vmem:[#allocation2] sm:$0xff]
        %v601 = vcombine.high %v599, %v599
        %v603 = vunpack.c.l.s4 1966171168
        %v604 = vunpack.c.0.s8 %v603
        %v605 = vlaneseq
        %v606 = vshrl.u32 %v605, 7
        %v607 = vsub.s32 %v604, %v606
        %v608 = vrot.slane %v599, %v607
        %v610 = vunpack.c.l.s4 1966171168
        %v611 = vunpack.c.0.s8 %v610
        %v612 = vlaneseq
        %v613 = vshrl.u32 %v612, 7
        %v614 = vsub.s32 %v611, %v613
        %v615 = vrot.slane %v601, %v614
        %v616 = vcombine.high %v608, %v608
        %v617 = vcombine.high %v615, %v615
        %v619 = vunpack.c.l.s4 1966171168
        %v620 = vunpack.c.0.s8 %v619
        %v621 = vlaneseq
        %v622 = vshrl.u32 %v621, 7
        %v623 = vsub.s32 %v620, %v622
        %v624 = vrot.slane %v608, %v623
        %v626 = vunpack.c.l.s4 1966171168
        %v627 = vunpack.c.0.s8 %v626
        %v628 = vlaneseq
        %v629 = vshrl.u32 %v628, 7
        %v630 = vsub.s32 %v627, %v629
        %v631 = vrot.slane %v615, %v630
        %v633 = vunpack.c.l.s4 1966171168
        %v634 = vunpack.c.0.s8 %v633
        %v635 = vlaneseq
        %v636 = vshrl.u32 %v635, 7
        %v637 = vsub.s32 %v634, %v636
        %v638 = vrot.slane %v616, %v637
        %v640 = vunpack.c.l.s4 1966171168
        %v641 = vunpack.c.0.s8 %v640
        %v642 = vlaneseq
        %v643 = vshrl.u32 %v642, 7
        %v644 = vsub.s32 %v641, %v643
        %v645 = vrot.slane %v617, %v644
        %v646 = vcombine.high %v624, %v624
        %v647 = vcombine.high %v631, %v631
        %v648 = vcombine.high %v638, %v638
        %v649 = vcombine.high %v645, %v645
        %v650 = vlaneseq
        %v651 = vshrl.u32 %v650, 7
        %v652 = vsub.s32 0, %v651
        %v653 = vrot.slane %v624, %v652
        %v654 = vlaneseq
        %v655 = vshrl.u32 %v654, 7
        %v656 = vsub.s32 0, %v655
        %v657 = vrot.slane %v638, %v656
        %v658 = vlaneseq
        %v659 = vshrl.u32 %v658, 7
        %v660 = vsub.s32 0, %v659
        %v661 = vrot.slane %v646, %v660
        %v662 = vlaneseq
        %v663 = vshrl.u32 %v662, 7
        %v664 = vsub.s32 0, %v663
        %v665 = vrot.slane %v648, %v664
        %v666 = vlaneseq
        %v667 = vshrl.u32 %v666, 7
        %v668 = vsub.s32 0, %v667
        %v669 = vrot.slane %v631, %v668
        %v670 = vlaneseq
        %v671 = vshrl.u32 %v670, 7
        %v672 = vsub.s32 0, %v671
        %v673 = vrot.slane %v645, %v672
        %v674 = vlaneseq
        %v675 = vshrl.u32 %v674, 7
        %v676 = vsub.s32 0, %v675
        %v677 = vrot.slane %v647, %v676
        %v678 = vlaneseq
        %v679 = vshrl.u32 %v678, 7
        %v680 = vsub.s32 0, %v679
        %v681 = vrot.slane %v649, %v680
        %v690 = vadd.f32 %v485, %v653
        %v691 = vadd.f32 %v486, %v653
        %v692 = vadd.f32 %v485, %v657
        %v693 = vadd.f32 %v486, %v657
        %v694 = vadd.f32 %v485, %v661
        %v695 = vadd.f32 %v486, %v661
        %v696 = vadd.f32 %v485, %v665
        %v697 = vadd.f32 %v486, %v665
        %v698 = vadd.f32 %v485, %v669
        %v699 = vadd.f32 %v486, %v669
        %v700 = vadd.f32 %v485, %v673
        %v701 = vadd.f32 %v486, %v673
        %v702 = vadd.f32 %v485, %v677
        %v703 = vadd.f32 %v486, %v677
        %v704 = vadd.f32 %v485, %v681
        %v705 = vadd.f32 %v486, %v681
        %v706 = vmul.f32 %v690, 0.01
        %v707 = vmul.f32 %v691, 0.01
        %v708 = vmul.f32 %v692, 0.01
        %v709 = vmul.f32 %v693, 0.01
        %v710 = vmul.f32 %v694, 0.01
        %v711 = vmul.f32 %v695, 0.01
        %v712 = vmul.f32 %v696, 0.01
        %v713 = vmul.f32 %v697, 0.01
        %v714 = vmul.f32 %v698, 0.01
        %v715 = vmul.f32 %v699, 0.01
        %v716 = vmul.f32 %v700, 0.01
        %v717 = vmul.f32 %v701, 0.01
        %v718 = vmul.f32 %v702, 0.01
        %v719 = vmul.f32 %v703, 0.01
        %v720 = vmul.f32 %v704, 0.01
        %v721 = vmul.f32 %v705, 0.01
        %v722 = vmax.f32 %v690, %v706
        %v723 = vmax.f32 %v691, %v707
        %v724 = vmax.f32 %v692, %v708
        %v725 = vmax.f32 %v693, %v709
        %v726 = vmax.f32 %v694, %v710
        %v727 = vmax.f32 %v695, %v711
        %v728 = vmax.f32 %v696, %v712
        %v729 = vmax.f32 %v697, %v713
        %v730 = vmax.f32 %v698, %v714
        %v731 = vmax.f32 %v699, %v715
        %v732 = vmax.f32 %v700, %v716
        %v733 = vmax.f32 %v701, %v717
        %v734 = vmax.f32 %v702, %v718
        %v735 = vmax.f32 %v703, %v719
        %v736 = vmax.f32 %v704, %v720
        %v737 = vmax.f32 %v705, %v721
        %v738 = vlaneseq
        %v739 = vshrl.u32 %v738, 7
        %v740 = vsub.s32 1, %v739
        %v741 = vrot.slane %v220, %v740
        %742 = vmatprep.subr.mxu0 0.0
        %743 = vmatpush1.msra.mxu0 %v236
        %744 = vmatprep.subr.mxu0 0.0
        %745 = vmatpush1.msra.mxu0 %v235
        %746 = vmatprep.subr.mxu0 0.0
        %747 = vmatpush1.msra.mxu0 %v234
        %748 = vmatprep.subr.mxu0 0.0
        %749 = vmatpush1.msra.mxu0 %v233
        %750 = vmatprep.subr.mxu0 0.0
        %751 = vmatpush1.msra.mxu0 %v232
        %752 = vmatprep.subr.mxu0 0.0
        %753 = vmatpush1.msra.mxu0 %v231
        %754 = vmatprep.subr.mxu0 0.0
        %755 = vmatpush1.msra.mxu0 %v230
        %756 = vmatprep.subr.mxu0 0.0
        %757 = vmatpush1.msra.mxu0 %v229
        %758 = vmatprep.subr.mxu0 0.0
        %759 = vmatpush1.msra.mxu0 %v228
        %760 = vmatprep.subr.mxu0 0.0
        %761 = vmatpush1.msra.mxu0 %v227
        %762 = vmatprep.subr.mxu0 0.0
        %763 = vmatpush1.msra.mxu0 %v226
        %764 = vmatprep.subr.mxu0 0.0
        %765 = vmatpush1.msra.mxu0 %v225
        %766 = vmatprep.subr.mxu0 0.0
        %767 = vmatpush1.msra.mxu0 %v224
        %768 = vmatprep.subr.mxu0 0.0
        %769 = vmatpush1.msra.mxu0 %v223
        %770 = vmatprep.subr.mxu0 0.0
        %771 = vmatpush1.msra.mxu0 %v222
        %772 = vmatprep.subr.mxu0 0.0
        %773 = vmatpush1.msra.mxu0 %v221
        %774 = vmatprep.subr.mxu0 0.0
        %775 = vmatpush2.msra.mxu0 0.0
        %776 = vmatprep.subr.mxu0 0.0
        %777 = vmatpush2.msra.mxu0 0.0
        %778 = vmatprep.subr.mxu0 0.0
        %779 = vmatpush2.msra.mxu0 0.0
        %780 = vmatprep.subr.mxu0 0.0
        %781 = vmatpush2.msra.mxu0 0.0
        %782 = vmatprep.subr.mxu0 0.0
        %783 = vmatpush2.msra.mxu0 0.0
        %784 = vmatprep.subr.mxu0 0.0
        %785 = vmatpush2.msra.mxu0 0.0
        %786 = vmatprep.subr.mxu0 0.0
        %787 = vmatpush2.msra.mxu0 0.0
        %788 = vmatprep.subr.mxu0 0.0
        %789 = vmatpush2.msra.mxu0 0.0
        %790 = vmatprep.subr.mxu0 0.0
        %791 = vmatpush2.msra.mxu0 0.0
        %792 = vmatprep.subr.mxu0 0.0
        %793 = vmatpush2.msra.mxu0 0.0
        %794 = vmatprep.subr.mxu0 0.0
        %795 = vmatpush2.msra.mxu0 0.0
        %796 = vmatprep.subr.mxu0 0.0
        %797 = vmatpush2.msra.mxu0 0.0
        %798 = vmatprep.subr.mxu0 0.0
        %799 = vmatpush2.msra.mxu0 0.0
        %800 = vmatprep.subr.mxu0 0.0
        %801 = vmatpush2.msra.mxu0 0.0
        %802 = vmatprep.subr.mxu0 0.0
        %803 = vmatpush2.msra.mxu0 0.0
        %804 = vmatprep.subr.mxu0 0.0
        %805 = vmatpush2.msra.mxu0 0.0
        %806 = vmatprep.mubr.f32.mxu0 0.0
        %807 = vmatmul.mubr.f32.gmra.mxu0 %v722
        %v808 = vpop.f32.mrf.mxu0
        %v809 = vadd.f32 %v741, %v808
        %v810 = vpop.f32.mrf.mxu0
        %811 = vmatprep.mubr.f32.mxu0 0.0
        %812 = vmatmul.mubr.f32.gmra.mxu0 %v723
        %v813 = vpop.f32.mrf.mxu0
        %v814 = vadd.f32 %v741, %v813
        %v815 = vpop.f32.mrf.mxu0
        %816 = vmatprep.mubr.f32.mxu0 0.0
        %817 = vmatmul.mubr.f32.gmra.mxu0 %v724
        %v818 = vpop.f32.mrf.mxu0
        %v819 = vadd.f32 %v741, %v818
        %v820 = vpop.f32.mrf.mxu0
        %821 = vmatprep.mubr.f32.mxu0 0.0
        %822 = vmatmul.mubr.f32.gmra.mxu0 %v725
        %v823 = vpop.f32.mrf.mxu0
        %v824 = vadd.f32 %v741, %v823
        %v825 = vpop.f32.mrf.mxu0
        %826 = vmatprep.mubr.f32.mxu0 0.0
        %827 = vmatmul.mubr.f32.gmra.mxu0 %v726
        %v828 = vpop.f32.mrf.mxu0
        %v829 = vadd.f32 %v741, %v828
        %v830 = vpop.f32.mrf.mxu0
        %831 = vmatprep.mubr.f32.mxu0 0.0
        %832 = vmatmul.mubr.f32.gmra.mxu0 %v727
        %v833 = vpop.f32.mrf.mxu0
        %v834 = vadd.f32 %v741, %v833
        %v835 = vpop.f32.mrf.mxu0
        %836 = vmatprep.mubr.f32.mxu0 0.0
        %837 = vmatmul.mubr.f32.gmra.mxu0 %v728
        %v838 = vpop.f32.mrf.mxu0
        %v839 = vadd.f32 %v741, %v838
        %v840 = vpop.f32.mrf.mxu0
        %841 = vmatprep.mubr.f32.mxu0 0.0
        %842 = vmatmul.mubr.f32.gmra.mxu0 %v729
        %v843 = vpop.f32.mrf.mxu0
        %v844 = vadd.f32 %v741, %v843
        %v845 = vpop.f32.mrf.mxu0
        %846 = vmatprep.mubr.f32.mxu0 0.0
        %847 = vmatmul.mubr.f32.gmra.mxu0 %v730
        %v848 = vpop.f32.mrf.mxu0
        %v849 = vadd.f32 %v741, %v848
        %v850 = vpop.f32.mrf.mxu0
        %851 = vmatprep.mubr.f32.mxu0 0.0
        %852 = vmatmul.mubr.f32.gmra.mxu0 %v731
        %v853 = vpop.f32.mrf.mxu0
        %v854 = vadd.f32 %v741, %v853
        %v855 = vpop.f32.mrf.mxu0
        %856 = vmatprep.mubr.f32.mxu0 0.0
        %857 = vmatmul.mubr.f32.gmra.mxu0 %v732
        %v858 = vpop.f32.mrf.mxu0
        %v859 = vadd.f32 %v741, %v858
        %v860 = vpop.f32.mrf.mxu0
        %861 = vmatprep.mubr.f32.mxu0 0.0
        %862 = vmatmul.mubr.f32.gmra.mxu0 %v733
        %v863 = vpop.f32.mrf.mxu0
        %v864 = vadd.f32 %v741, %v863
        %v865 = vpop.f32.mrf.mxu0
        %866 = vmatprep.mubr.f32.mxu0 0.0
        %867 = vmatmul.mubr.f32.gmra.mxu0 %v734
        %v868 = vpop.f32.mrf.mxu0
        %v869 = vadd.f32 %v741, %v868
        %v870 = vpop.f32.mrf.mxu0
        %871 = vmatprep.mubr.f32.mxu0 0.0
        %872 = vmatmul.mubr.f32.gmra.mxu0 %v735
        %v873 = vpop.f32.mrf.mxu0
        %v874 = vadd.f32 %v741, %v873
        %v875 = vpop.f32.mrf.mxu0
        %876 = vmatprep.mubr.f32.mxu0 0.0
        %877 = vmatmul.mubr.f32.gmra.mxu0 %v736
        %v878 = vpop.f32.mrf.mxu0
        %v879 = vadd.f32 %v741, %v878
        %v880 = vpop.f32.mrf.mxu0
        %881 = vmatprep.mubr.f32.mxu0 0.0
        %882 = vmatmul.mubr.f32.gmra.mxu0 %v737
        %v883 = vpop.f32.mrf.mxu0
        %v884 = vadd.f32 %v741, %v883
        %v885 = vpop.f32.mrf.mxu0
        %886 = vdwg.mxu0
        %v887 = vmul.f32 %v809, 0.01
        %v888 = vmul.f32 %v814, 0.01
        %v889 = vmul.f32 %v819, 0.01
        %v890 = vmul.f32 %v824, 0.01
        %v891 = vmul.f32 %v829, 0.01
        %v892 = vmul.f32 %v834, 0.01
        %v893 = vmul.f32 %v839, 0.01
        %v894 = vmul.f32 %v844, 0.01
        %v895 = vmul.f32 %v849, 0.01
        %v896 = vmul.f32 %v854, 0.01
        %v897 = vmul.f32 %v859, 0.01
        %v898 = vmul.f32 %v864, 0.01
        %v899 = vmul.f32 %v869, 0.01
        %v900 = vmul.f32 %v874, 0.01
        %v901 = vmul.f32 %v879, 0.01
        %v902 = vmul.f32 %v884, 0.01
        %v903 = vmax.f32 %v809, %v887
        %v904 = vmax.f32 %v814, %v888
        %v905 = vmax.f32 %v819, %v889
        %v906 = vmax.f32 %v824, %v890
        %v907 = vmax.f32 %v829, %v891
        %v908 = vmax.f32 %v834, %v892
        %v909 = vmax.f32 %v839, %v893
        %v910 = vmax.f32 %v844, %v894
        %v911 = vmax.f32 %v849, %v895
        %v912 = vmax.f32 %v854, %v896
        %v913 = vmax.f32 %v859, %v897
        %v914 = vmax.f32 %v864, %v898
        %v915 = vmax.f32 %v869, %v899
        %v916 = vmax.f32 %v874, %v900
        %v917 = vmax.f32 %v879, %v901
        %v918 = vmax.f32 %v884, %v902
        %v919 = vadd.f32 %v903, %v904
        %v920 = vadd.f32 %v919, %v905
        %v921 = vadd.f32 %v920, %v906
        %v922 = vadd.f32 %v921, %v907
        %v923 = vadd.f32 %v922, %v908
        %v924 = vadd.f32 %v923, %v909
        %v925 = vadd.f32 %v924, %v910
        %v926 = vadd.f32 %v925, %v911
        %v927 = vadd.f32 %v926, %v912
        %v928 = vadd.f32 %v927, %v913
        %v929 = vadd.f32 %v928, %v914
        %v930 = vadd.f32 %v929, %v915
        %v931 = vadd.f32 %v930, %v916
        %v932 = vadd.f32 %v931, %v917
        %v933 = vadd.f32 %v932, %v918
        %v934 = vrot.slane %v933, 4
        %v935 = vadd.f32 %v933, %v934
        %v936 = vrot.slane %v935, 2
        %v937 = vadd.f32 %v935, %v936
        %v938 = vrot.slane %v937, 1
        %v939 = vadd.f32 %v937, %v938
        %v940 = vadd.f32 %v939, 0.0
        %s941 = scalar_lea.vmem [#allocation2], 8
        %v942 = vld [vmem:[%s941] sm:$0xff]
        %v944 = vcombine.high %v942, %v942
        %v946 = vunpack.c.l.s4 1966171168
        %v947 = vunpack.c.0.s8 %v946
        %v948 = vlaneseq
        %v949 = vshrl.u32 %v948, 7
        %v950 = vsub.s32 %v947, %v949
        %v951 = vrot.slane %v942, %v950
        %v953 = vunpack.c.l.s4 1966171168
        %v954 = vunpack.c.0.s8 %v953
        %v955 = vlaneseq
        %v956 = vshrl.u32 %v955, 7
        %v957 = vsub.s32 %v954, %v956
        %v958 = vrot.slane %v944, %v957
        %v959 = vcombine.high %v951, %v951
        %v960 = vcombine.high %v958, %v958
        %v962 = vunpack.c.l.s4 1966171168
        %v963 = vunpack.c.0.s8 %v962
        %v964 = vlaneseq
        %v965 = vshrl.u32 %v964, 7
        %v966 = vsub.s32 %v963, %v965
        %v967 = vrot.slane %v951, %v966
        %v969 = vunpack.c.l.s4 1966171168
        %v970 = vunpack.c.0.s8 %v969
        %v971 = vlaneseq
        %v972 = vshrl.u32 %v971, 7
        %v973 = vsub.s32 %v970, %v972
        %v974 = vrot.slane %v958, %v973
        %v976 = vunpack.c.l.s4 1966171168
        %v977 = vunpack.c.0.s8 %v976
        %v978 = vlaneseq
        %v979 = vshrl.u32 %v978, 7
        %v980 = vsub.s32 %v977, %v979
        %v981 = vrot.slane %v959, %v980
        %v983 = vunpack.c.l.s4 1966171168
        %v984 = vunpack.c.0.s8 %v983
        %v985 = vlaneseq
        %v986 = vshrl.u32 %v985, 7
        %v987 = vsub.s32 %v984, %v986
        %v988 = vrot.slane %v960, %v987
        %v989 = vcombine.high %v967, %v967
        %v990 = vcombine.high %v974, %v974
        %v991 = vcombine.high %v981, %v981
        %v992 = vcombine.high %v988, %v988
        %v993 = vlaneseq
        %v994 = vshrl.u32 %v993, 7
        %v995 = vsub.s32 0, %v994
        %v996 = vrot.slane %v967, %v995
        %v997 = vlaneseq
        %v998 = vshrl.u32 %v997, 7
        %v999 = vsub.s32 0, %v998
        %v1000 = vrot.slane %v981, %v999
        %v1001 = vlaneseq
        %v1002 = vshrl.u32 %v1001, 7
        %v1003 = vsub.s32 0, %v1002
        %v1004 = vrot.slane %v989, %v1003
        %v1005 = vlaneseq
        %v1006 = vshrl.u32 %v1005, 7
        %v1007 = vsub.s32 0, %v1006
        %v1008 = vrot.slane %v991, %v1007
        %v1009 = vlaneseq
        %v1010 = vshrl.u32 %v1009, 7
        %v1011 = vsub.s32 0, %v1010
        %v1012 = vrot.slane %v974, %v1011
        %v1013 = vlaneseq
        %v1014 = vshrl.u32 %v1013, 7
        %v1015 = vsub.s32 0, %v1014
        %v1016 = vrot.slane %v988, %v1015
        %v1017 = vlaneseq
        %v1018 = vshrl.u32 %v1017, 7
        %v1019 = vsub.s32 0, %v1018
        %v1020 = vrot.slane %v990, %v1019
        %v1021 = vlaneseq
        %v1022 = vshrl.u32 %v1021, 7
        %v1023 = vsub.s32 0, %v1022
        %v1024 = vrot.slane %v992, %v1023
        %v1033 = vadd.f32 %v485, %v996
        %v1034 = vadd.f32 %v486, %v996
        %v1035 = vadd.f32 %v485, %v1000
        %v1036 = vadd.f32 %v486, %v1000
        %v1037 = vadd.f32 %v485, %v1004
        %v1038 = vadd.f32 %v486, %v1004
        %v1039 = vadd.f32 %v485, %v1008
        %v1040 = vadd.f32 %v486, %v1008
        %v1041 = vadd.f32 %v485, %v1012
        %v1042 = vadd.f32 %v486, %v1012
        %v1043 = vadd.f32 %v485, %v1016
        %v1044 = vadd.f32 %v486, %v1016
        %v1045 = vadd.f32 %v485, %v1020
        %v1046 = vadd.f32 %v486, %v1020
        %v1047 = vadd.f32 %v485, %v1024
        %v1048 = vadd.f32 %v486, %v1024
        %v1049 = vmul.f32 %v1033, 0.01
        %v1050 = vmul.f32 %v1034, 0.01
        %v1051 = vmul.f32 %v1035, 0.01
        %v1052 = vmul.f32 %v1036, 0.01
        %v1053 = vmul.f32 %v1037, 0.01
        %v1054 = vmul.f32 %v1038, 0.01
        %v1055 = vmul.f32 %v1039, 0.01
        %v1056 = vmul.f32 %v1040, 0.01
        %v1057 = vmul.f32 %v1041, 0.01
        %v1058 = vmul.f32 %v1042, 0.01
        %v1059 = vmul.f32 %v1043, 0.01
        %v1060 = vmul.f32 %v1044, 0.01
        %v1061 = vmul.f32 %v1045, 0.01
        %v1062 = vmul.f32 %v1046, 0.01
        %v1063 = vmul.f32 %v1047, 0.01
        %v1064 = vmul.f32 %v1048, 0.01
        %v1065 = vmax.f32 %v1033, %v1049
        %v1066 = vmax.f32 %v1034, %v1050
        %v1067 = vmax.f32 %v1035, %v1051
        %v1068 = vmax.f32 %v1036, %v1052
        %v1069 = vmax.f32 %v1037, %v1053
        %v1070 = vmax.f32 %v1038, %v1054
        %v1071 = vmax.f32 %v1039, %v1055
        %v1072 = vmax.f32 %v1040, %v1056
        %v1073 = vmax.f32 %v1041, %v1057
        %v1074 = vmax.f32 %v1042, %v1058
        %v1075 = vmax.f32 %v1043, %v1059
        %v1076 = vmax.f32 %v1044, %v1060
        %v1077 = vmax.f32 %v1045, %v1061
        %v1078 = vmax.f32 %v1046, %v1062
        %v1079 = vmax.f32 %v1047, %v1063
        %v1080 = vmax.f32 %v1048, %v1064
        %1081 = vmatprep.subr.mxu0 0.0
        %1082 = vmatpush1.msra.mxu0 %v236
        %1083 = vmatprep.subr.mxu0 0.0
        %1084 = vmatpush1.msra.mxu0 %v235
        %1085 = vmatprep.subr.mxu0 0.0
        %1086 = vmatpush1.msra.mxu0 %v234
        %1087 = vmatprep.subr.mxu0 0.0
        %1088 = vmatpush1.msra.mxu0 %v233
        %1089 = vmatprep.subr.mxu0 0.0
        %1090 = vmatpush1.msra.mxu0 %v232
        %1091 = vmatprep.subr.mxu0 0.0
        %1092 = vmatpush1.msra.mxu0 %v231
        %1093 = vmatprep.subr.mxu0 0.0
        %1094 = vmatpush1.msra.mxu0 %v230
        %1095 = vmatprep.subr.mxu0 0.0
        %1096 = vmatpush1.msra.mxu0 %v229
        %1097 = vmatprep.subr.mxu0 0.0
        %1098 = vmatpush1.msra.mxu0 %v228
        %1099 = vmatprep.subr.mxu0 0.0
        %1100 = vmatpush1.msra.mxu0 %v227
        %1101 = vmatprep.subr.mxu0 0.0
        %1102 = vmatpush1.msra.mxu0 %v226
        %1103 = vmatprep.subr.mxu0 0.0
        %1104 = vmatpush1.msra.mxu0 %v225
        %1105 = vmatprep.subr.mxu0 0.0
        %1106 = vmatpush1.msra.mxu0 %v224
        %1107 = vmatprep.subr.mxu0 0.0
        %1108 = vmatpush1.msra.mxu0 %v223
        %1109 = vmatprep.subr.mxu0 0.0
        %1110 = vmatpush1.msra.mxu0 %v222
        %1111 = vmatprep.subr.mxu0 0.0
        %1112 = vmatpush1.msra.mxu0 %v221
        %1113 = vmatprep.subr.mxu0 0.0
        %1114 = vmatpush2.msra.mxu0 0.0
        %1115 = vmatprep.subr.mxu0 0.0
        %1116 = vmatpush2.msra.mxu0 0.0
        %1117 = vmatprep.subr.mxu0 0.0
        %1118 = vmatpush2.msra.mxu0 0.0
        %1119 = vmatprep.subr.mxu0 0.0
        %1120 = vmatpush2.msra.mxu0 0.0
        %1121 = vmatprep.subr.mxu0 0.0
        %1122 = vmatpush2.msra.mxu0 0.0
        %1123 = vmatprep.subr.mxu0 0.0
        %1124 = vmatpush2.msra.mxu0 0.0
        %1125 = vmatprep.subr.mxu0 0.0
        %1126 = vmatpush2.msra.mxu0 0.0
        %1127 = vmatprep.subr.mxu0 0.0
        %1128 = vmatpush2.msra.mxu0 0.0
        %1129 = vmatprep.subr.mxu0 0.0
        %1130 = vmatpush2.msra.mxu0 0.0
        %1131 = vmatprep.subr.mxu0 0.0
        %1132 = vmatpush2.msra.mxu0 0.0
        %1133 = vmatprep.subr.mxu0 0.0
        %1134 = vmatpush2.msra.mxu0 0.0
        %1135 = vmatprep.subr.mxu0 0.0
        %1136 = vmatpush2.msra.mxu0 0.0
        %1137 = vmatprep.subr.mxu0 0.0
        %1138 = vmatpush2.msra.mxu0 0.0
        %1139 = vmatprep.subr.mxu0 0.0
        %1140 = vmatpush2.msra.mxu0 0.0
        %1141 = vmatprep.subr.mxu0 0.0
        %1142 = vmatpush2.msra.mxu0 0.0
        %1143 = vmatprep.subr.mxu0 0.0
        %1144 = vmatpush2.msra.mxu0 0.0
        %1145 = vmatprep.mubr.f32.mxu0 0.0
        %1146 = vmatmul.mubr.f32.gmra.mxu0 %v1065
        %v1147 = vpop.f32.mrf.mxu0
        %v1148 = vadd.f32 %v741, %v1147
        %v1149 = vpop.f32.mrf.mxu0
        %1150 = vmatprep.mubr.f32.mxu0 0.0
        %1151 = vmatmul.mubr.f32.gmra.mxu0 %v1066
        %v1152 = vpop.f32.mrf.mxu0
        %v1153 = vadd.f32 %v741, %v1152
        %v1154 = vpop.f32.mrf.mxu0
        %1155 = vmatprep.mubr.f32.mxu0 0.0
        %1156 = vmatmul.mubr.f32.gmra.mxu0 %v1067
        %v1157 = vpop.f32.mrf.mxu0
        %v1158 = vadd.f32 %v741, %v1157
        %v1159 = vpop.f32.mrf.mxu0
        %1160 = vmatprep.mubr.f32.mxu0 0.0
        %1161 = vmatmul.mubr.f32.gmra.mxu0 %v1068
        %v1162 = vpop.f32.mrf.mxu0
        %v1163 = vadd.f32 %v741, %v1162
        %v1164 = vpop.f32.mrf.mxu0
        %1165 = vmatprep.mubr.f32.mxu0 0.0
        %1166 = vmatmul.mubr.f32.gmra.mxu0 %v1069
        %v1167 = vpop.f32.mrf.mxu0
        %v1168 = vadd.f32 %v741, %v1167
        %v1169 = vpop.f32.mrf.mxu0
        %1170 = vmatprep.mubr.f32.mxu0 0.0
        %1171 = vmatmul.mubr.f32.gmra.mxu0 %v1070
        %v1172 = vpop.f32.mrf.mxu0
        %v1173 = vadd.f32 %v741, %v1172
        %v1174 = vpop.f32.mrf.mxu0
        %1175 = vmatprep.mubr.f32.mxu0 0.0
        %1176 = vmatmul.mubr.f32.gmra.mxu0 %v1071
        %v1177 = vpop.f32.mrf.mxu0
        %v1178 = vadd.f32 %v741, %v1177
        %v1179 = vpop.f32.mrf.mxu0
        %1180 = vmatprep.mubr.f32.mxu0 0.0
        %1181 = vmatmul.mubr.f32.gmra.mxu0 %v1072
        %v1182 = vpop.f32.mrf.mxu0
        %v1183 = vadd.f32 %v741, %v1182
        %v1184 = vpop.f32.mrf.mxu0
        %1185 = vmatprep.mubr.f32.mxu0 0.0
        %1186 = vmatmul.mubr.f32.gmra.mxu0 %v1073
        %v1187 = vpop.f32.mrf.mxu0
        %v1188 = vadd.f32 %v741, %v1187
        %v1189 = vpop.f32.mrf.mxu0
        %1190 = vmatprep.mubr.f32.mxu0 0.0
        %1191 = vmatmul.mubr.f32.gmra.mxu0 %v1074
        %v1192 = vpop.f32.mrf.mxu0
        %v1193 = vadd.f32 %v741, %v1192
        %v1194 = vpop.f32.mrf.mxu0
        %1195 = vmatprep.mubr.f32.mxu0 0.0
        %1196 = vmatmul.mubr.f32.gmra.mxu0 %v1075
        %v1197 = vpop.f32.mrf.mxu0
        %v1198 = vadd.f32 %v741, %v1197
        %v1199 = vpop.f32.mrf.mxu0
        %1200 = vmatprep.mubr.f32.mxu0 0.0
        %1201 = vmatmul.mubr.f32.gmra.mxu0 %v1076
        %v1202 = vpop.f32.mrf.mxu0
        %v1203 = vadd.f32 %v741, %v1202
        %v1204 = vpop.f32.mrf.mxu0
        %1205 = vmatprep.mubr.f32.mxu0 0.0
        %1206 = vmatmul.mubr.f32.gmra.mxu0 %v1077
        %v1207 = vpop.f32.mrf.mxu0
        %v1208 = vadd.f32 %v741, %v1207
        %v1209 = vpop.f32.mrf.mxu0
        %1210 = vmatprep.mubr.f32.mxu0 0.0
        %1211 = vmatmul.mubr.f32.gmra.mxu0 %v1078
        %v1212 = vpop.f32.mrf.mxu0
        %v1213 = vadd.f32 %v741, %v1212
        %v1214 = vpop.f32.mrf.mxu0
        %1215 = vmatprep.mubr.f32.mxu0 0.0
        %1216 = vmatmul.mubr.f32.gmra.mxu0 %v1079
        %v1217 = vpop.f32.mrf.mxu0
        %v1218 = vadd.f32 %v741, %v1217
        %v1219 = vpop.f32.mrf.mxu0
        %1220 = vmatprep.mubr.f32.mxu0 0.0
        %1221 = vmatmul.mubr.f32.gmra.mxu0 %v1080
        %v1222 = vpop.f32.mrf.mxu0
        %v1223 = vadd.f32 %v741, %v1222
        %v1224 = vpop.f32.mrf.mxu0
        %1225 = vdwg.mxu0
        %v1226 = vmul.f32 %v1148, 0.01
        %v1227 = vmul.f32 %v1153, 0.01
        %v1228 = vmul.f32 %v1158, 0.01
        %v1229 = vmul.f32 %v1163, 0.01
        %v1230 = vmul.f32 %v1168, 0.01
        %v1231 = vmul.f32 %v1173, 0.01
        %v1232 = vmul.f32 %v1178, 0.01
        %v1233 = vmul.f32 %v1183, 0.01
        %v1234 = vmul.f32 %v1188, 0.01
        %v1235 = vmul.f32 %v1193, 0.01
        %v1236 = vmul.f32 %v1198, 0.01
        %v1237 = vmul.f32 %v1203, 0.01
        %v1238 = vmul.f32 %v1208, 0.01
        %v1239 = vmul.f32 %v1213, 0.01
        %v1240 = vmul.f32 %v1218, 0.01
        %v1241 = vmul.f32 %v1223, 0.01
        %v1242 = vmax.f32 %v1148, %v1226
        %v1243 = vmax.f32 %v1153, %v1227
        %v1244 = vmax.f32 %v1158, %v1228
        %v1245 = vmax.f32 %v1163, %v1229
        %v1246 = vmax.f32 %v1168, %v1230
        %v1247 = vmax.f32 %v1173, %v1231
        %v1248 = vmax.f32 %v1178, %v1232
        %v1249 = vmax.f32 %v1183, %v1233
        %v1250 = vmax.f32 %v1188, %v1234
        %v1251 = vmax.f32 %v1193, %v1235
        %v1252 = vmax.f32 %v1198, %v1236
        %v1253 = vmax.f32 %v1203, %v1237
        %v1254 = vmax.f32 %v1208, %v1238
        %v1255 = vmax.f32 %v1213, %v1239
        %v1256 = vmax.f32 %v1218, %v1240
        %v1257 = vmax.f32 %v1223, %v1241
        %v1258 = vadd.f32 %v1242, %v1243
        %v1259 = vadd.f32 %v1258, %v1244
        %v1260 = vadd.f32 %v1259, %v1245
        %v1261 = vadd.f32 %v1260, %v1246
        %v1262 = vadd.f32 %v1261, %v1247
        %v1263 = vadd.f32 %v1262, %v1248
        %v1264 = vadd.f32 %v1263, %v1249
        %v1265 = vadd.f32 %v1264, %v1250
        %v1266 = vadd.f32 %v1265, %v1251
        %v1267 = vadd.f32 %v1266, %v1252
        %v1268 = vadd.f32 %v1267, %v1253
        %v1269 = vadd.f32 %v1268, %v1254
        %v1270 = vadd.f32 %v1269, %v1255
        %v1271 = vadd.f32 %v1270, %v1256
        %v1272 = vadd.f32 %v1271, %v1257
        %v1273 = vrot.slane %v1272, 4
        %v1274 = vadd.f32 %v1272, %v1273
        %v1275 = vrot.slane %v1274, 2
        %v1276 = vadd.f32 %v1274, %v1275
        %v1277 = vrot.slane %v1276, 1
        %v1278 = vadd.f32 %v1276, %v1277
        %v1279 = vadd.f32 %v940, %v1278
        %s1280 = scalar_lea.vmem [#allocation2], 16
        %v1281 = vld [vmem:[%s1280] sm:$0xff]
        %v1283 = vcombine.high %v1281, %v1281
        %v1285 = vunpack.c.l.s4 1966171168
        %v1286 = vunpack.c.0.s8 %v1285
        %v1287 = vlaneseq
        %v1288 = vshrl.u32 %v1287, 7
        %v1289 = vsub.s32 %v1286, %v1288
        %v1290 = vrot.slane %v1281, %v1289
        %v1292 = vunpack.c.l.s4 1966171168
        %v1293 = vunpack.c.0.s8 %v1292
        %v1294 = vlaneseq
        %v1295 = vshrl.u32 %v1294, 7
        %v1296 = vsub.s32 %v1293, %v1295
        %v1297 = vrot.slane %v1283, %v1296
        %v1298 = vcombine.high %v1290, %v1290
        %v1299 = vcombine.high %v1297, %v1297
        %v1301 = vunpack.c.l.s4 1966171168
        %v1302 = vunpack.c.0.s8 %v1301
        %v1303 = vlaneseq
        %v1304 = vshrl.u32 %v1303, 7
        %v1305 = vsub.s32 %v1302, %v1304
        %v1306 = vrot.slane %v1290, %v1305
        %v1308 = vunpack.c.l.s4 1966171168
        %v1309 = vunpack.c.0.s8 %v1308
        %v1310 = vlaneseq
        %v1311 = vshrl.u32 %v1310, 7
        %v1312 = vsub.s32 %v1309, %v1311
        %v1313 = vrot.slane %v1297, %v1312
        %v1315 = vunpack.c.l.s4 1966171168
        %v1316 = vunpack.c.0.s8 %v1315
        %v1317 = vlaneseq
        %v1318 = vshrl.u32 %v1317, 7
        %v1319 = vsub.s32 %v1316, %v1318
        %v1320 = vrot.slane %v1298, %v1319
        %v1322 = vunpack.c.l.s4 1966171168
        %v1323 = vunpack.c.0.s8 %v1322
        %v1324 = vlaneseq
        %v1325 = vshrl.u32 %v1324, 7
        %v1326 = vsub.s32 %v1323, %v1325
        %v1327 = vrot.slane %v1299, %v1326
        %v1328 = vcombine.high %v1306, %v1306
        %v1329 = vcombine.high %v1313, %v1313
        %v1330 = vcombine.high %v1320, %v1320
        %v1331 = vcombine.high %v1327, %v1327
        %v1332 = vlaneseq
        %v1333 = vshrl.u32 %v1332, 7
        %v1334 = vsub.s32 0, %v1333
        %v1335 = vrot.slane %v1306, %v1334
        %v1336 = vlaneseq
        %v1337 = vshrl.u32 %v1336, 7
        %v1338 = vsub.s32 0, %v1337
        %v1339 = vrot.slane %v1320, %v1338
        %v1340 = vlaneseq
        %v1341 = vshrl.u32 %v1340, 7
        %v1342 = vsub.s32 0, %v1341
        %v1343 = vrot.slane %v1328, %v1342
        %v1344 = vlaneseq
        %v1345 = vshrl.u32 %v1344, 7
        %v1346 = vsub.s32 0, %v1345
        %v1347 = vrot.slane %v1330, %v1346
        %v1348 = vlaneseq
        %v1349 = vshrl.u32 %v1348, 7
        %v1350 = vsub.s32 0, %v1349
        %v1351 = vrot.slane %v1313, %v1350
        %v1352 = vlaneseq
        %v1353 = vshrl.u32 %v1352, 7
        %v1354 = vsub.s32 0, %v1353
        %v1355 = vrot.slane %v1327, %v1354
        %v1356 = vlaneseq
        %v1357 = vshrl.u32 %v1356, 7
        %v1358 = vsub.s32 0, %v1357
        %v1359 = vrot.slane %v1329, %v1358
        %v1360 = vlaneseq
        %v1361 = vshrl.u32 %v1360, 7
        %v1362 = vsub.s32 0, %v1361
        %v1363 = vrot.slane %v1331, %v1362
        %v1372 = vadd.f32 %v485, %v1335
        %v1373 = vadd.f32 %v486, %v1335
        %v1374 = vadd.f32 %v485, %v1339
        %v1375 = vadd.f32 %v486, %v1339
        %v1376 = vadd.f32 %v485, %v1343
        %v1377 = vadd.f32 %v486, %v1343
        %v1378 = vadd.f32 %v485, %v1347
        %v1379 = vadd.f32 %v486, %v1347
        %v1380 = vadd.f32 %v485, %v1351
        %v1381 = vadd.f32 %v486, %v1351
        %v1382 = vadd.f32 %v485, %v1355
        %v1383 = vadd.f32 %v486, %v1355
        %v1384 = vadd.f32 %v485, %v1359
        %v1385 = vadd.f32 %v486, %v1359
        %v1386 = vadd.f32 %v485, %v1363
        %v1387 = vadd.f32 %v486, %v1363
        %v1388 = vmul.f32 %v1372, 0.01
        %v1389 = vmul.f32 %v1373, 0.01
        %v1390 = vmul.f32 %v1374, 0.01
        %v1391 = vmul.f32 %v1375, 0.01
        %v1392 = vmul.f32 %v1376, 0.01
        %v1393 = vmul.f32 %v1377, 0.01
        %v1394 = vmul.f32 %v1378, 0.01
        %v1395 = vmul.f32 %v1379, 0.01
        %v1396 = vmul.f32 %v1380, 0.01
        %v1397 = vmul.f32 %v1381, 0.01
        %v1398 = vmul.f32 %v1382, 0.01
        %v1399 = vmul.f32 %v1383, 0.01
        %v1400 = vmul.f32 %v1384, 0.01
        %v1401 = vmul.f32 %v1385, 0.01
        %v1402 = vmul.f32 %v1386, 0.01
        %v1403 = vmul.f32 %v1387, 0.01
        %v1404 = vmax.f32 %v1372, %v1388
        %v1405 = vmax.f32 %v1373, %v1389
        %v1406 = vmax.f32 %v1374, %v1390
        %v1407 = vmax.f32 %v1375, %v1391
        %v1408 = vmax.f32 %v1376, %v1392
        %v1409 = vmax.f32 %v1377, %v1393
        %v1410 = vmax.f32 %v1378, %v1394
        %v1411 = vmax.f32 %v1379, %v1395
        %v1412 = vmax.f32 %v1380, %v1396
        %v1413 = vmax.f32 %v1381, %v1397
        %v1414 = vmax.f32 %v1382, %v1398
        %v1415 = vmax.f32 %v1383, %v1399
        %v1416 = vmax.f32 %v1384, %v1400
        %v1417 = vmax.f32 %v1385, %v1401
        %v1418 = vmax.f32 %v1386, %v1402
        %v1419 = vmax.f32 %v1387, %v1403
        %1420 = vmatprep.subr.mxu0 0.0
        %1421 = vmatpush1.msra.mxu0 %v236
        %1422 = vmatprep.subr.mxu0 0.0
        %1423 = vmatpush1.msra.mxu0 %v235
        %1424 = vmatprep.subr.mxu0 0.0
        %1425 = vmatpush1.msra.mxu0 %v234
        %1426 = vmatprep.subr.mxu0 0.0
        %1427 = vmatpush1.msra.mxu0 %v233
        %1428 = vmatprep.subr.mxu0 0.0
        %1429 = vmatpush1.msra.mxu0 %v232
        %1430 = vmatprep.subr.mxu0 0.0
        %1431 = vmatpush1.msra.mxu0 %v231
        %1432 = vmatprep.subr.mxu0 0.0
        %1433 = vmatpush1.msra.mxu0 %v230
        %1434 = vmatprep.subr.mxu0 0.0
        %1435 = vmatpush1.msra.mxu0 %v229
        %1436 = vmatprep.subr.mxu0 0.0
        %1437 = vmatpush1.msra.mxu0 %v228
        %1438 = vmatprep.subr.mxu0 0.0
        %1439 = vmatpush1.msra.mxu0 %v227
        %1440 = vmatprep.subr.mxu0 0.0
        %1441 = vmatpush1.msra.mxu0 %v226
        %1442 = vmatprep.subr.mxu0 0.0
        %1443 = vmatpush1.msra.mxu0 %v225
        %1444 = vmatprep.subr.mxu0 0.0
        %1445 = vmatpush1.msra.mxu0 %v224
        %1446 = vmatprep.subr.mxu0 0.0
        %1447 = vmatpush1.msra.mxu0 %v223
        %1448 = vmatprep.subr.mxu0 0.0
        %1449 = vmatpush1.msra.mxu0 %v222
        %1450 = vmatprep.subr.mxu0 0.0
        %1451 = vmatpush1.msra.mxu0 %v221
        %1452 = vmatprep.subr.mxu0 0.0
        %1453 = vmatpush2.msra.mxu0 0.0
        %1454 = vmatprep.subr.mxu0 0.0
        %1455 = vmatpush2.msra.mxu0 0.0
        %1456 = vmatprep.subr.mxu0 0.0
        %1457 = vmatpush2.msra.mxu0 0.0
        %1458 = vmatprep.subr.mxu0 0.0
        %1459 = vmatpush2.msra.mxu0 0.0
        %1460 = vmatprep.subr.mxu0 0.0
        %1461 = vmatpush2.msra.mxu0 0.0
        %1462 = vmatprep.subr.mxu0 0.0
        %1463 = vmatpush2.msra.mxu0 0.0
        %1464 = vmatprep.subr.mxu0 0.0
        %1465 = vmatpush2.msra.mxu0 0.0
        %1466 = vmatprep.subr.mxu0 0.0
        %1467 = vmatpush2.msra.mxu0 0.0
        %1468 = vmatprep.subr.mxu0 0.0
        %1469 = vmatpush2.msra.mxu0 0.0
        %1470 = vmatprep.subr.mxu0 0.0
        %1471 = vmatpush2.msra.mxu0 0.0
        %1472 = vmatprep.subr.mxu0 0.0
        %1473 = vmatpush2.msra.mxu0 0.0
        %1474 = vmatprep.subr.mxu0 0.0
        %1475 = vmatpush2.msra.mxu0 0.0
        %1476 = vmatprep.subr.mxu0 0.0
        %1477 = vmatpush2.msra.mxu0 0.0
        %1478 = vmatprep.subr.mxu0 0.0
        %1479 = vmatpush2.msra.mxu0 0.0
        %1480 = vmatprep.subr.mxu0 0.0
        %1481 = vmatpush2.msra.mxu0 0.0
        %1482 = vmatprep.subr.mxu0 0.0
        %1483 = vmatpush2.msra.mxu0 0.0
        %1484 = vmatprep.mubr.f32.mxu0 0.0
        %1485 = vmatmul.mubr.f32.gmra.mxu0 %v1404
        %v1486 = vpop.f32.mrf.mxu0
        %v1487 = vadd.f32 %v741, %v1486
        %v1488 = vpop.f32.mrf.mxu0
        %1489 = vmatprep.mubr.f32.mxu0 0.0
        %1490 = vmatmul.mubr.f32.gmra.mxu0 %v1405
        %v1491 = vpop.f32.mrf.mxu0
        %v1492 = vadd.f32 %v741, %v1491
        %v1493 = vpop.f32.mrf.mxu0
        %1494 = vmatprep.mubr.f32.mxu0 0.0
        %1495 = vmatmul.mubr.f32.gmra.mxu0 %v1406
        %v1496 = vpop.f32.mrf.mxu0
        %v1497 = vadd.f32 %v741, %v1496
        %v1498 = vpop.f32.mrf.mxu0
        %1499 = vmatprep.mubr.f32.mxu0 0.0
        %1500 = vmatmul.mubr.f32.gmra.mxu0 %v1407
        %v1501 = vpop.f32.mrf.mxu0
        %v1502 = vadd.f32 %v741, %v1501
        %v1503 = vpop.f32.mrf.mxu0
        %1504 = vmatprep.mubr.f32.mxu0 0.0
        %1505 = vmatmul.mubr.f32.gmra.mxu0 %v1408
        %v1506 = vpop.f32.mrf.mxu0
        %v1507 = vadd.f32 %v741, %v1506
        %v1508 = vpop.f32.mrf.mxu0
        %1509 = vmatprep.mubr.f32.mxu0 0.0
        %1510 = vmatmul.mubr.f32.gmra.mxu0 %v1409
        %v1511 = vpop.f32.mrf.mxu0
        %v1512 = vadd.f32 %v741, %v1511
        %v1513 = vpop.f32.mrf.mxu0
        %1514 = vmatprep.mubr.f32.mxu0 0.0
        %1515 = vmatmul.mubr.f32.gmra.mxu0 %v1410
        %v1516 = vpop.f32.mrf.mxu0
        %v1517 = vadd.f32 %v741, %v1516
        %v1518 = vpop.f32.mrf.mxu0
        %1519 = vmatprep.mubr.f32.mxu0 0.0
        %1520 = vmatmul.mubr.f32.gmra.mxu0 %v1411
        %v1521 = vpop.f32.mrf.mxu0
        %v1522 = vadd.f32 %v741, %v1521
        %v1523 = vpop.f32.mrf.mxu0
        %1524 = vmatprep.mubr.f32.mxu0 0.0
        %1525 = vmatmul.mubr.f32.gmra.mxu0 %v1412
        %v1526 = vpop.f32.mrf.mxu0
        %v1527 = vadd.f32 %v741, %v1526
        %v1528 = vpop.f32.mrf.mxu0
        %1529 = vmatprep.mubr.f32.mxu0 0.0
        %1530 = vmatmul.mubr.f32.gmra.mxu0 %v1413
        %v1531 = vpop.f32.mrf.mxu0
        %v1532 = vadd.f32 %v741, %v1531
        %v1533 = vpop.f32.mrf.mxu0
        %1534 = vmatprep.mubr.f32.mxu0 0.0
        %1535 = vmatmul.mubr.f32.gmra.mxu0 %v1414
        %v1536 = vpop.f32.mrf.mxu0
        %v1537 = vadd.f32 %v741, %v1536
        %v1538 = vpop.f32.mrf.mxu0
        %1539 = vmatprep.mubr.f32.mxu0 0.0
        %1540 = vmatmul.mubr.f32.gmra.mxu0 %v1415
        %v1541 = vpop.f32.mrf.mxu0
        %v1542 = vadd.f32 %v741, %v1541
        %v1543 = vpop.f32.mrf.mxu0
        %1544 = vmatprep.mubr.f32.mxu0 0.0
        %1545 = vmatmul.mubr.f32.gmra.mxu0 %v1416
        %v1546 = vpop.f32.mrf.mxu0
        %v1547 = vadd.f32 %v741, %v1546
        %v1548 = vpop.f32.mrf.mxu0
        %1549 = vmatprep.mubr.f32.mxu0 0.0
        %1550 = vmatmul.mubr.f32.gmra.mxu0 %v1417
        %v1551 = vpop.f32.mrf.mxu0
        %v1552 = vadd.f32 %v741, %v1551
        %v1553 = vpop.f32.mrf.mxu0
        %1554 = vmatprep.mubr.f32.mxu0 0.0
        %1555 = vmatmul.mubr.f32.gmra.mxu0 %v1418
        %v1556 = vpop.f32.mrf.mxu0
        %v1557 = vadd.f32 %v741, %v1556
        %v1558 = vpop.f32.mrf.mxu0
        %1559 = vmatprep.mubr.f32.mxu0 0.0
        %1560 = vmatmul.mubr.f32.gmra.mxu0 %v1419
        %v1561 = vpop.f32.mrf.mxu0
        %v1562 = vadd.f32 %v741, %v1561
        %v1563 = vpop.f32.mrf.mxu0
        %1564 = vdwg.mxu0
        %v1565 = vmul.f32 %v1487, 0.01
        %v1566 = vmul.f32 %v1492, 0.01
        %v1567 = vmul.f32 %v1497, 0.01
        %v1568 = vmul.f32 %v1502, 0.01
        %v1569 = vmul.f32 %v1507, 0.01
        %v1570 = vmul.f32 %v1512, 0.01
        %v1571 = vmul.f32 %v1517, 0.01
        %v1572 = vmul.f32 %v1522, 0.01
        %v1573 = vmul.f32 %v1527, 0.01
        %v1574 = vmul.f32 %v1532, 0.01
        %v1575 = vmul.f32 %v1537, 0.01
        %v1576 = vmul.f32 %v1542, 0.01
        %v1577 = vmul.f32 %v1547, 0.01
        %v1578 = vmul.f32 %v1552, 0.01
        %v1579 = vmul.f32 %v1557, 0.01
        %v1580 = vmul.f32 %v1562, 0.01
        %v1581 = vmax.f32 %v1487, %v1565
        %v1582 = vmax.f32 %v1492, %v1566
        %v1583 = vmax.f32 %v1497, %v1567
        %v1584 = vmax.f32 %v1502, %v1568
        %v1585 = vmax.f32 %v1507, %v1569
        %v1586 = vmax.f32 %v1512, %v1570
        %v1587 = vmax.f32 %v1517, %v1571
        %v1588 = vmax.f32 %v1522, %v1572
        %v1589 = vmax.f32 %v1527, %v1573
        %v1590 = vmax.f32 %v1532, %v1574
        %v1591 = vmax.f32 %v1537, %v1575
        %v1592 = vmax.f32 %v1542, %v1576
        %v1593 = vmax.f32 %v1547, %v1577
        %v1594 = vmax.f32 %v1552, %v1578
        %v1595 = vmax.f32 %v1557, %v1579
        %v1596 = vmax.f32 %v1562, %v1580
        %v1597 = vadd.f32 %v1581, %v1582
        %v1598 = vadd.f32 %v1597, %v1583
        %v1599 = vadd.f32 %v1598, %v1584
        %v1600 = vadd.f32 %v1599, %v1585
        %v1601 = vadd.f32 %v1600, %v1586
        %v1602 = vadd.f32 %v1601, %v1587
        %v1603 = vadd.f32 %v1602, %v1588
        %v1604 = vadd.f32 %v1603, %v1589
        %v1605 = vadd.f32 %v1604, %v1590
        %v1606 = vadd.f32 %v1605, %v1591
        %v1607 = vadd.f32 %v1606, %v1592
        %v1608 = vadd.f32 %v1607, %v1593
        %v1609 = vadd.f32 %v1608, %v1594
        %v1610 = vadd.f32 %v1609, %v1595
        %v1611 = vadd.f32 %v1610, %v1596
        %v1612 = vrot.slane %v1611, 4
        %v1613 = vadd.f32 %v1611, %v1612
        %v1614 = vrot.slane %v1613, 2
        %v1615 = vadd.f32 %v1613, %v1614
        %v1616 = vrot.slane %v1615, 1
        %v1617 = vadd.f32 %v1615, %v1616
        %v1618 = vadd.f32 %v1279, %v1617
        %s1619 = scalar_lea.vmem [#allocation2], 24
        %v1620 = vld [vmem:[%s1619] sm:$0xff]
        %v1622 = vcombine.high %v1620, %v1620
        %v1624 = vunpack.c.l.s4 1966171168
        %v1625 = vunpack.c.0.s8 %v1624
        %v1626 = vlaneseq
        %v1627 = vshrl.u32 %v1626, 7
        %v1628 = vsub.s32 %v1625, %v1627
        %v1629 = vrot.slane %v1620, %v1628
        %v1631 = vunpack.c.l.s4 1966171168
        %v1632 = vunpack.c.0.s8 %v1631
        %v1633 = vlaneseq
        %v1634 = vshrl.u32 %v1633, 7
        %v1635 = vsub.s32 %v1632, %v1634
        %v1636 = vrot.slane %v1622, %v1635
        %v1637 = vcombine.high %v1629, %v1629
        %v1638 = vcombine.high %v1636, %v1636
        %v1640 = vunpack.c.l.s4 1966171168
        %v1641 = vunpack.c.0.s8 %v1640
        %v1642 = vlaneseq
        %v1643 = vshrl.u32 %v1642, 7
        %v1644 = vsub.s32 %v1641, %v1643
        %v1645 = vrot.slane %v1629, %v1644
        %v1647 = vunpack.c.l.s4 1966171168
        %v1648 = vunpack.c.0.s8 %v1647
        %v1649 = vlaneseq
        %v1650 = vshrl.u32 %v1649, 7
        %v1651 = vsub.s32 %v1648, %v1650
        %v1652 = vrot.slane %v1636, %v1651
        %v1654 = vunpack.c.l.s4 1966171168
        %v1655 = vunpack.c.0.s8 %v1654
        %v1656 = vlaneseq
        %v1657 = vshrl.u32 %v1656, 7
        %v1658 = vsub.s32 %v1655, %v1657
        %v1659 = vrot.slane %v1637, %v1658
        %v1661 = vunpack.c.l.s4 1966171168
        %v1662 = vunpack.c.0.s8 %v1661
        %v1663 = vlaneseq
        %v1664 = vshrl.u32 %v1663, 7
        %v1665 = vsub.s32 %v1662, %v1664
        %v1666 = vrot.slane %v1638, %v1665
        %v1667 = vcombine.high %v1645, %v1645
        %v1668 = vcombine.high %v1652, %v1652
        %v1669 = vcombine.high %v1659, %v1659
        %v1670 = vcombine.high %v1666, %v1666
        %v1671 = vlaneseq
        %v1672 = vshrl.u32 %v1671, 7
        %v1673 = vsub.s32 0, %v1672
        %v1674 = vrot.slane %v1645, %v1673
        %v1675 = vlaneseq
        %v1676 = vshrl.u32 %v1675, 7
        %v1677 = vsub.s32 0, %v1676
        %v1678 = vrot.slane %v1659, %v1677
        %v1679 = vlaneseq
        %v1680 = vshrl.u32 %v1679, 7
        %v1681 = vsub.s32 0, %v1680
        %v1682 = vrot.slane %v1667, %v1681
        %v1683 = vlaneseq
        %v1684 = vshrl.u32 %v1683, 7
        %v1685 = vsub.s32 0, %v1684
        %v1686 = vrot.slane %v1669, %v1685
        %v1687 = vlaneseq
        %v1688 = vshrl.u32 %v1687, 7
        %v1689 = vsub.s32 0, %v1688
        %v1690 = vrot.slane %v1652, %v1689
        %v1691 = vlaneseq
        %v1692 = vshrl.u32 %v1691, 7
        %v1693 = vsub.s32 0, %v1692
        %v1694 = vrot.slane %v1666, %v1693
        %v1695 = vlaneseq
        %v1696 = vshrl.u32 %v1695, 7
        %v1697 = vsub.s32 0, %v1696
        %v1698 = vrot.slane %v1668, %v1697
        %v1699 = vlaneseq
        %v1700 = vshrl.u32 %v1699, 7
        %v1701 = vsub.s32 0, %v1700
        %v1702 = vrot.slane %v1670, %v1701
        %v1711 = vadd.f32 %v485, %v1674
        %v1712 = vadd.f32 %v486, %v1674
        %v1713 = vadd.f32 %v485, %v1678
        %v1714 = vadd.f32 %v486, %v1678
        %v1715 = vadd.f32 %v485, %v1682
        %v1716 = vadd.f32 %v486, %v1682
        %v1717 = vadd.f32 %v485, %v1686
        %v1718 = vadd.f32 %v486, %v1686
        %v1719 = vadd.f32 %v485, %v1690
        %v1720 = vadd.f32 %v486, %v1690
        %v1721 = vadd.f32 %v485, %v1694
        %v1722 = vadd.f32 %v486, %v1694
        %v1723 = vadd.f32 %v485, %v1698
        %v1724 = vadd.f32 %v486, %v1698
        %v1725 = vadd.f32 %v485, %v1702
        %v1726 = vadd.f32 %v486, %v1702
        %v1727 = vmul.f32 %v1711, 0.01
        %v1728 = vmul.f32 %v1712, 0.01
        %v1729 = vmul.f32 %v1713, 0.01
        %v1730 = vmul.f32 %v1714, 0.01
        %v1731 = vmul.f32 %v1715, 0.01
        %v1732 = vmul.f32 %v1716, 0.01
        %v1733 = vmul.f32 %v1717, 0.01
        %v1734 = vmul.f32 %v1718, 0.01
        %v1735 = vmul.f32 %v1719, 0.01
        %v1736 = vmul.f32 %v1720, 0.01
        %v1737 = vmul.f32 %v1721, 0.01
        %v1738 = vmul.f32 %v1722, 0.01
        %v1739 = vmul.f32 %v1723, 0.01
        %v1740 = vmul.f32 %v1724, 0.01
        %v1741 = vmul.f32 %v1725, 0.01
        %v1742 = vmul.f32 %v1726, 0.01
        %v1743 = vmax.f32 %v1711, %v1727
        %v1744 = vmax.f32 %v1712, %v1728
        %v1745 = vmax.f32 %v1713, %v1729
        %v1746 = vmax.f32 %v1714, %v1730
        %v1747 = vmax.f32 %v1715, %v1731
        %v1748 = vmax.f32 %v1716, %v1732
        %v1749 = vmax.f32 %v1717, %v1733
        %v1750 = vmax.f32 %v1718, %v1734
        %v1751 = vmax.f32 %v1719, %v1735
        %v1752 = vmax.f32 %v1720, %v1736
        %v1753 = vmax.f32 %v1721, %v1737
        %v1754 = vmax.f32 %v1722, %v1738
        %v1755 = vmax.f32 %v1723, %v1739
        %v1756 = vmax.f32 %v1724, %v1740
        %v1757 = vmax.f32 %v1725, %v1741
        %v1758 = vmax.f32 %v1726, %v1742
        %1759 = vmatprep.subr.mxu0 0.0
        %1760 = vmatpush1.msra.mxu0 %v236
        %1761 = vmatprep.subr.mxu0 0.0
        %1762 = vmatpush1.msra.mxu0 %v235
        %1763 = vmatprep.subr.mxu0 0.0
        %1764 = vmatpush1.msra.mxu0 %v234
        %1765 = vmatprep.subr.mxu0 0.0
        %1766 = vmatpush1.msra.mxu0 %v233
        %1767 = vmatprep.subr.mxu0 0.0
        %1768 = vmatpush1.msra.mxu0 %v232
        %1769 = vmatprep.subr.mxu0 0.0
        %1770 = vmatpush1.msra.mxu0 %v231
        %1771 = vmatprep.subr.mxu0 0.0
        %1772 = vmatpush1.msra.mxu0 %v230
        %1773 = vmatprep.subr.mxu0 0.0
        %1774 = vmatpush1.msra.mxu0 %v229
        %1775 = vmatprep.subr.mxu0 0.0
        %1776 = vmatpush1.msra.mxu0 %v228
        %1777 = vmatprep.subr.mxu0 0.0
        %1778 = vmatpush1.msra.mxu0 %v227
        %1779 = vmatprep.subr.mxu0 0.0
        %1780 = vmatpush1.msra.mxu0 %v226
        %1781 = vmatprep.subr.mxu0 0.0
        %1782 = vmatpush1.msra.mxu0 %v225
        %1783 = vmatprep.subr.mxu0 0.0
        %1784 = vmatpush1.msra.mxu0 %v224
        %1785 = vmatprep.subr.mxu0 0.0
        %1786 = vmatpush1.msra.mxu0 %v223
        %1787 = vmatprep.subr.mxu0 0.0
        %1788 = vmatpush1.msra.mxu0 %v222
        %1789 = vmatprep.subr.mxu0 0.0
        %1790 = vmatpush1.msra.mxu0 %v221
        %1791 = vmatprep.subr.mxu0 0.0
        %1792 = vmatpush2.msra.mxu0 0.0
        %1793 = vmatprep.subr.mxu0 0.0
        %1794 = vmatpush2.msra.mxu0 0.0
        %1795 = vmatprep.subr.mxu0 0.0
        %1796 = vmatpush2.msra.mxu0 0.0
        %1797 = vmatprep.subr.mxu0 0.0
        %1798 = vmatpush2.msra.mxu0 0.0
        %1799 = vmatprep.subr.mxu0 0.0
        %1800 = vmatpush2.msra.mxu0 0.0
        %1801 = vmatprep.subr.mxu0 0.0
        %1802 = vmatpush2.msra.mxu0 0.0
        %1803 = vmatprep.subr.mxu0 0.0
        %1804 = vmatpush2.msra.mxu0 0.0
        %1805 = vmatprep.subr.mxu0 0.0
        %1806 = vmatpush2.msra.mxu0 0.0
        %1807 = vmatprep.subr.mxu0 0.0
        %1808 = vmatpush2.msra.mxu0 0.0
        %1809 = vmatprep.subr.mxu0 0.0
        %1810 = vmatpush2.msra.mxu0 0.0
        %1811 = vmatprep.subr.mxu0 0.0
        %1812 = vmatpush2.msra.mxu0 0.0
        %1813 = vmatprep.subr.mxu0 0.0
        %1814 = vmatpush2.msra.mxu0 0.0
        %1815 = vmatprep.subr.mxu0 0.0
        %1816 = vmatpush2.msra.mxu0 0.0
        %1817 = vmatprep.subr.mxu0 0.0
        %1818 = vmatpush2.msra.mxu0 0.0
        %1819 = vmatprep.subr.mxu0 0.0
        %1820 = vmatpush2.msra.mxu0 0.0
        %1821 = vmatprep.subr.mxu0 0.0
        %1822 = vmatpush2.msra.mxu0 0.0
        %1823 = vmatprep.mubr.f32.mxu0 0.0
        %1824 = vmatmul.mubr.f32.gmra.mxu0 %v1743
        %v1825 = vpop.f32.mrf.mxu0
        %v1826 = vadd.f32 %v741, %v1825
        %v1827 = vpop.f32.mrf.mxu0
        %1828 = vmatprep.mubr.f32.mxu0 0.0
        %1829 = vmatmul.mubr.f32.gmra.mxu0 %v1744
        %v1830 = vpop.f32.mrf.mxu0
        %v1831 = vadd.f32 %v741, %v1830
        %v1832 = vpop.f32.mrf.mxu0
        %1833 = vmatprep.mubr.f32.mxu0 0.0
        %1834 = vmatmul.mubr.f32.gmra.mxu0 %v1745
        %v1835 = vpop.f32.mrf.mxu0
        %v1836 = vadd.f32 %v741, %v1835
        %v1837 = vpop.f32.mrf.mxu0
        %1838 = vmatprep.mubr.f32.mxu0 0.0
        %1839 = vmatmul.mubr.f32.gmra.mxu0 %v1746
        %v1840 = vpop.f32.mrf.mxu0
        %v1841 = vadd.f32 %v741, %v1840
        %v1842 = vpop.f32.mrf.mxu0
        %1843 = vmatprep.mubr.f32.mxu0 0.0
        %1844 = vmatmul.mubr.f32.gmra.mxu0 %v1747
        %v1845 = vpop.f32.mrf.mxu0
        %v1846 = vadd.f32 %v741, %v1845
        %v1847 = vpop.f32.mrf.mxu0
        %1848 = vmatprep.mubr.f32.mxu0 0.0
        %1849 = vmatmul.mubr.f32.gmra.mxu0 %v1748
        %v1850 = vpop.f32.mrf.mxu0
        %v1851 = vadd.f32 %v741, %v1850
        %v1852 = vpop.f32.mrf.mxu0
        %1853 = vmatprep.mubr.f32.mxu0 0.0
        %1854 = vmatmul.mubr.f32.gmra.mxu0 %v1749
        %v1855 = vpop.f32.mrf.mxu0
        %v1856 = vadd.f32 %v741, %v1855
        %v1857 = vpop.f32.mrf.mxu0
        %1858 = vmatprep.mubr.f32.mxu0 0.0
        %1859 = vmatmul.mubr.f32.gmra.mxu0 %v1750
        %v1860 = vpop.f32.mrf.mxu0
        %v1861 = vadd.f32 %v741, %v1860
        %v1862 = vpop.f32.mrf.mxu0
        %1863 = vmatprep.mubr.f32.mxu0 0.0
        %1864 = vmatmul.mubr.f32.gmra.mxu0 %v1751
        %v1865 = vpop.f32.mrf.mxu0
        %v1866 = vadd.f32 %v741, %v1865
        %v1867 = vpop.f32.mrf.mxu0
        %1868 = vmatprep.mubr.f32.mxu0 0.0
        %1869 = vmatmul.mubr.f32.gmra.mxu0 %v1752
        %v1870 = vpop.f32.mrf.mxu0
        %v1871 = vadd.f32 %v741, %v1870
        %v1872 = vpop.f32.mrf.mxu0
        %1873 = vmatprep.mubr.f32.mxu0 0.0
        %1874 = vmatmul.mubr.f32.gmra.mxu0 %v1753
        %v1875 = vpop.f32.mrf.mxu0
        %v1876 = vadd.f32 %v741, %v1875
        %v1877 = vpop.f32.mrf.mxu0
        %1878 = vmatprep.mubr.f32.mxu0 0.0
        %1879 = vmatmul.mubr.f32.gmra.mxu0 %v1754
        %v1880 = vpop.f32.mrf.mxu0
        %v1881 = vadd.f32 %v741, %v1880
        %v1882 = vpop.f32.mrf.mxu0
        %1883 = vmatprep.mubr.f32.mxu0 0.0
        %1884 = vmatmul.mubr.f32.gmra.mxu0 %v1755
        %v1885 = vpop.f32.mrf.mxu0
        %v1886 = vadd.f32 %v741, %v1885
        %v1887 = vpop.f32.mrf.mxu0
        %1888 = vmatprep.mubr.f32.mxu0 0.0
        %1889 = vmatmul.mubr.f32.gmra.mxu0 %v1756
        %v1890 = vpop.f32.mrf.mxu0
        %v1891 = vadd.f32 %v741, %v1890
        %v1892 = vpop.f32.mrf.mxu0
        %1893 = vmatprep.mubr.f32.mxu0 0.0
        %1894 = vmatmul.mubr.f32.gmra.mxu0 %v1757
        %v1895 = vpop.f32.mrf.mxu0
        %v1896 = vadd.f32 %v741, %v1895
        %v1897 = vpop.f32.mrf.mxu0
        %1898 = vmatprep.mubr.f32.mxu0 0.0
        %1899 = vmatmul.mubr.f32.gmra.mxu0 %v1758
        %v1900 = vpop.f32.mrf.mxu0
        %v1901 = vadd.f32 %v741, %v1900
        %v1902 = vpop.f32.mrf.mxu0
        %1903 = vdwg.mxu0
        %v1904 = vmul.f32 %v1826, 0.01
        %v1905 = vmul.f32 %v1831, 0.01
        %v1906 = vmul.f32 %v1836, 0.01
        %v1907 = vmul.f32 %v1841, 0.01
        %v1908 = vmul.f32 %v1846, 0.01
        %v1909 = vmul.f32 %v1851, 0.01
        %v1910 = vmul.f32 %v1856, 0.01
        %v1911 = vmul.f32 %v1861, 0.01
        %v1912 = vmul.f32 %v1866, 0.01
        %v1913 = vmul.f32 %v1871, 0.01
        %v1914 = vmul.f32 %v1876, 0.01
        %v1915 = vmul.f32 %v1881, 0.01
        %v1916 = vmul.f32 %v1886, 0.01
        %v1917 = vmul.f32 %v1891, 0.01
        %v1918 = vmul.f32 %v1896, 0.01
        %v1919 = vmul.f32 %v1901, 0.01
        %v1920 = vmax.f32 %v1826, %v1904
        %v1921 = vmax.f32 %v1831, %v1905
        %v1922 = vmax.f32 %v1836, %v1906
        %v1923 = vmax.f32 %v1841, %v1907
        %v1924 = vmax.f32 %v1846, %v1908
        %v1925 = vmax.f32 %v1851, %v1909
        %v1926 = vmax.f32 %v1856, %v1910
        %v1927 = vmax.f32 %v1861, %v1911
        %v1928 = vmax.f32 %v1866, %v1912
        %v1929 = vmax.f32 %v1871, %v1913
        %v1930 = vmax.f32 %v1876, %v1914
        %v1931 = vmax.f32 %v1881, %v1915
        %v1932 = vmax.f32 %v1886, %v1916
        %v1933 = vmax.f32 %v1891, %v1917
        %v1934 = vmax.f32 %v1896, %v1918
        %v1935 = vmax.f32 %v1901, %v1919
        %v1936 = vadd.f32 %v1920, %v1921
        %v1937 = vadd.f32 %v1936, %v1922
        %v1938 = vadd.f32 %v1937, %v1923
        %v1939 = vadd.f32 %v1938, %v1924
        %v1940 = vadd.f32 %v1939, %v1925
        %v1941 = vadd.f32 %v1940, %v1926
        %v1942 = vadd.f32 %v1941, %v1927
        %v1943 = vadd.f32 %v1942, %v1928
        %v1944 = vadd.f32 %v1943, %v1929
        %v1945 = vadd.f32 %v1944, %v1930
        %v1946 = vadd.f32 %v1945, %v1931
        %v1947 = vadd.f32 %v1946, %v1932
        %v1948 = vadd.f32 %v1947, %v1933
        %v1949 = vadd.f32 %v1948, %v1934
        %v1950 = vadd.f32 %v1949, %v1935
        %v1951 = vrot.slane %v1950, 4
        %v1952 = vadd.f32 %v1950, %v1951
        %v1953 = vrot.slane %v1952, 2
        %v1954 = vadd.f32 %v1952, %v1953
        %v1955 = vrot.slane %v1954, 1
        %v1956 = vadd.f32 %v1954, %v1955
        %v1957 = vadd.f32 %v1618, %v1956
        %s1958 = scalar_lea.vmem [#allocation2], 32
        %v1959 = vld [vmem:[%s1958] sm:$0xff]
        %v1961 = vcombine.high %v1959, %v1959
        %v1963 = vunpack.c.l.s4 1966171168
        %v1964 = vunpack.c.0.s8 %v1963
        %v1965 = vlaneseq
        %v1966 = vshrl.u32 %v1965, 7
        %v1967 = vsub.s32 %v1964, %v1966
        %v1968 = vrot.slane %v1959, %v1967
        %v1970 = vunpack.c.l.s4 1966171168
        %v1971 = vunpack.c.0.s8 %v1970
        %v1972 = vlaneseq
        %v1973 = vshrl.u32 %v1972, 7
        %v1974 = vsub.s32 %v1971, %v1973
        %v1975 = vrot.slane %v1961, %v1974
        %v1976 = vcombine.high %v1968, %v1968
        %v1977 = vcombine.high %v1975, %v1975
        %v1979 = vunpack.c.l.s4 1966171168
        %v1980 = vunpack.c.0.s8 %v1979
        %v1981 = vlaneseq
        %v1982 = vshrl.u32 %v1981, 7
        %v1983 = vsub.s32 %v1980, %v1982
        %v1984 = vrot.slane %v1968, %v1983
        %v1986 = vunpack.c.l.s4 1966171168
        %v1987 = vunpack.c.0.s8 %v1986
        %v1988 = vlaneseq
        %v1989 = vshrl.u32 %v1988, 7
        %v1990 = vsub.s32 %v1987, %v1989
        %v1991 = vrot.slane %v1975, %v1990
        %v1993 = vunpack.c.l.s4 1966171168
        %v1994 = vunpack.c.0.s8 %v1993
        %v1995 = vlaneseq
        %v1996 = vshrl.u32 %v1995, 7
        %v1997 = vsub.s32 %v1994, %v1996
        %v1998 = vrot.slane %v1976, %v1997
        %v2000 = vunpack.c.l.s4 1966171168
        %v2001 = vunpack.c.0.s8 %v2000
        %v2002 = vlaneseq
        %v2003 = vshrl.u32 %v2002, 7
        %v2004 = vsub.s32 %v2001, %v2003
        %v2005 = vrot.slane %v1977, %v2004
        %v2006 = vcombine.high %v1984, %v1984
        %v2007 = vcombine.high %v1991, %v1991
        %v2008 = vcombine.high %v1998, %v1998
        %v2009 = vcombine.high %v2005, %v2005
        %v2010 = vlaneseq
        %v2011 = vshrl.u32 %v2010, 7
        %v2012 = vsub.s32 0, %v2011
        %v2013 = vrot.slane %v1984, %v2012
        %v2014 = vlaneseq
        %v2015 = vshrl.u32 %v2014, 7
        %v2016 = vsub.s32 0, %v2015
        %v2017 = vrot.slane %v1998, %v2016
        %v2018 = vlaneseq
        %v2019 = vshrl.u32 %v2018, 7
        %v2020 = vsub.s32 0, %v2019
        %v2021 = vrot.slane %v2006, %v2020
        %v2022 = vlaneseq
        %v2023 = vshrl.u32 %v2022, 7
        %v2024 = vsub.s32 0, %v2023
        %v2025 = vrot.slane %v2008, %v2024
        %v2026 = vlaneseq
        %v2027 = vshrl.u32 %v2026, 7
        %v2028 = vsub.s32 0, %v2027
        %v2029 = vrot.slane %v1991, %v2028
        %v2030 = vlaneseq
        %v2031 = vshrl.u32 %v2030, 7
        %v2032 = vsub.s32 0, %v2031
        %v2033 = vrot.slane %v2005, %v2032
        %v2034 = vlaneseq
        %v2035 = vshrl.u32 %v2034, 7
        %v2036 = vsub.s32 0, %v2035
        %v2037 = vrot.slane %v2007, %v2036
        %v2038 = vlaneseq
        %v2039 = vshrl.u32 %v2038, 7
        %v2040 = vsub.s32 0, %v2039
        %v2041 = vrot.slane %v2009, %v2040
        %v2050 = vadd.f32 %v485, %v2013
        %v2051 = vadd.f32 %v486, %v2013
        %v2052 = vadd.f32 %v485, %v2017
        %v2053 = vadd.f32 %v486, %v2017
        %v2054 = vadd.f32 %v485, %v2021
        %v2055 = vadd.f32 %v486, %v2021
        %v2056 = vadd.f32 %v485, %v2025
        %v2057 = vadd.f32 %v486, %v2025
        %v2058 = vadd.f32 %v485, %v2029
        %v2059 = vadd.f32 %v486, %v2029
        %v2060 = vadd.f32 %v485, %v2033
        %v2061 = vadd.f32 %v486, %v2033
        %v2062 = vadd.f32 %v485, %v2037
        %v2063 = vadd.f32 %v486, %v2037
        %v2064 = vadd.f32 %v485, %v2041
        %v2065 = vadd.f32 %v486, %v2041
        %v2066 = vmul.f32 %v2050, 0.01
        %v2067 = vmul.f32 %v2051, 0.01
        %v2068 = vmul.f32 %v2052, 0.01
        %v2069 = vmul.f32 %v2053, 0.01
        %v2070 = vmul.f32 %v2054, 0.01
        %v2071 = vmul.f32 %v2055, 0.01
        %v2072 = vmul.f32 %v2056, 0.01
        %v2073 = vmul.f32 %v2057, 0.01
        %v2074 = vmul.f32 %v2058, 0.01
        %v2075 = vmul.f32 %v2059, 0.01
        %v2076 = vmul.f32 %v2060, 0.01
        %v2077 = vmul.f32 %v2061, 0.01
        %v2078 = vmul.f32 %v2062, 0.01
        %v2079 = vmul.f32 %v2063, 0.01
        %v2080 = vmul.f32 %v2064, 0.01
        %v2081 = vmul.f32 %v2065, 0.01
        %v2082 = vmax.f32 %v2050, %v2066
        %v2083 = vmax.f32 %v2051, %v2067
        %v2084 = vmax.f32 %v2052, %v2068
        %v2085 = vmax.f32 %v2053, %v2069
        %v2086 = vmax.f32 %v2054, %v2070
        %v2087 = vmax.f32 %v2055, %v2071
        %v2088 = vmax.f32 %v2056, %v2072
        %v2089 = vmax.f32 %v2057, %v2073
        %v2090 = vmax.f32 %v2058, %v2074
        %v2091 = vmax.f32 %v2059, %v2075
        %v2092 = vmax.f32 %v2060, %v2076
        %v2093 = vmax.f32 %v2061, %v2077
        %v2094 = vmax.f32 %v2062, %v2078
        %v2095 = vmax.f32 %v2063, %v2079
        %v2096 = vmax.f32 %v2064, %v2080
        %v2097 = vmax.f32 %v2065, %v2081
        %2098 = vmatprep.subr.mxu0 0.0
        %2099 = vmatpush1.msra.mxu0 %v236
        %2100 = vmatprep.subr.mxu0 0.0
        %2101 = vmatpush1.msra.mxu0 %v235
        %2102 = vmatprep.subr.mxu0 0.0
        %2103 = vmatpush1.msra.mxu0 %v234
        %2104 = vmatprep.subr.mxu0 0.0
        %2105 = vmatpush1.msra.mxu0 %v233
        %2106 = vmatprep.subr.mxu0 0.0
        %2107 = vmatpush1.msra.mxu0 %v232
        %2108 = vmatprep.subr.mxu0 0.0
        %2109 = vmatpush1.msra.mxu0 %v231
        %2110 = vmatprep.subr.mxu0 0.0
        %2111 = vmatpush1.msra.mxu0 %v230
        %2112 = vmatprep.subr.mxu0 0.0
        %2113 = vmatpush1.msra.mxu0 %v229
        %2114 = vmatprep.subr.mxu0 0.0
        %2115 = vmatpush1.msra.mxu0 %v228
        %2116 = vmatprep.subr.mxu0 0.0
        %2117 = vmatpush1.msra.mxu0 %v227
        %2118 = vmatprep.subr.mxu0 0.0
        %2119 = vmatpush1.msra.mxu0 %v226
        %2120 = vmatprep.subr.mxu0 0.0
        %2121 = vmatpush1.msra.mxu0 %v225
        %2122 = vmatprep.subr.mxu0 0.0
        %2123 = vmatpush1.msra.mxu0 %v224
        %2124 = vmatprep.subr.mxu0 0.0
        %2125 = vmatpush1.msra.mxu0 %v223
        %2126 = vmatprep.subr.mxu0 0.0
        %2127 = vmatpush1.msra.mxu0 %v222
        %2128 = vmatprep.subr.mxu0 0.0
        %2129 = vmatpush1.msra.mxu0 %v221
        %2130 = vmatprep.subr.mxu0 0.0
        %2131 = vmatpush2.msra.mxu0 0.0
        %2132 = vmatprep.subr.mxu0 0.0
        %2133 = vmatpush2.msra.mxu0 0.0
        %2134 = vmatprep.subr.mxu0 0.0
        %2135 = vmatpush2.msra.mxu0 0.0
        %2136 = vmatprep.subr.mxu0 0.0
        %2137 = vmatpush2.msra.mxu0 0.0
        %2138 = vmatprep.subr.mxu0 0.0
        %2139 = vmatpush2.msra.mxu0 0.0
        %2140 = vmatprep.subr.mxu0 0.0
        %2141 = vmatpush2.msra.mxu0 0.0
        %2142 = vmatprep.subr.mxu0 0.0
        %2143 = vmatpush2.msra.mxu0 0.0
        %2144 = vmatprep.subr.mxu0 0.0
        %2145 = vmatpush2.msra.mxu0 0.0
        %2146 = vmatprep.subr.mxu0 0.0
        %2147 = vmatpush2.msra.mxu0 0.0
        %2148 = vmatprep.subr.mxu0 0.0
        %2149 = vmatpush2.msra.mxu0 0.0
        %2150 = vmatprep.subr.mxu0 0.0
        %2151 = vmatpush2.msra.mxu0 0.0
        %2152 = vmatprep.subr.mxu0 0.0
        %2153 = vmatpush2.msra.mxu0 0.0
        %2154 = vmatprep.subr.mxu0 0.0
        %2155 = vmatpush2.msra.mxu0 0.0
        %2156 = vmatprep.subr.mxu0 0.0
        %2157 = vmatpush2.msra.mxu0 0.0
        %2158 = vmatprep.subr.mxu0 0.0
        %2159 = vmatpush2.msra.mxu0 0.0
        %2160 = vmatprep.subr.mxu0 0.0
        %2161 = vmatpush2.msra.mxu0 0.0
        %2162 = vmatprep.mubr.f32.mxu0 0.0
        %2163 = vmatmul.mubr.f32.gmra.mxu0 %v2082
        %v2164 = vpop.f32.mrf.mxu0
        %v2165 = vadd.f32 %v741, %v2164
        %v2166 = vpop.f32.mrf.mxu0
        %2167 = vmatprep.mubr.f32.mxu0 0.0
        %2168 = vmatmul.mubr.f32.gmra.mxu0 %v2083
        %v2169 = vpop.f32.mrf.mxu0
        %v2170 = vadd.f32 %v741, %v2169
        %v2171 = vpop.f32.mrf.mxu0
        %2172 = vmatprep.mubr.f32.mxu0 0.0
        %2173 = vmatmul.mubr.f32.gmra.mxu0 %v2084
        %v2174 = vpop.f32.mrf.mxu0
        %v2175 = vadd.f32 %v741, %v2174
        %v2176 = vpop.f32.mrf.mxu0
        %2177 = vmatprep.mubr.f32.mxu0 0.0
        %2178 = vmatmul.mubr.f32.gmra.mxu0 %v2085
        %v2179 = vpop.f32.mrf.mxu0
        %v2180 = vadd.f32 %v741, %v2179
        %v2181 = vpop.f32.mrf.mxu0
        %2182 = vmatprep.mubr.f32.mxu0 0.0
        %2183 = vmatmul.mubr.f32.gmra.mxu0 %v2086
        %v2184 = vpop.f32.mrf.mxu0
        %v2185 = vadd.f32 %v741, %v2184
        %v2186 = vpop.f32.mrf.mxu0
        %2187 = vmatprep.mubr.f32.mxu0 0.0
        %2188 = vmatmul.mubr.f32.gmra.mxu0 %v2087
        %v2189 = vpop.f32.mrf.mxu0
        %v2190 = vadd.f32 %v741, %v2189
        %v2191 = vpop.f32.mrf.mxu0
        %2192 = vmatprep.mubr.f32.mxu0 0.0
        %2193 = vmatmul.mubr.f32.gmra.mxu0 %v2088
        %v2194 = vpop.f32.mrf.mxu0
        %v2195 = vadd.f32 %v741, %v2194
        %v2196 = vpop.f32.mrf.mxu0
        %2197 = vmatprep.mubr.f32.mxu0 0.0
        %2198 = vmatmul.mubr.f32.gmra.mxu0 %v2089
        %v2199 = vpop.f32.mrf.mxu0
        %v2200 = vadd.f32 %v741, %v2199
        %v2201 = vpop.f32.mrf.mxu0
        %2202 = vmatprep.mubr.f32.mxu0 0.0
        %2203 = vmatmul.mubr.f32.gmra.mxu0 %v2090
        %v2204 = vpop.f32.mrf.mxu0
        %v2205 = vadd.f32 %v741, %v2204
        %v2206 = vpop.f32.mrf.mxu0
        %2207 = vmatprep.mubr.f32.mxu0 0.0
        %2208 = vmatmul.mubr.f32.gmra.mxu0 %v2091
        %v2209 = vpop.f32.mrf.mxu0
        %v2210 = vadd.f32 %v741, %v2209
        %v2211 = vpop.f32.mrf.mxu0
        %2212 = vmatprep.mubr.f32.mxu0 0.0
        %2213 = vmatmul.mubr.f32.gmra.mxu0 %v2092
        %v2214 = vpop.f32.mrf.mxu0
        %v2215 = vadd.f32 %v741, %v2214
        %v2216 = vpop.f32.mrf.mxu0
        %2217 = vmatprep.mubr.f32.mxu0 0.0
        %2218 = vmatmul.mubr.f32.gmra.mxu0 %v2093
        %v2219 = vpop.f32.mrf.mxu0
        %v2220 = vadd.f32 %v741, %v2219
        %v2221 = vpop.f32.mrf.mxu0
        %2222 = vmatprep.mubr.f32.mxu0 0.0
        %2223 = vmatmul.mubr.f32.gmra.mxu0 %v2094
        %v2224 = vpop.f32.mrf.mxu0
        %v2225 = vadd.f32 %v741, %v2224
        %v2226 = vpop.f32.mrf.mxu0
        %2227 = vmatprep.mubr.f32.mxu0 0.0
        %2228 = vmatmul.mubr.f32.gmra.mxu0 %v2095
        %v2229 = vpop.f32.mrf.mxu0
        %v2230 = vadd.f32 %v741, %v2229
        %v2231 = vpop.f32.mrf.mxu0
        %2232 = vmatprep.mubr.f32.mxu0 0.0
        %2233 = vmatmul.mubr.f32.gmra.mxu0 %v2096
        %v2234 = vpop.f32.mrf.mxu0
        %v2235 = vadd.f32 %v741, %v2234
        %v2236 = vpop.f32.mrf.mxu0
        %2237 = vmatprep.mubr.f32.mxu0 0.0
        %2238 = vmatmul.mubr.f32.gmra.mxu0 %v2097
        %v2239 = vpop.f32.mrf.mxu0
        %v2240 = vadd.f32 %v741, %v2239
        %v2241 = vpop.f32.mrf.mxu0
        %2242 = vdwg.mxu0
        %v2243 = vmul.f32 %v2165, 0.01
        %v2244 = vmul.f32 %v2170, 0.01
        %v2245 = vmul.f32 %v2175, 0.01
        %v2246 = vmul.f32 %v2180, 0.01
        %v2247 = vmul.f32 %v2185, 0.01
        %v2248 = vmul.f32 %v2190, 0.01
        %v2249 = vmul.f32 %v2195, 0.01
        %v2250 = vmul.f32 %v2200, 0.01
        %v2251 = vmul.f32 %v2205, 0.01
        %v2252 = vmul.f32 %v2210, 0.01
        %v2253 = vmul.f32 %v2215, 0.01
        %v2254 = vmul.f32 %v2220, 0.01
        %v2255 = vmul.f32 %v2225, 0.01
        %v2256 = vmul.f32 %v2230, 0.01
        %v2257 = vmul.f32 %v2235, 0.01
        %v2258 = vmul.f32 %v2240, 0.01
        %v2259 = vmax.f32 %v2165, %v2243
        %v2260 = vmax.f32 %v2170, %v2244
        %v2261 = vmax.f32 %v2175, %v2245
        %v2262 = vmax.f32 %v2180, %v2246
        %v2263 = vmax.f32 %v2185, %v2247
        %v2264 = vmax.f32 %v2190, %v2248
        %v2265 = vmax.f32 %v2195, %v2249
        %v2266 = vmax.f32 %v2200, %v2250
        %v2267 = vmax.f32 %v2205, %v2251
        %v2268 = vmax.f32 %v2210, %v2252
        %v2269 = vmax.f32 %v2215, %v2253
        %v2270 = vmax.f32 %v2220, %v2254
        %v2271 = vmax.f32 %v2225, %v2255
        %v2272 = vmax.f32 %v2230, %v2256
        %v2273 = vmax.f32 %v2235, %v2257
        %v2274 = vmax.f32 %v2240, %v2258
        %v2275 = vadd.f32 %v2259, %v2260
        %v2276 = vadd.f32 %v2275, %v2261
        %v2277 = vadd.f32 %v2276, %v2262
        %v2278 = vadd.f32 %v2277, %v2263
        %v2279 = vadd.f32 %v2278, %v2264
        %v2280 = vadd.f32 %v2279, %v2265
        %v2281 = vadd.f32 %v2280, %v2266
        %v2282 = vadd.f32 %v2281, %v2267
        %v2283 = vadd.f32 %v2282, %v2268
        %v2284 = vadd.f32 %v2283, %v2269
        %v2285 = vadd.f32 %v2284, %v2270
        %v2286 = vadd.f32 %v2285, %v2271
        %v2287 = vadd.f32 %v2286, %v2272
        %v2288 = vadd.f32 %v2287, %v2273
        %v2289 = vadd.f32 %v2288, %v2274
        %v2290 = vrot.slane %v2289, 4
        %v2291 = vadd.f32 %v2289, %v2290
        %v2292 = vrot.slane %v2291, 2
        %v2293 = vadd.f32 %v2291, %v2292
        %v2294 = vrot.slane %v2293, 1
        %v2295 = vadd.f32 %v2293, %v2294
        %v2296 = vadd.f32 %v1957, %v2295
        %s2297 = scalar_lea.vmem [#allocation2], 40
        %v2298 = vld [vmem:[%s2297] sm:$0xff]
        %v2300 = vcombine.high %v2298, %v2298
        %v2302 = vunpack.c.l.s4 1966171168
        %v2303 = vunpack.c.0.s8 %v2302
        %v2304 = vlaneseq
        %v2305 = vshrl.u32 %v2304, 7
        %v2306 = vsub.s32 %v2303, %v2305
        %v2307 = vrot.slane %v2298, %v2306
        %v2309 = vunpack.c.l.s4 1966171168
        %v2310 = vunpack.c.0.s8 %v2309
        %v2311 = vlaneseq
        %v2312 = vshrl.u32 %v2311, 7
        %v2313 = vsub.s32 %v2310, %v2312
        %v2314 = vrot.slane %v2300, %v2313
        %v2315 = vcombine.high %v2307, %v2307
        %v2316 = vcombine.high %v2314, %v2314
        %v2318 = vunpack.c.l.s4 1966171168
        %v2319 = vunpack.c.0.s8 %v2318
        %v2320 = vlaneseq
        %v2321 = vshrl.u32 %v2320, 7
        %v2322 = vsub.s32 %v2319, %v2321
        %v2323 = vrot.slane %v2307, %v2322
        %v2325 = vunpack.c.l.s4 1966171168
        %v2326 = vunpack.c.0.s8 %v2325
        %v2327 = vlaneseq
        %v2328 = vshrl.u32 %v2327, 7
        %v2329 = vsub.s32 %v2326, %v2328
        %v2330 = vrot.slane %v2314, %v2329
        %v2332 = vunpack.c.l.s4 1966171168
        %v2333 = vunpack.c.0.s8 %v2332
        %v2334 = vlaneseq
        %v2335 = vshrl.u32 %v2334, 7
        %v2336 = vsub.s32 %v2333, %v2335
        %v2337 = vrot.slane %v2315, %v2336
        %v2339 = vunpack.c.l.s4 1966171168
        %v2340 = vunpack.c.0.s8 %v2339
        %v2341 = vlaneseq
        %v2342 = vshrl.u32 %v2341, 7
        %v2343 = vsub.s32 %v2340, %v2342
        %v2344 = vrot.slane %v2316, %v2343
        %v2345 = vcombine.high %v2323, %v2323
        %v2346 = vcombine.high %v2330, %v2330
        %v2347 = vcombine.high %v2337, %v2337
        %v2348 = vcombine.high %v2344, %v2344
        %v2349 = vlaneseq
        %v2350 = vshrl.u32 %v2349, 7
        %v2351 = vsub.s32 0, %v2350
        %v2352 = vrot.slane %v2323, %v2351
        %v2353 = vlaneseq
        %v2354 = vshrl.u32 %v2353, 7
        %v2355 = vsub.s32 0, %v2354
        %v2356 = vrot.slane %v2337, %v2355
        %v2357 = vlaneseq
        %v2358 = vshrl.u32 %v2357, 7
        %v2359 = vsub.s32 0, %v2358
        %v2360 = vrot.slane %v2345, %v2359
        %v2361 = vlaneseq
        %v2362 = vshrl.u32 %v2361, 7
        %v2363 = vsub.s32 0, %v2362
        %v2364 = vrot.slane %v2347, %v2363
        %v2365 = vlaneseq
        %v2366 = vshrl.u32 %v2365, 7
        %v2367 = vsub.s32 0, %v2366
        %v2368 = vrot.slane %v2330, %v2367
        %v2369 = vlaneseq
        %v2370 = vshrl.u32 %v2369, 7
        %v2371 = vsub.s32 0, %v2370
        %v2372 = vrot.slane %v2344, %v2371
        %v2373 = vlaneseq
        %v2374 = vshrl.u32 %v2373, 7
        %v2375 = vsub.s32 0, %v2374
        %v2376 = vrot.slane %v2346, %v2375
        %v2377 = vlaneseq
        %v2378 = vshrl.u32 %v2377, 7
        %v2379 = vsub.s32 0, %v2378
        %v2380 = vrot.slane %v2348, %v2379
        %v2389 = vadd.f32 %v485, %v2352
        %v2390 = vadd.f32 %v486, %v2352
        %v2391 = vadd.f32 %v485, %v2356
        %v2392 = vadd.f32 %v486, %v2356
        %v2393 = vadd.f32 %v485, %v2360
        %v2394 = vadd.f32 %v486, %v2360
        %v2395 = vadd.f32 %v485, %v2364
        %v2396 = vadd.f32 %v486, %v2364
        %v2397 = vadd.f32 %v485, %v2368
        %v2398 = vadd.f32 %v486, %v2368
        %v2399 = vadd.f32 %v485, %v2372
        %v2400 = vadd.f32 %v486, %v2372
        %v2401 = vadd.f32 %v485, %v2376
        %v2402 = vadd.f32 %v486, %v2376
        %v2403 = vadd.f32 %v485, %v2380
        %v2404 = vadd.f32 %v486, %v2380
        %v2405 = vmul.f32 %v2389, 0.01
        %v2406 = vmul.f32 %v2390, 0.01
        %v2407 = vmul.f32 %v2391, 0.01
        %v2408 = vmul.f32 %v2392, 0.01
        %v2409 = vmul.f32 %v2393, 0.01
        %v2410 = vmul.f32 %v2394, 0.01
        %v2411 = vmul.f32 %v2395, 0.01
        %v2412 = vmul.f32 %v2396, 0.01
        %v2413 = vmul.f32 %v2397, 0.01
        %v2414 = vmul.f32 %v2398, 0.01
        %v2415 = vmul.f32 %v2399, 0.01
        %v2416 = vmul.f32 %v2400, 0.01
        %v2417 = vmul.f32 %v2401, 0.01
        %v2418 = vmul.f32 %v2402, 0.01
        %v2419 = vmul.f32 %v2403, 0.01
        %v2420 = vmul.f32 %v2404, 0.01
        %v2421 = vmax.f32 %v2389, %v2405
        %v2422 = vmax.f32 %v2390, %v2406
        %v2423 = vmax.f32 %v2391, %v2407
        %v2424 = vmax.f32 %v2392, %v2408
        %v2425 = vmax.f32 %v2393, %v2409
        %v2426 = vmax.f32 %v2394, %v2410
        %v2427 = vmax.f32 %v2395, %v2411
        %v2428 = vmax.f32 %v2396, %v2412
        %v2429 = vmax.f32 %v2397, %v2413
        %v2430 = vmax.f32 %v2398, %v2414
        %v2431 = vmax.f32 %v2399, %v2415
        %v2432 = vmax.f32 %v2400, %v2416
        %v2433 = vmax.f32 %v2401, %v2417
        %v2434 = vmax.f32 %v2402, %v2418
        %v2435 = vmax.f32 %v2403, %v2419
        %v2436 = vmax.f32 %v2404, %v2420
        %2437 = vmatprep.subr.mxu0 0.0
        %2438 = vmatpush1.msra.mxu0 %v236
        %2439 = vmatprep.subr.mxu0 0.0
        %2440 = vmatpush1.msra.mxu0 %v235
        %2441 = vmatprep.subr.mxu0 0.0
        %2442 = vmatpush1.msra.mxu0 %v234
        %2443 = vmatprep.subr.mxu0 0.0
        %2444 = vmatpush1.msra.mxu0 %v233
        %2445 = vmatprep.subr.mxu0 0.0
        %2446 = vmatpush1.msra.mxu0 %v232
        %2447 = vmatprep.subr.mxu0 0.0
        %2448 = vmatpush1.msra.mxu0 %v231
        %2449 = vmatprep.subr.mxu0 0.0
        %2450 = vmatpush1.msra.mxu0 %v230
        %2451 = vmatprep.subr.mxu0 0.0
        %2452 = vmatpush1.msra.mxu0 %v229
        %2453 = vmatprep.subr.mxu0 0.0
        %2454 = vmatpush1.msra.mxu0 %v228
        %2455 = vmatprep.subr.mxu0 0.0
        %2456 = vmatpush1.msra.mxu0 %v227
        %2457 = vmatprep.subr.mxu0 0.0
        %2458 = vmatpush1.msra.mxu0 %v226
        %2459 = vmatprep.subr.mxu0 0.0
        %2460 = vmatpush1.msra.mxu0 %v225
        %2461 = vmatprep.subr.mxu0 0.0
        %2462 = vmatpush1.msra.mxu0 %v224
        %2463 = vmatprep.subr.mxu0 0.0
        %2464 = vmatpush1.msra.mxu0 %v223
        %2465 = vmatprep.subr.mxu0 0.0
        %2466 = vmatpush1.msra.mxu0 %v222
        %2467 = vmatprep.subr.mxu0 0.0
        %2468 = vmatpush1.msra.mxu0 %v221
        %2469 = vmatprep.subr.mxu0 0.0
        %2470 = vmatpush2.msra.mxu0 0.0
        %2471 = vmatprep.subr.mxu0 0.0
        %2472 = vmatpush2.msra.mxu0 0.0
        %2473 = vmatprep.subr.mxu0 0.0
        %2474 = vmatpush2.msra.mxu0 0.0
        %2475 = vmatprep.subr.mxu0 0.0
        %2476 = vmatpush2.msra.mxu0 0.0
        %2477 = vmatprep.subr.mxu0 0.0
        %2478 = vmatpush2.msra.mxu0 0.0
        %2479 = vmatprep.subr.mxu0 0.0
        %2480 = vmatpush2.msra.mxu0 0.0
        %2481 = vmatprep.subr.mxu0 0.0
        %2482 = vmatpush2.msra.mxu0 0.0
        %2483 = vmatprep.subr.mxu0 0.0
        %2484 = vmatpush2.msra.mxu0 0.0
        %2485 = vmatprep.subr.mxu0 0.0
        %2486 = vmatpush2.msra.mxu0 0.0
        %2487 = vmatprep.subr.mxu0 0.0
        %2488 = vmatpush2.msra.mxu0 0.0
        %2489 = vmatprep.subr.mxu0 0.0
        %2490 = vmatpush2.msra.mxu0 0.0
        %2491 = vmatprep.subr.mxu0 0.0
        %2492 = vmatpush2.msra.mxu0 0.0
        %2493 = vmatprep.subr.mxu0 0.0
        %2494 = vmatpush2.msra.mxu0 0.0
        %2495 = vmatprep.subr.mxu0 0.0
        %2496 = vmatpush2.msra.mxu0 0.0
        %2497 = vmatprep.subr.mxu0 0.0
        %2498 = vmatpush2.msra.mxu0 0.0
        %2499 = vmatprep.subr.mxu0 0.0
        %2500 = vmatpush2.msra.mxu0 0.0
        %2501 = vmatprep.mubr.f32.mxu0 0.0
        %2502 = vmatmul.mubr.f32.gmra.mxu0 %v2421
        %v2503 = vpop.f32.mrf.mxu0
        %v2504 = vadd.f32 %v741, %v2503
        %v2505 = vpop.f32.mrf.mxu0
        %2506 = vmatprep.mubr.f32.mxu0 0.0
        %2507 = vmatmul.mubr.f32.gmra.mxu0 %v2422
        %v2508 = vpop.f32.mrf.mxu0
        %v2509 = vadd.f32 %v741, %v2508
        %v2510 = vpop.f32.mrf.mxu0
        %2511 = vmatprep.mubr.f32.mxu0 0.0
        %2512 = vmatmul.mubr.f32.gmra.mxu0 %v2423
        %v2513 = vpop.f32.mrf.mxu0
        %v2514 = vadd.f32 %v741, %v2513
        %v2515 = vpop.f32.mrf.mxu0
        %2516 = vmatprep.mubr.f32.mxu0 0.0
        %2517 = vmatmul.mubr.f32.gmra.mxu0 %v2424
        %v2518 = vpop.f32.mrf.mxu0
        %v2519 = vadd.f32 %v741, %v2518
        %v2520 = vpop.f32.mrf.mxu0
        %2521 = vmatprep.mubr.f32.mxu0 0.0
        %2522 = vmatmul.mubr.f32.gmra.mxu0 %v2425
        %v2523 = vpop.f32.mrf.mxu0
        %v2524 = vadd.f32 %v741, %v2523
        %v2525 = vpop.f32.mrf.mxu0
        %2526 = vmatprep.mubr.f32.mxu0 0.0
        %2527 = vmatmul.mubr.f32.gmra.mxu0 %v2426
        %v2528 = vpop.f32.mrf.mxu0
        %v2529 = vadd.f32 %v741, %v2528
        %v2530 = vpop.f32.mrf.mxu0
        %2531 = vmatprep.mubr.f32.mxu0 0.0
        %2532 = vmatmul.mubr.f32.gmra.mxu0 %v2427
        %v2533 = vpop.f32.mrf.mxu0
        %v2534 = vadd.f32 %v741, %v2533
        %v2535 = vpop.f32.mrf.mxu0
        %2536 = vmatprep.mubr.f32.mxu0 0.0
        %2537 = vmatmul.mubr.f32.gmra.mxu0 %v2428
        %v2538 = vpop.f32.mrf.mxu0
        %v2539 = vadd.f32 %v741, %v2538
        %v2540 = vpop.f32.mrf.mxu0
        %2541 = vmatprep.mubr.f32.mxu0 0.0
        %2542 = vmatmul.mubr.f32.gmra.mxu0 %v2429
        %v2543 = vpop.f32.mrf.mxu0
        %v2544 = vadd.f32 %v741, %v2543
        %v2545 = vpop.f32.mrf.mxu0
        %2546 = vmatprep.mubr.f32.mxu0 0.0
        %2547 = vmatmul.mubr.f32.gmra.mxu0 %v2430
        %v2548 = vpop.f32.mrf.mxu0
        %v2549 = vadd.f32 %v741, %v2548
        %v2550 = vpop.f32.mrf.mxu0
        %2551 = vmatprep.mubr.f32.mxu0 0.0
        %2552 = vmatmul.mubr.f32.gmra.mxu0 %v2431
        %v2553 = vpop.f32.mrf.mxu0
        %v2554 = vadd.f32 %v741, %v2553
        %v2555 = vpop.f32.mrf.mxu0
        %2556 = vmatprep.mubr.f32.mxu0 0.0
        %2557 = vmatmul.mubr.f32.gmra.mxu0 %v2432
        %v2558 = vpop.f32.mrf.mxu0
        %v2559 = vadd.f32 %v741, %v2558
        %v2560 = vpop.f32.mrf.mxu0
        %2561 = vmatprep.mubr.f32.mxu0 0.0
        %2562 = vmatmul.mubr.f32.gmra.mxu0 %v2433
        %v2563 = vpop.f32.mrf.mxu0
        %v2564 = vadd.f32 %v741, %v2563
        %v2565 = vpop.f32.mrf.mxu0
        %2566 = vmatprep.mubr.f32.mxu0 0.0
        %2567 = vmatmul.mubr.f32.gmra.mxu0 %v2434
        %v2568 = vpop.f32.mrf.mxu0
        %v2569 = vadd.f32 %v741, %v2568
        %v2570 = vpop.f32.mrf.mxu0
        %2571 = vmatprep.mubr.f32.mxu0 0.0
        %2572 = vmatmul.mubr.f32.gmra.mxu0 %v2435
        %v2573 = vpop.f32.mrf.mxu0
        %v2574 = vadd.f32 %v741, %v2573
        %v2575 = vpop.f32.mrf.mxu0
        %2576 = vmatprep.mubr.f32.mxu0 0.0
        %2577 = vmatmul.mubr.f32.gmra.mxu0 %v2436
        %v2578 = vpop.f32.mrf.mxu0
        %v2579 = vadd.f32 %v741, %v2578
        %v2580 = vpop.f32.mrf.mxu0
        %2581 = vdwg.mxu0
        %v2582 = vmul.f32 %v2504, 0.01
        %v2583 = vmul.f32 %v2509, 0.01
        %v2584 = vmul.f32 %v2514, 0.01
        %v2585 = vmul.f32 %v2519, 0.01
        %v2586 = vmul.f32 %v2524, 0.01
        %v2587 = vmul.f32 %v2529, 0.01
        %v2588 = vmul.f32 %v2534, 0.01
        %v2589 = vmul.f32 %v2539, 0.01
        %v2590 = vmul.f32 %v2544, 0.01
        %v2591 = vmul.f32 %v2549, 0.01
        %v2592 = vmul.f32 %v2554, 0.01
        %v2593 = vmul.f32 %v2559, 0.01
        %v2594 = vmul.f32 %v2564, 0.01
        %v2595 = vmul.f32 %v2569, 0.01
        %v2596 = vmul.f32 %v2574, 0.01
        %v2597 = vmul.f32 %v2579, 0.01
        %v2598 = vmax.f32 %v2504, %v2582
        %v2599 = vmax.f32 %v2509, %v2583
        %v2600 = vmax.f32 %v2514, %v2584
        %v2601 = vmax.f32 %v2519, %v2585
        %v2602 = vmax.f32 %v2524, %v2586
        %v2603 = vmax.f32 %v2529, %v2587
        %v2604 = vmax.f32 %v2534, %v2588
        %v2605 = vmax.f32 %v2539, %v2589
        %v2606 = vmax.f32 %v2544, %v2590
        %v2607 = vmax.f32 %v2549, %v2591
        %v2608 = vmax.f32 %v2554, %v2592
        %v2609 = vmax.f32 %v2559, %v2593
        %v2610 = vmax.f32 %v2564, %v2594
        %v2611 = vmax.f32 %v2569, %v2595
        %v2612 = vmax.f32 %v2574, %v2596
        %v2613 = vmax.f32 %v2579, %v2597
        %v2614 = vadd.f32 %v2598, %v2599
        %v2615 = vadd.f32 %v2614, %v2600
        %v2616 = vadd.f32 %v2615, %v2601
        %v2617 = vadd.f32 %v2616, %v2602
        %v2618 = vadd.f32 %v2617, %v2603
        %v2619 = vadd.f32 %v2618, %v2604
        %v2620 = vadd.f32 %v2619, %v2605
        %v2621 = vadd.f32 %v2620, %v2606
        %v2622 = vadd.f32 %v2621, %v2607
        %v2623 = vadd.f32 %v2622, %v2608
        %v2624 = vadd.f32 %v2623, %v2609
        %v2625 = vadd.f32 %v2624, %v2610
        %v2626 = vadd.f32 %v2625, %v2611
        %v2627 = vadd.f32 %v2626, %v2612
        %v2628 = vadd.f32 %v2627, %v2613
        %v2629 = vrot.slane %v2628, 4
        %v2630 = vadd.f32 %v2628, %v2629
        %v2631 = vrot.slane %v2630, 2
        %v2632 = vadd.f32 %v2630, %v2631
        %v2633 = vrot.slane %v2632, 1
        %v2634 = vadd.f32 %v2632, %v2633
        %v2635 = vadd.f32 %v2296, %v2634
        %s2636 = scalar_lea.vmem [#allocation2], 48
        %v2637 = vld [vmem:[%s2636] sm:$0xff]
        %v2639 = vcombine.high %v2637, %v2637
        %v2641 = vunpack.c.l.s4 1966171168
        %v2642 = vunpack.c.0.s8 %v2641
        %v2643 = vlaneseq
        %v2644 = vshrl.u32 %v2643, 7
        %v2645 = vsub.s32 %v2642, %v2644
        %v2646 = vrot.slane %v2637, %v2645
        %v2648 = vunpack.c.l.s4 1966171168
        %v2649 = vunpack.c.0.s8 %v2648
        %v2650 = vlaneseq
        %v2651 = vshrl.u32 %v2650, 7
        %v2652 = vsub.s32 %v2649, %v2651
        %v2653 = vrot.slane %v2639, %v2652
        %v2654 = vcombine.high %v2646, %v2646
        %v2655 = vcombine.high %v2653, %v2653
        %v2657 = vunpack.c.l.s4 1966171168
        %v2658 = vunpack.c.0.s8 %v2657
        %v2659 = vlaneseq
        %v2660 = vshrl.u32 %v2659, 7
        %v2661 = vsub.s32 %v2658, %v2660
        %v2662 = vrot.slane %v2646, %v2661
        %v2664 = vunpack.c.l.s4 1966171168
        %v2665 = vunpack.c.0.s8 %v2664
        %v2666 = vlaneseq
        %v2667 = vshrl.u32 %v2666, 7
        %v2668 = vsub.s32 %v2665, %v2667
        %v2669 = vrot.slane %v2653, %v2668
        %v2671 = vunpack.c.l.s4 1966171168
        %v2672 = vunpack.c.0.s8 %v2671
        %v2673 = vlaneseq
        %v2674 = vshrl.u32 %v2673, 7
        %v2675 = vsub.s32 %v2672, %v2674
        %v2676 = vrot.slane %v2654, %v2675
        %v2678 = vunpack.c.l.s4 1966171168
        %v2679 = vunpack.c.0.s8 %v2678
        %v2680 = vlaneseq
        %v2681 = vshrl.u32 %v2680, 7
        %v2682 = vsub.s32 %v2679, %v2681
        %v2683 = vrot.slane %v2655, %v2682
        %v2684 = vcombine.high %v2662, %v2662
        %v2685 = vcombine.high %v2669, %v2669
        %v2686 = vcombine.high %v2676, %v2676
        %v2687 = vcombine.high %v2683, %v2683
        %v2688 = vlaneseq
        %v2689 = vshrl.u32 %v2688, 7
        %v2690 = vsub.s32 0, %v2689
        %v2691 = vrot.slane %v2662, %v2690
        %v2692 = vlaneseq
        %v2693 = vshrl.u32 %v2692, 7
        %v2694 = vsub.s32 0, %v2693
        %v2695 = vrot.slane %v2676, %v2694
        %v2696 = vlaneseq
        %v2697 = vshrl.u32 %v2696, 7
        %v2698 = vsub.s32 0, %v2697
        %v2699 = vrot.slane %v2684, %v2698
        %v2700 = vlaneseq
        %v2701 = vshrl.u32 %v2700, 7
        %v2702 = vsub.s32 0, %v2701
        %v2703 = vrot.slane %v2686, %v2702
        %v2704 = vlaneseq
        %v2705 = vshrl.u32 %v2704, 7
        %v2706 = vsub.s32 0, %v2705
        %v2707 = vrot.slane %v2669, %v2706
        %v2708 = vlaneseq
        %v2709 = vshrl.u32 %v2708, 7
        %v2710 = vsub.s32 0, %v2709
        %v2711 = vrot.slane %v2683, %v2710
        %v2712 = vlaneseq
        %v2713 = vshrl.u32 %v2712, 7
        %v2714 = vsub.s32 0, %v2713
        %v2715 = vrot.slane %v2685, %v2714
        %v2716 = vlaneseq
        %v2717 = vshrl.u32 %v2716, 7
        %v2718 = vsub.s32 0, %v2717
        %v2719 = vrot.slane %v2687, %v2718
        %v2728 = vadd.f32 %v485, %v2691
        %v2729 = vadd.f32 %v486, %v2691
        %v2730 = vadd.f32 %v485, %v2695
        %v2731 = vadd.f32 %v486, %v2695
        %v2732 = vadd.f32 %v485, %v2699
        %v2733 = vadd.f32 %v486, %v2699
        %v2734 = vadd.f32 %v485, %v2703
        %v2735 = vadd.f32 %v486, %v2703
        %v2736 = vadd.f32 %v485, %v2707
        %v2737 = vadd.f32 %v486, %v2707
        %v2738 = vadd.f32 %v485, %v2711
        %v2739 = vadd.f32 %v486, %v2711
        %v2740 = vadd.f32 %v485, %v2715
        %v2741 = vadd.f32 %v486, %v2715
        %v2742 = vadd.f32 %v485, %v2719
        %v2743 = vadd.f32 %v486, %v2719
        %v2744 = vmul.f32 %v2728, 0.01
        %v2745 = vmul.f32 %v2729, 0.01
        %v2746 = vmul.f32 %v2730, 0.01
        %v2747 = vmul.f32 %v2731, 0.01
        %v2748 = vmul.f32 %v2732, 0.01
        %v2749 = vmul.f32 %v2733, 0.01
        %v2750 = vmul.f32 %v2734, 0.01
        %v2751 = vmul.f32 %v2735, 0.01
        %v2752 = vmul.f32 %v2736, 0.01
        %v2753 = vmul.f32 %v2737, 0.01
        %v2754 = vmul.f32 %v2738, 0.01
        %v2755 = vmul.f32 %v2739, 0.01
        %v2756 = vmul.f32 %v2740, 0.01
        %v2757 = vmul.f32 %v2741, 0.01
        %v2758 = vmul.f32 %v2742, 0.01
        %v2759 = vmul.f32 %v2743, 0.01
        %v2760 = vmax.f32 %v2728, %v2744
        %v2761 = vmax.f32 %v2729, %v2745
        %v2762 = vmax.f32 %v2730, %v2746
        %v2763 = vmax.f32 %v2731, %v2747
        %v2764 = vmax.f32 %v2732, %v2748
        %v2765 = vmax.f32 %v2733, %v2749
        %v2766 = vmax.f32 %v2734, %v2750
        %v2767 = vmax.f32 %v2735, %v2751
        %v2768 = vmax.f32 %v2736, %v2752
        %v2769 = vmax.f32 %v2737, %v2753
        %v2770 = vmax.f32 %v2738, %v2754
        %v2771 = vmax.f32 %v2739, %v2755
        %v2772 = vmax.f32 %v2740, %v2756
        %v2773 = vmax.f32 %v2741, %v2757
        %v2774 = vmax.f32 %v2742, %v2758
        %v2775 = vmax.f32 %v2743, %v2759
        %2776 = vmatprep.subr.mxu0 0.0
        %2777 = vmatpush1.msra.mxu0 %v236
        %2778 = vmatprep.subr.mxu0 0.0
        %2779 = vmatpush1.msra.mxu0 %v235
        %2780 = vmatprep.subr.mxu0 0.0
        %2781 = vmatpush1.msra.mxu0 %v234
        %2782 = vmatprep.subr.mxu0 0.0
        %2783 = vmatpush1.msra.mxu0 %v233
        %2784 = vmatprep.subr.mxu0 0.0
        %2785 = vmatpush1.msra.mxu0 %v232
        %2786 = vmatprep.subr.mxu0 0.0
        %2787 = vmatpush1.msra.mxu0 %v231
        %2788 = vmatprep.subr.mxu0 0.0
        %2789 = vmatpush1.msra.mxu0 %v230
        %2790 = vmatprep.subr.mxu0 0.0
        %2791 = vmatpush1.msra.mxu0 %v229
        %2792 = vmatprep.subr.mxu0 0.0
        %2793 = vmatpush1.msra.mxu0 %v228
        %2794 = vmatprep.subr.mxu0 0.0
        %2795 = vmatpush1.msra.mxu0 %v227
        %2796 = vmatprep.subr.mxu0 0.0
        %2797 = vmatpush1.msra.mxu0 %v226
        %2798 = vmatprep.subr.mxu0 0.0
        %2799 = vmatpush1.msra.mxu0 %v225
        %2800 = vmatprep.subr.mxu0 0.0
        %2801 = vmatpush1.msra.mxu0 %v224
        %2802 = vmatprep.subr.mxu0 0.0
        %2803 = vmatpush1.msra.mxu0 %v223
        %2804 = vmatprep.subr.mxu0 0.0
        %2805 = vmatpush1.msra.mxu0 %v222
        %2806 = vmatprep.subr.mxu0 0.0
        %2807 = vmatpush1.msra.mxu0 %v221
        %2808 = vmatprep.subr.mxu0 0.0
        %2809 = vmatpush2.msra.mxu0 0.0
        %2810 = vmatprep.subr.mxu0 0.0
        %2811 = vmatpush2.msra.mxu0 0.0
        %2812 = vmatprep.subr.mxu0 0.0
        %2813 = vmatpush2.msra.mxu0 0.0
        %2814 = vmatprep.subr.mxu0 0.0
        %2815 = vmatpush2.msra.mxu0 0.0
        %2816 = vmatprep.subr.mxu0 0.0
        %2817 = vmatpush2.msra.mxu0 0.0
        %2818 = vmatprep.subr.mxu0 0.0
        %2819 = vmatpush2.msra.mxu0 0.0
        %2820 = vmatprep.subr.mxu0 0.0
        %2821 = vmatpush2.msra.mxu0 0.0
        %2822 = vmatprep.subr.mxu0 0.0
        %2823 = vmatpush2.msra.mxu0 0.0
        %2824 = vmatprep.subr.mxu0 0.0
        %2825 = vmatpush2.msra.mxu0 0.0
        %2826 = vmatprep.subr.mxu0 0.0
        %2827 = vmatpush2.msra.mxu0 0.0
        %2828 = vmatprep.subr.mxu0 0.0
        %2829 = vmatpush2.msra.mxu0 0.0
        %2830 = vmatprep.subr.mxu0 0.0
        %2831 = vmatpush2.msra.mxu0 0.0
        %2832 = vmatprep.subr.mxu0 0.0
        %2833 = vmatpush2.msra.mxu0 0.0
        %2834 = vmatprep.subr.mxu0 0.0
        %2835 = vmatpush2.msra.mxu0 0.0
        %2836 = vmatprep.subr.mxu0 0.0
        %2837 = vmatpush2.msra.mxu0 0.0
        %2838 = vmatprep.subr.mxu0 0.0
        %2839 = vmatpush2.msra.mxu0 0.0
        %2840 = vmatprep.mubr.f32.mxu0 0.0
        %2841 = vmatmul.mubr.f32.gmra.mxu0 %v2760
        %v2842 = vpop.f32.mrf.mxu0
        %v2843 = vadd.f32 %v741, %v2842
        %v2844 = vpop.f32.mrf.mxu0
        %2845 = vmatprep.mubr.f32.mxu0 0.0
        %2846 = vmatmul.mubr.f32.gmra.mxu0 %v2761
        %v2847 = vpop.f32.mrf.mxu0
        %v2848 = vadd.f32 %v741, %v2847
        %v2849 = vpop.f32.mrf.mxu0
        %2850 = vmatprep.mubr.f32.mxu0 0.0
        %2851 = vmatmul.mubr.f32.gmra.mxu0 %v2762
        %v2852 = vpop.f32.mrf.mxu0
        %v2853 = vadd.f32 %v741, %v2852
        %v2854 = vpop.f32.mrf.mxu0
        %2855 = vmatprep.mubr.f32.mxu0 0.0
        %2856 = vmatmul.mubr.f32.gmra.mxu0 %v2763
        %v2857 = vpop.f32.mrf.mxu0
        %v2858 = vadd.f32 %v741, %v2857
        %v2859 = vpop.f32.mrf.mxu0
        %2860 = vmatprep.mubr.f32.mxu0 0.0
        %2861 = vmatmul.mubr.f32.gmra.mxu0 %v2764
        %v2862 = vpop.f32.mrf.mxu0
        %v2863 = vadd.f32 %v741, %v2862
        %v2864 = vpop.f32.mrf.mxu0
        %2865 = vmatprep.mubr.f32.mxu0 0.0
        %2866 = vmatmul.mubr.f32.gmra.mxu0 %v2765
        %v2867 = vpop.f32.mrf.mxu0
        %v2868 = vadd.f32 %v741, %v2867
        %v2869 = vpop.f32.mrf.mxu0
        %2870 = vmatprep.mubr.f32.mxu0 0.0
        %2871 = vmatmul.mubr.f32.gmra.mxu0 %v2766
        %v2872 = vpop.f32.mrf.mxu0
        %v2873 = vadd.f32 %v741, %v2872
        %v2874 = vpop.f32.mrf.mxu0
        %2875 = vmatprep.mubr.f32.mxu0 0.0
        %2876 = vmatmul.mubr.f32.gmra.mxu0 %v2767
        %v2877 = vpop.f32.mrf.mxu0
        %v2878 = vadd.f32 %v741, %v2877
        %v2879 = vpop.f32.mrf.mxu0
        %2880 = vmatprep.mubr.f32.mxu0 0.0
        %2881 = vmatmul.mubr.f32.gmra.mxu0 %v2768
        %v2882 = vpop.f32.mrf.mxu0
        %v2883 = vadd.f32 %v741, %v2882
        %v2884 = vpop.f32.mrf.mxu0
        %2885 = vmatprep.mubr.f32.mxu0 0.0
        %2886 = vmatmul.mubr.f32.gmra.mxu0 %v2769
        %v2887 = vpop.f32.mrf.mxu0
        %v2888 = vadd.f32 %v741, %v2887
        %v2889 = vpop.f32.mrf.mxu0
        %2890 = vmatprep.mubr.f32.mxu0 0.0
        %2891 = vmatmul.mubr.f32.gmra.mxu0 %v2770
        %v2892 = vpop.f32.mrf.mxu0
        %v2893 = vadd.f32 %v741, %v2892
        %v2894 = vpop.f32.mrf.mxu0
        %2895 = vmatprep.mubr.f32.mxu0 0.0
        %2896 = vmatmul.mubr.f32.gmra.mxu0 %v2771
        %v2897 = vpop.f32.mrf.mxu0
        %v2898 = vadd.f32 %v741, %v2897
        %v2899 = vpop.f32.mrf.mxu0
        %2900 = vmatprep.mubr.f32.mxu0 0.0
        %2901 = vmatmul.mubr.f32.gmra.mxu0 %v2772
        %v2902 = vpop.f32.mrf.mxu0
        %v2903 = vadd.f32 %v741, %v2902
        %v2904 = vpop.f32.mrf.mxu0
        %2905 = vmatprep.mubr.f32.mxu0 0.0
        %2906 = vmatmul.mubr.f32.gmra.mxu0 %v2773
        %v2907 = vpop.f32.mrf.mxu0
        %v2908 = vadd.f32 %v741, %v2907
        %v2909 = vpop.f32.mrf.mxu0
        %2910 = vmatprep.mubr.f32.mxu0 0.0
        %2911 = vmatmul.mubr.f32.gmra.mxu0 %v2774
        %v2912 = vpop.f32.mrf.mxu0
        %v2913 = vadd.f32 %v741, %v2912
        %v2914 = vpop.f32.mrf.mxu0
        %2915 = vmatprep.mubr.f32.mxu0 0.0
        %2916 = vmatmul.mubr.f32.gmra.mxu0 %v2775
        %v2917 = vpop.f32.mrf.mxu0
        %v2918 = vadd.f32 %v741, %v2917
        %v2919 = vpop.f32.mrf.mxu0
        %2920 = vdwg.mxu0
        %v2921 = vmul.f32 %v2843, 0.01
        %v2922 = vmul.f32 %v2848, 0.01
        %v2923 = vmul.f32 %v2853, 0.01
        %v2924 = vmul.f32 %v2858, 0.01
        %v2925 = vmul.f32 %v2863, 0.01
        %v2926 = vmul.f32 %v2868, 0.01
        %v2927 = vmul.f32 %v2873, 0.01
        %v2928 = vmul.f32 %v2878, 0.01
        %v2929 = vmul.f32 %v2883, 0.01
        %v2930 = vmul.f32 %v2888, 0.01
        %v2931 = vmul.f32 %v2893, 0.01
        %v2932 = vmul.f32 %v2898, 0.01
        %v2933 = vmul.f32 %v2903, 0.01
        %v2934 = vmul.f32 %v2908, 0.01
        %v2935 = vmul.f32 %v2913, 0.01
        %v2936 = vmul.f32 %v2918, 0.01
        %v2937 = vmax.f32 %v2843, %v2921
        %v2938 = vmax.f32 %v2848, %v2922
        %v2939 = vmax.f32 %v2853, %v2923
        %v2940 = vmax.f32 %v2858, %v2924
        %v2941 = vmax.f32 %v2863, %v2925
        %v2942 = vmax.f32 %v2868, %v2926
        %v2943 = vmax.f32 %v2873, %v2927
        %v2944 = vmax.f32 %v2878, %v2928
        %v2945 = vmax.f32 %v2883, %v2929
        %v2946 = vmax.f32 %v2888, %v2930
        %v2947 = vmax.f32 %v2893, %v2931
        %v2948 = vmax.f32 %v2898, %v2932
        %v2949 = vmax.f32 %v2903, %v2933
        %v2950 = vmax.f32 %v2908, %v2934
        %v2951 = vmax.f32 %v2913, %v2935
        %v2952 = vmax.f32 %v2918, %v2936
        %v2953 = vadd.f32 %v2937, %v2938
        %v2954 = vadd.f32 %v2953, %v2939
        %v2955 = vadd.f32 %v2954, %v2940
        %v2956 = vadd.f32 %v2955, %v2941
        %v2957 = vadd.f32 %v2956, %v2942
        %v2958 = vadd.f32 %v2957, %v2943
        %v2959 = vadd.f32 %v2958, %v2944
        %v2960 = vadd.f32 %v2959, %v2945
        %v2961 = vadd.f32 %v2960, %v2946
        %v2962 = vadd.f32 %v2961, %v2947
        %v2963 = vadd.f32 %v2962, %v2948
        %v2964 = vadd.f32 %v2963, %v2949
        %v2965 = vadd.f32 %v2964, %v2950
        %v2966 = vadd.f32 %v2965, %v2951
        %v2967 = vadd.f32 %v2966, %v2952
        %v2968 = vrot.slane %v2967, 4
        %v2969 = vadd.f32 %v2967, %v2968
        %v2970 = vrot.slane %v2969, 2
        %v2971 = vadd.f32 %v2969, %v2970
        %v2972 = vrot.slane %v2971, 1
        %v2973 = vadd.f32 %v2971, %v2972
        %v2974 = vadd.f32 %v2635, %v2973
        %s2975 = scalar_lea.vmem [#allocation2], 56
        %v2976 = vld [vmem:[%s2975] sm:$0xff]
        %v2978 = vcombine.high %v2976, %v2976
        %v2980 = vunpack.c.l.s4 1966171168
        %v2981 = vunpack.c.0.s8 %v2980
        %v2982 = vlaneseq
        %v2983 = vshrl.u32 %v2982, 7
        %v2984 = vsub.s32 %v2981, %v2983
        %v2985 = vrot.slane %v2976, %v2984
        %v2987 = vunpack.c.l.s4 1966171168
        %v2988 = vunpack.c.0.s8 %v2987
        %v2989 = vlaneseq
        %v2990 = vshrl.u32 %v2989, 7
        %v2991 = vsub.s32 %v2988, %v2990
        %v2992 = vrot.slane %v2978, %v2991
        %v2993 = vcombine.high %v2985, %v2985
        %v2994 = vcombine.high %v2992, %v2992
        %v2996 = vunpack.c.l.s4 1966171168
        %v2997 = vunpack.c.0.s8 %v2996
        %v2998 = vlaneseq
        %v2999 = vshrl.u32 %v2998, 7
        %v3000 = vsub.s32 %v2997, %v2999
        %v3001 = vrot.slane %v2985, %v3000
        %v3003 = vunpack.c.l.s4 1966171168
        %v3004 = vunpack.c.0.s8 %v3003
        %v3005 = vlaneseq
        %v3006 = vshrl.u32 %v3005, 7
        %v3007 = vsub.s32 %v3004, %v3006
        %v3008 = vrot.slane %v2992, %v3007
        %v3010 = vunpack.c.l.s4 1966171168
        %v3011 = vunpack.c.0.s8 %v3010
        %v3012 = vlaneseq
        %v3013 = vshrl.u32 %v3012, 7
        %v3014 = vsub.s32 %v3011, %v3013
        %v3015 = vrot.slane %v2993, %v3014
        %v3017 = vunpack.c.l.s4 1966171168
        %v3018 = vunpack.c.0.s8 %v3017
        %v3019 = vlaneseq
        %v3020 = vshrl.u32 %v3019, 7
        %v3021 = vsub.s32 %v3018, %v3020
        %v3022 = vrot.slane %v2994, %v3021
        %v3023 = vcombine.high %v3001, %v3001
        %v3024 = vcombine.high %v3008, %v3008
        %v3025 = vcombine.high %v3015, %v3015
        %v3026 = vcombine.high %v3022, %v3022
        %v3027 = vlaneseq
        %v3028 = vshrl.u32 %v3027, 7
        %v3029 = vsub.s32 0, %v3028
        %v3030 = vrot.slane %v3001, %v3029
        %v3031 = vlaneseq
        %v3032 = vshrl.u32 %v3031, 7
        %v3033 = vsub.s32 0, %v3032
        %v3034 = vrot.slane %v3015, %v3033
        %v3035 = vlaneseq
        %v3036 = vshrl.u32 %v3035, 7
        %v3037 = vsub.s32 0, %v3036
        %v3038 = vrot.slane %v3023, %v3037
        %v3039 = vlaneseq
        %v3040 = vshrl.u32 %v3039, 7
        %v3041 = vsub.s32 0, %v3040
        %v3042 = vrot.slane %v3025, %v3041
        %v3043 = vlaneseq
        %v3044 = vshrl.u32 %v3043, 7
        %v3045 = vsub.s32 0, %v3044
        %v3046 = vrot.slane %v3008, %v3045
        %v3047 = vlaneseq
        %v3048 = vshrl.u32 %v3047, 7
        %v3049 = vsub.s32 0, %v3048
        %v3050 = vrot.slane %v3022, %v3049
        %v3051 = vlaneseq
        %v3052 = vshrl.u32 %v3051, 7
        %v3053 = vsub.s32 0, %v3052
        %v3054 = vrot.slane %v3024, %v3053
        %v3055 = vlaneseq
        %v3056 = vshrl.u32 %v3055, 7
        %v3057 = vsub.s32 0, %v3056
        %v3058 = vrot.slane %v3026, %v3057
        %v3067 = vadd.f32 %v485, %v3030
        %v3068 = vadd.f32 %v486, %v3030
        %v3069 = vadd.f32 %v485, %v3034
        %v3070 = vadd.f32 %v486, %v3034
        %v3071 = vadd.f32 %v485, %v3038
        %v3072 = vadd.f32 %v486, %v3038
        %v3073 = vadd.f32 %v485, %v3042
        %v3074 = vadd.f32 %v486, %v3042
        %v3075 = vadd.f32 %v485, %v3046
        %v3076 = vadd.f32 %v486, %v3046
        %v3077 = vadd.f32 %v485, %v3050
        %v3078 = vadd.f32 %v486, %v3050
        %v3079 = vadd.f32 %v485, %v3054
        %v3080 = vadd.f32 %v486, %v3054
        %v3081 = vadd.f32 %v485, %v3058
        %v3082 = vadd.f32 %v486, %v3058
        %v3083 = vmul.f32 %v3067, 0.01
        %v3084 = vmul.f32 %v3068, 0.01
        %v3085 = vmul.f32 %v3069, 0.01
        %v3086 = vmul.f32 %v3070, 0.01
        %v3087 = vmul.f32 %v3071, 0.01
        %v3088 = vmul.f32 %v3072, 0.01
        %v3089 = vmul.f32 %v3073, 0.01
        %v3090 = vmul.f32 %v3074, 0.01
        %v3091 = vmul.f32 %v3075, 0.01
        %v3092 = vmul.f32 %v3076, 0.01
        %v3093 = vmul.f32 %v3077, 0.01
        %v3094 = vmul.f32 %v3078, 0.01
        %v3095 = vmul.f32 %v3079, 0.01
        %v3096 = vmul.f32 %v3080, 0.01
        %v3097 = vmul.f32 %v3081, 0.01
        %v3098 = vmul.f32 %v3082, 0.01
        %v3099 = vmax.f32 %v3067, %v3083
        %v3100 = vmax.f32 %v3068, %v3084
        %v3101 = vmax.f32 %v3069, %v3085
        %v3102 = vmax.f32 %v3070, %v3086
        %v3103 = vmax.f32 %v3071, %v3087
        %v3104 = vmax.f32 %v3072, %v3088
        %v3105 = vmax.f32 %v3073, %v3089
        %v3106 = vmax.f32 %v3074, %v3090
        %v3107 = vmax.f32 %v3075, %v3091
        %v3108 = vmax.f32 %v3076, %v3092
        %v3109 = vmax.f32 %v3077, %v3093
        %v3110 = vmax.f32 %v3078, %v3094
        %v3111 = vmax.f32 %v3079, %v3095
        %v3112 = vmax.f32 %v3080, %v3096
        %v3113 = vmax.f32 %v3081, %v3097
        %v3114 = vmax.f32 %v3082, %v3098
        %3115 = vmatprep.subr.mxu0 0.0
        %3116 = vmatpush1.msra.mxu0 %v236
        %3117 = vmatprep.subr.mxu0 0.0
        %3118 = vmatpush1.msra.mxu0 %v235
        %3119 = vmatprep.subr.mxu0 0.0
        %3120 = vmatpush1.msra.mxu0 %v234
        %3121 = vmatprep.subr.mxu0 0.0
        %3122 = vmatpush1.msra.mxu0 %v233
        %3123 = vmatprep.subr.mxu0 0.0
        %3124 = vmatpush1.msra.mxu0 %v232
        %3125 = vmatprep.subr.mxu0 0.0
        %3126 = vmatpush1.msra.mxu0 %v231
        %3127 = vmatprep.subr.mxu0 0.0
        %3128 = vmatpush1.msra.mxu0 %v230
        %3129 = vmatprep.subr.mxu0 0.0
        %3130 = vmatpush1.msra.mxu0 %v229
        %3131 = vmatprep.subr.mxu0 0.0
        %3132 = vmatpush1.msra.mxu0 %v228
        %3133 = vmatprep.subr.mxu0 0.0
        %3134 = vmatpush1.msra.mxu0 %v227
        %3135 = vmatprep.subr.mxu0 0.0
        %3136 = vmatpush1.msra.mxu0 %v226
        %3137 = vmatprep.subr.mxu0 0.0
        %3138 = vmatpush1.msra.mxu0 %v225
        %3139 = vmatprep.subr.mxu0 0.0
        %3140 = vmatpush1.msra.mxu0 %v224
        %3141 = vmatprep.subr.mxu0 0.0
        %3142 = vmatpush1.msra.mxu0 %v223
        %3143 = vmatprep.subr.mxu0 0.0
        %3144 = vmatpush1.msra.mxu0 %v222
        %3145 = vmatprep.subr.mxu0 0.0
        %3146 = vmatpush1.msra.mxu0 %v221
        %3147 = vmatprep.subr.mxu0 0.0
        %3148 = vmatpush2.msra.mxu0 0.0
        %3149 = vmatprep.subr.mxu0 0.0
        %3150 = vmatpush2.msra.mxu0 0.0
        %3151 = vmatprep.subr.mxu0 0.0
        %3152 = vmatpush2.msra.mxu0 0.0
        %3153 = vmatprep.subr.mxu0 0.0
        %3154 = vmatpush2.msra.mxu0 0.0
        %3155 = vmatprep.subr.mxu0 0.0
        %3156 = vmatpush2.msra.mxu0 0.0
        %3157 = vmatprep.subr.mxu0 0.0
        %3158 = vmatpush2.msra.mxu0 0.0
        %3159 = vmatprep.subr.mxu0 0.0
        %3160 = vmatpush2.msra.mxu0 0.0
        %3161 = vmatprep.subr.mxu0 0.0
        %3162 = vmatpush2.msra.mxu0 0.0
        %3163 = vmatprep.subr.mxu0 0.0
        %3164 = vmatpush2.msra.mxu0 0.0
        %3165 = vmatprep.subr.mxu0 0.0
        %3166 = vmatpush2.msra.mxu0 0.0
        %3167 = vmatprep.subr.mxu0 0.0
        %3168 = vmatpush2.msra.mxu0 0.0
        %3169 = vmatprep.subr.mxu0 0.0
        %3170 = vmatpush2.msra.mxu0 0.0
        %3171 = vmatprep.subr.mxu0 0.0
        %3172 = vmatpush2.msra.mxu0 0.0
        %3173 = vmatprep.subr.mxu0 0.0
        %3174 = vmatpush2.msra.mxu0 0.0
        %3175 = vmatprep.subr.mxu0 0.0
        %3176 = vmatpush2.msra.mxu0 0.0
        %3177 = vmatprep.subr.mxu0 0.0
        %3178 = vmatpush2.msra.mxu0 0.0
        %3179 = vmatprep.mubr.f32.mxu0 0.0
        %3180 = vmatmul.mubr.f32.gmra.mxu0 %v3099
        %v3181 = vpop.f32.mrf.mxu0
        %v3182 = vadd.f32 %v741, %v3181
        %v3183 = vpop.f32.mrf.mxu0
        %3184 = vmatprep.mubr.f32.mxu0 0.0
        %3185 = vmatmul.mubr.f32.gmra.mxu0 %v3100
        %v3186 = vpop.f32.mrf.mxu0
        %v3187 = vadd.f32 %v741, %v3186
        %v3188 = vpop.f32.mrf.mxu0
        %3189 = vmatprep.mubr.f32.mxu0 0.0
        %3190 = vmatmul.mubr.f32.gmra.mxu0 %v3101
        %v3191 = vpop.f32.mrf.mxu0
        %v3192 = vadd.f32 %v741, %v3191
        %v3193 = vpop.f32.mrf.mxu0
        %3194 = vmatprep.mubr.f32.mxu0 0.0
        %3195 = vmatmul.mubr.f32.gmra.mxu0 %v3102
        %v3196 = vpop.f32.mrf.mxu0
        %v3197 = vadd.f32 %v741, %v3196
        %v3198 = vpop.f32.mrf.mxu0
        %3199 = vmatprep.mubr.f32.mxu0 0.0
        %3200 = vmatmul.mubr.f32.gmra.mxu0 %v3103
        %v3201 = vpop.f32.mrf.mxu0
        %v3202 = vadd.f32 %v741, %v3201
        %v3203 = vpop.f32.mrf.mxu0
        %3204 = vmatprep.mubr.f32.mxu0 0.0
        %3205 = vmatmul.mubr.f32.gmra.mxu0 %v3104
        %v3206 = vpop.f32.mrf.mxu0
        %v3207 = vadd.f32 %v741, %v3206
        %v3208 = vpop.f32.mrf.mxu0
        %3209 = vmatprep.mubr.f32.mxu0 0.0
        %3210 = vmatmul.mubr.f32.gmra.mxu0 %v3105
        %v3211 = vpop.f32.mrf.mxu0
        %v3212 = vadd.f32 %v741, %v3211
        %v3213 = vpop.f32.mrf.mxu0
        %3214 = vmatprep.mubr.f32.mxu0 0.0
        %3215 = vmatmul.mubr.f32.gmra.mxu0 %v3106
        %v3216 = vpop.f32.mrf.mxu0
        %v3217 = vadd.f32 %v741, %v3216
        %v3218 = vpop.f32.mrf.mxu0
        %3219 = vmatprep.mubr.f32.mxu0 0.0
        %3220 = vmatmul.mubr.f32.gmra.mxu0 %v3107
        %v3221 = vpop.f32.mrf.mxu0
        %v3222 = vadd.f32 %v741, %v3221
        %v3223 = vpop.f32.mrf.mxu0
        %3224 = vmatprep.mubr.f32.mxu0 0.0
        %3225 = vmatmul.mubr.f32.gmra.mxu0 %v3108
        %v3226 = vpop.f32.mrf.mxu0
        %v3227 = vadd.f32 %v741, %v3226
        %v3228 = vpop.f32.mrf.mxu0
        %3229 = vmatprep.mubr.f32.mxu0 0.0
        %3230 = vmatmul.mubr.f32.gmra.mxu0 %v3109
        %v3231 = vpop.f32.mrf.mxu0
        %v3232 = vadd.f32 %v741, %v3231
        %v3233 = vpop.f32.mrf.mxu0
        %3234 = vmatprep.mubr.f32.mxu0 0.0
        %3235 = vmatmul.mubr.f32.gmra.mxu0 %v3110
        %v3236 = vpop.f32.mrf.mxu0
        %v3237 = vadd.f32 %v741, %v3236
        %v3238 = vpop.f32.mrf.mxu0
        %3239 = vmatprep.mubr.f32.mxu0 0.0
        %3240 = vmatmul.mubr.f32.gmra.mxu0 %v3111
        %v3241 = vpop.f32.mrf.mxu0
        %v3242 = vadd.f32 %v741, %v3241
        %v3243 = vpop.f32.mrf.mxu0
        %3244 = vmatprep.mubr.f32.mxu0 0.0
        %3245 = vmatmul.mubr.f32.gmra.mxu0 %v3112
        %v3246 = vpop.f32.mrf.mxu0
        %v3247 = vadd.f32 %v741, %v3246
        %v3248 = vpop.f32.mrf.mxu0
        %3249 = vmatprep.mubr.f32.mxu0 0.0
        %3250 = vmatmul.mubr.f32.gmra.mxu0 %v3113
        %v3251 = vpop.f32.mrf.mxu0
        %v3252 = vadd.f32 %v741, %v3251
        %v3253 = vpop.f32.mrf.mxu0
        %3254 = vmatprep.mubr.f32.mxu0 0.0
        %3255 = vmatmul.mubr.f32.gmra.mxu0 %v3114
        %v3256 = vpop.f32.mrf.mxu0
        %v3257 = vadd.f32 %v741, %v3256
        %v3258 = vpop.f32.mrf.mxu0
        %3259 = vdwg.mxu0
        %v3260 = vmul.f32 %v3182, 0.01
        %v3261 = vmul.f32 %v3187, 0.01
        %v3262 = vmul.f32 %v3192, 0.01
        %v3263 = vmul.f32 %v3197, 0.01
        %v3264 = vmul.f32 %v3202, 0.01
        %v3265 = vmul.f32 %v3207, 0.01
        %v3266 = vmul.f32 %v3212, 0.01
        %v3267 = vmul.f32 %v3217, 0.01
        %v3268 = vmul.f32 %v3222, 0.01
        %v3269 = vmul.f32 %v3227, 0.01
        %v3270 = vmul.f32 %v3232, 0.01
        %v3271 = vmul.f32 %v3237, 0.01
        %v3272 = vmul.f32 %v3242, 0.01
        %v3273 = vmul.f32 %v3247, 0.01
        %v3274 = vmul.f32 %v3252, 0.01
        %v3275 = vmul.f32 %v3257, 0.01
        %v3276 = vmax.f32 %v3182, %v3260
        %v3277 = vmax.f32 %v3187, %v3261
        %v3278 = vmax.f32 %v3192, %v3262
        %v3279 = vmax.f32 %v3197, %v3263
        %v3280 = vmax.f32 %v3202, %v3264
        %v3281 = vmax.f32 %v3207, %v3265
        %v3282 = vmax.f32 %v3212, %v3266
        %v3283 = vmax.f32 %v3217, %v3267
        %v3284 = vmax.f32 %v3222, %v3268
        %v3285 = vmax.f32 %v3227, %v3269
        %v3286 = vmax.f32 %v3232, %v3270
        %v3287 = vmax.f32 %v3237, %v3271
        %v3288 = vmax.f32 %v3242, %v3272
        %v3289 = vmax.f32 %v3247, %v3273
        %v3290 = vmax.f32 %v3252, %v3274
        %v3291 = vmax.f32 %v3257, %v3275
        %v3292 = vadd.f32 %v3276, %v3277
        %v3293 = vadd.f32 %v3292, %v3278
        %v3294 = vadd.f32 %v3293, %v3279
        %v3295 = vadd.f32 %v3294, %v3280
        %v3296 = vadd.f32 %v3295, %v3281
        %v3297 = vadd.f32 %v3296, %v3282
        %v3298 = vadd.f32 %v3297, %v3283
        %v3299 = vadd.f32 %v3298, %v3284
        %v3300 = vadd.f32 %v3299, %v3285
        %v3301 = vadd.f32 %v3300, %v3286
        %v3302 = vadd.f32 %v3301, %v3287
        %v3303 = vadd.f32 %v3302, %v3288
        %v3304 = vadd.f32 %v3303, %v3289
        %v3305 = vadd.f32 %v3304, %v3290
        %v3306 = vadd.f32 %v3305, %v3291
        %v3307 = vrot.slane %v3306, 4
        %v3308 = vadd.f32 %v3306, %v3307
        %v3309 = vrot.slane %v3308, 2
        %v3310 = vadd.f32 %v3308, %v3309
        %v3311 = vrot.slane %v3310, 1
        %v3312 = vadd.f32 %v3310, %v3311
        %v3313 = vadd.f32 %v2974, %v3312
        %3315 = vrot.lane.b32.xlu0 %v3313, 96
        %v3316 = vpop.permute.xlu0 %3315
        %v3318 = vadd.f32 %v3313, %v3316
        %3319 = vrot.lane.b32.xlu0 %v3313, 64
        %v3320 = vpop.permute.xlu0 %3319
        %v3322 = vadd.f32 %v3318, %v3320
        %3323 = vrot.lane.b32.xlu0 %v3313, 32
        %v3324 = vpop.permute.xlu0 %3323
        %v3326 = vadd.f32 %v3322, %v3324
        %v3328 = vrot.slane %v220, 2
        %v3331 = vsel %vm478, %v3326, 0
        %3333 = vmatprep.subr.mxu0 0.0
        %3334 = vmatpush1.msra.mxu0 0.0
        %3335 = vmatprep.subr.mxu0 0.0
        %3336 = vmatpush1.msra.mxu0 0.0
        %3337 = vmatprep.subr.mxu0 0.0
        %3338 = vmatpush1.msra.mxu0 0.0
        %3339 = vmatprep.subr.mxu0 0.0
        %3340 = vmatpush1.msra.mxu0 0.0
        %3341 = vmatprep.subr.mxu0 0.0
        %3342 = vmatpush1.msra.mxu0 0.0
        %3343 = vmatprep.subr.mxu0 0.0
        %3344 = vmatpush1.msra.mxu0 0.0
        %3345 = vmatprep.subr.mxu0 0.0
        %3346 = vmatpush1.msra.mxu0 0.0
        %3347 = vmatprep.subr.mxu0 0.0
        %3348 = vmatpush1.msra.mxu0 0.0
        %3349 = vmatprep.subr.mxu0 0.0
        %3350 = vmatpush1.msra.mxu0 0.0
        %3351 = vmatprep.subr.mxu0 0.0
        %3352 = vmatpush1.msra.mxu0 0.0
        %3353 = vmatprep.subr.mxu0 0.0
        %3354 = vmatpush1.msra.mxu0 0.0
        %3355 = vmatprep.subr.mxu0 0.0
        %3356 = vmatpush1.msra.mxu0 0.0
        %3357 = vmatprep.subr.mxu0 0.0
        %3358 = vmatpush1.msra.mxu0 %v240
        %3359 = vmatprep.subr.mxu0 0.0
        %3360 = vmatpush1.msra.mxu0 %v239
        %3361 = vmatprep.subr.mxu0 0.0
        %3362 = vmatpush1.msra.mxu0 %v238
        %3363 = vmatprep.subr.mxu0 0.0
        %3364 = vmatpush1.msra.mxu0 %v237
        %3365 = vmatprep.subr.mxu0 0.0
        %3366 = vmatpush2.msra.mxu0 0.0
        %3367 = vmatprep.subr.mxu0 0.0
        %3368 = vmatpush2.msra.mxu0 0.0
        %3369 = vmatprep.subr.mxu0 0.0
        %3370 = vmatpush2.msra.mxu0 0.0
        %3371 = vmatprep.subr.mxu0 0.0
        %3372 = vmatpush2.msra.mxu0 0.0
        %3373 = vmatprep.subr.mxu0 0.0
        %3374 = vmatpush2.msra.mxu0 0.0
        %3375 = vmatprep.subr.mxu0 0.0
        %3376 = vmatpush2.msra.mxu0 0.0
        %3377 = vmatprep.subr.mxu0 0.0
        %3378 = vmatpush2.msra.mxu0 0.0
        %3379 = vmatprep.subr.mxu0 0.0
        %3380 = vmatpush2.msra.mxu0 0.0
        %3381 = vmatprep.subr.mxu0 0.0
        %3382 = vmatpush2.msra.mxu0 0.0
        %3383 = vmatprep.subr.mxu0 0.0
        %3384 = vmatpush2.msra.mxu0 0.0
        %3385 = vmatprep.subr.mxu0 0.0
        %3386 = vmatpush2.msra.mxu0 0.0
        %3387 = vmatprep.subr.mxu0 0.0
        %3388 = vmatpush2.msra.mxu0 0.0
        %3389 = vmatprep.subr.mxu0 0.0
        %3390 = vmatpush2.msra.mxu0 0.0
        %3391 = vmatprep.subr.mxu0 0.0
        %3392 = vmatpush2.msra.mxu0 0.0
        %3393 = vmatprep.subr.mxu0 0.0
        %3394 = vmatpush2.msra.mxu0 0.0
        %3395 = vmatprep.subr.mxu0 0.0
        %3396 = vmatpush2.msra.mxu0 0.0
        %3397 = vmatprep.mubr.f32.mxu0 0.0
        %3398 = vmatmul.mubr.f32.gmra.mxu0 %v3331
        %v3399 = vpop.f32.mrf.mxu0
        %v3400 = vadd.f32 %v3328, %v3399
        %v3401 = vpop.f32.mrf.mxu0
        %3402 = vdwg.mxu0
        %v3403 = vmax.f32 %v3400, 0.0
        %v3404 = vrot.slane %v220, 3
        %v3407 = vsel %vm478, %v3403, 0
        %3409 = vmatprep.subr.mxu0 0.0
        %3410 = vmatpush1.msra.mxu0 0.0
        %3411 = vmatprep.subr.mxu0 0.0
        %3412 = vmatpush1.msra.mxu0 0.0
        %3413 = vmatprep.subr.mxu0 0.0
        %3414 = vmatpush1.msra.mxu0 0.0
        %3415 = vmatprep.subr.mxu0 0.0
        %3416 = vmatpush1.msra.mxu0 0.0
        %3417 = vmatprep.subr.mxu0 0.0
        %3418 = vmatpush1.msra.mxu0 0.0
        %3419 = vmatprep.subr.mxu0 0.0
        %3420 = vmatpush1.msra.mxu0 0.0
        %3421 = vmatprep.subr.mxu0 0.0
        %3422 = vmatpush1.msra.mxu0 0.0
        %3423 = vmatprep.subr.mxu0 0.0
        %3424 = vmatpush1.msra.mxu0 0.0
        %3425 = vmatprep.subr.mxu0 0.0
        %3426 = vmatpush1.msra.mxu0 0.0
        %3427 = vmatprep.subr.mxu0 0.0
        %3428 = vmatpush1.msra.mxu0 0.0
        %3429 = vmatprep.subr.mxu0 0.0
        %3430 = vmatpush1.msra.mxu0 0.0
        %3431 = vmatprep.subr.mxu0 0.0
        %3432 = vmatpush1.msra.mxu0 0.0
        %3433 = vmatprep.subr.mxu0 0.0
        %3434 = vmatpush1.msra.mxu0 %v245
        %3435 = vmatprep.subr.mxu0 0.0
        %3436 = vmatpush1.msra.mxu0 %v244
        %3437 = vmatprep.subr.mxu0 0.0
        %3438 = vmatpush1.msra.mxu0 %v243
        %3439 = vmatprep.subr.mxu0 0.0
        %3440 = vmatpush1.msra.mxu0 %v242
        %3441 = vmatprep.subr.mxu0 0.0
        %3442 = vmatpush2.msra.mxu0 0.0
        %3443 = vmatprep.subr.mxu0 0.0
        %3444 = vmatpush2.msra.mxu0 0.0
        %3445 = vmatprep.subr.mxu0 0.0
        %3446 = vmatpush2.msra.mxu0 0.0
        %3447 = vmatprep.subr.mxu0 0.0
        %3448 = vmatpush2.msra.mxu0 0.0
        %3449 = vmatprep.subr.mxu0 0.0
        %3450 = vmatpush2.msra.mxu0 0.0
        %3451 = vmatprep.subr.mxu0 0.0
        %3452 = vmatpush2.msra.mxu0 0.0
        %3453 = vmatprep.subr.mxu0 0.0
        %3454 = vmatpush2.msra.mxu0 0.0
        %3455 = vmatprep.subr.mxu0 0.0
        %3456 = vmatpush2.msra.mxu0 0.0
        %3457 = vmatprep.subr.mxu0 0.0
        %3458 = vmatpush2.msra.mxu0 0.0
        %3459 = vmatprep.subr.mxu0 0.0
        %3460 = vmatpush2.msra.mxu0 0.0
        %3461 = vmatprep.subr.mxu0 0.0
        %3462 = vmatpush2.msra.mxu0 0.0
        %3463 = vmatprep.subr.mxu0 0.0
        %3464 = vmatpush2.msra.mxu0 0.0
        %3465 = vmatprep.subr.mxu0 0.0
        %3466 = vmatpush2.msra.mxu0 0.0
        %3467 = vmatprep.subr.mxu0 0.0
        %3468 = vmatpush2.msra.mxu0 0.0
        %3469 = vmatprep.subr.mxu0 0.0
        %3470 = vmatpush2.msra.mxu0 0.0
        %3471 = vmatprep.subr.mxu0 0.0
        %3472 = vmatpush2.msra.mxu0 0.0
        %3473 = vmatprep.mubr.f32.mxu0 0.0
        %3474 = vmatmul.mubr.f32.gmra.mxu0 %v3407
        %v3475 = vpop.f32.mrf.mxu0
        %v3476 = vadd.f32 %v3404, %v3475
        %v3477 = vpop.f32.mrf.mxu0
        %3478 = vdwg.mxu0
        %vm3479 = vcmask 253952
        %3480 = vst.msk [vmem:[%s214] sm:$0x1] %vm3479, %v3476
        %s3481 = sand.u32 %s137, 1
        %s3482 = scalar_lea.sflag [#allocation4], %s3481
        %s3483 = sand.u32 %s137, 1
        %s3484 = scalar_lea.vmem [#allocation3], %s3483
        // Predicated region
        $region41: #{relational_module_forward.1} parent=39 // pred_check
          %p3485 = pneg %p147
        $region42: #{relational_module_forward.1} parent=39 // pred_check_branch
          %3487 = sbr.rel (%p3485) target = $region44
        $region43: #{relational_module_forward.1} parent=39 // pred_region
          %s3489 = ssub.s32 16, 16
          %3490 = vsyncadd %s3482, %s3489
          %s3491 = smul.addr %s19, 16
          %s3492 = scalar_lea.hbm %s5, %s3491
          %s3494 = sshll.u32 %s3484, 4
          %s3495 = int_to_ptr.vmem [resolvable:$true] %s3494
          %3497 = dma.vmem_to_hbm [thread:$0]  %s3495, 16, %s3492, %s3482
        $region44: #{relational_module_forward.1} parent=39 // pred_fallthru
          _
      $region40: #{relational_module_forward.1} parent=5 // pred_fallthru
        _
      %p3498 = scmp.le.s32.totalorder 2, %s14
      // Predicated region
      $region45: #{relational_module_forward.1} parent=5 // pred_check
        %p3499 = pneg %p3498
      $region46: #{relational_module_forward.1} parent=5 // pred_check_branch
        %3501 = sbr.rel (%p3499) target = $region48
      $region47: #{relational_module_forward.1} parent=5 // pred_region
        %s3502 = ssub.s32 %s14, 2
        // Predicated region
        $region49: #{relational_module_forward.1} parent=47 // pred_check
          %p3503 = pneg %p153
        $region50: #{relational_module_forward.1} parent=47 // pred_check_branch
          %3505 = sbr.rel (%p3503) target = $region52
        $region51: #{relational_module_forward.1} parent=47 // pred_region
          %s3506 = sand.u32 %s138, 1
          %s3507 = scalar_lea.sflag [#allocation4], %s3506
          %s3508 = sand.u32 %s138, 1
          %s3509 = scalar_lea.vmem [#allocation3], %s3508
          %3510 = dma.done %s3507, 16
        $region52: #{relational_module_forward.1} parent=47 // pred_fallthru
          _
      $region48: #{relational_module_forward.1} parent=5 // pred_fallthru
        _
    $region6: #{relational_module_forward.1} parent=1 // loop_footer
      %s18 = sadd.s32 1, %s14
    $region7: #{relational_module_forward.1} parent=1 // loop_footer_branch
      %13 = sbr.rel target = $region3
    $region8: #{relational_module_forward.1} parent=1 // loop_exit
      _
    %3511 = vsyncpa [#allocation4], 1
    %s3512 = scalar_lea.sflag [#allocation4], 1
    %3513 = vsyncpa %s3512, 1

</llo_original>
